<compile_context>
chip_gen: v6e
topology: v6e:2x2x1
jax: 0.10.0
libtpu: 0.0.40
codegen_flags: <defaults>
</compile_context>

<pallas_src>
import functools

import jax
import jax.numpy as jnp
import numpy as np
from jax.experimental import pallas as pl
from jax.experimental.pallas import tpu as pltpu


def _round_up(x, m):
    return (x + m - 1) // m * m


def _conv4d_kernel(x_ref, w_ref, b_ref, o_ref, patch_ref, *,
                   ntau, cout, cin, hp, wp, n_out, t_out, n_slices, k_rows, k_pad):
    # x_ref    : (T, Cin, L)          all time slices of one batch element; spatial
    #                                 dims padded + flattened
    # w_ref    : (ntau*Cout, Kp)      stacked weights, rows (tau, cout), cols
    #                                 (kd, kh, kw, cin), pre-scaled by 1/divisor,
    #                                 zero-padded to Kp columns
    # b_ref    : (Cout, 1)            summed bias, pre-scaled by 1/divisor
    # o_ref    : (t_out, Cout, n_out) lane-dense output block (resident accumulator)
    # patch_ref: (Kp, n_out)          f32 im2col scratch for ONE time slice

    # Zero the K-padding rows so the padded MACs contribute exactly 0 (scratch may
    # otherwise contain stale / non-finite VMEM contents).
    if k_pad > k_rows:
        patch_ref[k_rows:, :] = jnp.zeros((k_pad - k_rows, n_out), jnp.float32)

    w = w_ref[...]          # hoisted: loaded once per grid step
    bias = b_ref[...]

    for t in range(n_slices):
        # ---- im2col for input time slice t: 3 base lane-slices + 24 XLU rolls,
        #      stores paired into full 8-sublane writes (2*Cin rows each). ----
        pending = []
        row = 0
        for kd in range(3):
            base = x_ref[t, :, pl.ds(kd * hp * wp, n_out)].astype(jnp.float32)
            for kh in range(3):
                for kw in range(3):
                    s = kh * wp + kw                    # lane offset of this tap
                    tap = base if s == 0 else pltpu.roll(base, shift=n_out - s, axis=1)
                    pending.append(tap)
                    if len(pending) == 2:
                        patch_ref[row:row + 2 * cin, :] = jnp.concatenate(pending, axis=0)
                        row += 2 * cin
                        pending = []
        if pending:                                     # 27 taps -> one leftover tap
            patch_ref[row:row + cin, :] = pending[0]

        # ---- one stacked MXU dot for this slice: (ntau*Cout, Kp) @ (Kp, n_out) ----
        y = jnp.dot(w, patch_ref[...], preferred_element_type=jnp.float32)

        # ---- scatter the ntau row-blocks of y into the output windows they feed:
        #      slice t contributes via conv_t{tau+1} to window t0 = t - tau. ----
        for tau in range(ntau):
            t0 = t - tau
            if 0 <= t0 < t_out:
                blk = y[tau * cout:(tau + 1) * cout, :]
                if tau == 0:
                    o_ref[t0] = (blk + bias).astype(o_ref.dtype)
                else:
                    o_ref[t0] = o_ref[t0] + blk.astype(o_ref.dtype)


def _conv4d_pallas(x_flat, w_stk, b2d, *, t_out, n_slices, ntau, hp, wp, n_out):
    B, T, Cin, L = x_flat.shape
    M, Kp = w_stk.shape
    Cout = M // ntau

    kernel = functools.partial(
        _conv4d_kernel, ntau=ntau, cout=Cout, cin=Cin, hp=hp, wp=wp, n_out=n_out,
        t_out=t_out, n_slices=n_slices, k_rows=27 * Cin, k_pad=Kp)

    return pl.pallas_call(
        kernel,
        out_shape=jax.ShapeDtypeStruct((B, t_out, Cout, n_out), x_flat.dtype),
        grid_spec=pltpu.PrefetchScalarGridSpec(
            num_scalar_prefetch=0,
            grid=(B,),
            in_specs=[
                # Full time slab of one batch element; fetched once per grid step.
                pl.BlockSpec((None, T, Cin, L), lambda b: (b, 0, 0, 0)),
                # Stacked weights / bias: constant index maps -> DMA'd once.
                pl.BlockSpec((M, Kp), lambda b: (0, 0)),
                pl.BlockSpec((Cout, 1), lambda b: (0, 0)),
            ],
            out_specs=pl.BlockSpec((None, t_out, Cout, n_out),
                                   lambda b: (b, 0, 0, 0)),
            scratch_shapes=[pltpu.VMEM((Kp, n_out), jnp.float32)],
        ),
        compiler_params=pltpu.CompilerParams(
            dimension_semantics=("parallel",)),
    )(x_flat, w_stk, b2d)


def conv4d_forward(x, params, stride=1):
    """Pallas implementation of Conv4d.forward for PyTorch-layout x: (B,C,T,D,H,W)."""
    assert stride == 1  # TODO(synk): only stride=1 (the module default) is implemented
    w1, b1, w2, b2, w3, b3 = params
    B, Cin, T, D, H, W = x.shape
    Cout = w1.shape[0]
    Dp, Hp, Wp = D + 2, H + 2, W + 2

    t_out = T - 2
    if t_out > 0:
        ws, b_sum, div, ntau, n_slices = [w1, w2, w3], b1 + b2 + b3, 3.0, 3, T
    else:
        # fallback branch of the PyTorch module: single conv_t1 on time slice 0
        ws, b_sum, div, ntau, t_out, n_slices = [w1], b1, 1.0, 1, 1, 1

    # ---- inputs: channels-first per time slice, spatial padded + flattened so every
    #      conv tap is a roll of a contiguous lane-axis slice inside the kernel. ----
    max_shift = 2 * Wp + 2                               # largest in-kernel roll
    n_out = _round_up(D * Hp * Wp + max_shift, 128)      # lane-dense width (+garbage)
    # Wrapped roll lanes must land only in cropped garbage columns (review concern).
    assert n_out - D * Hp * Wp >= max_shift
    max_base = 2 * Hp * Wp                               # largest kd base offset
    L = _round_up(max_base + n_out, 128)

    x_t = jnp.transpose(x, (0, 2, 1, 3, 4, 5))                        # (B,T,Cin,D,H,W)
    x_p = jnp.pad(x_t, ((0, 0), (0, 0), (0, 0), (1, 1), (1, 1), (1, 1)))
    x_flat = x_p.reshape(B, T, Cin, Dp * Hp * Wp)
    x_flat = jnp.pad(x_flat, ((0, 0), (0, 0), (0, 0), (0, L - Dp * Hp * Wp)))

    # ---- stacked weights: (ntau*Cout, Kp), rows ordered (tau, cout), cols ordered
    #      (kd, kh, kw, cin), pre-scaled by 1/divisor, zero-padded to Kp columns. ----
    K = 27 * Cin
    Kp = _round_up(K, 128)
    w_all = jnp.stack(ws, axis=0)                          # (ntau, Cout, Cin, 3, 3, 3)
    w2d = (jnp.transpose(w_all, (0, 1, 3, 4, 5, 2))
           .reshape(ntau * Cout, K) / div)
    w_stk = jnp.pad(w2d, ((0, 0), (0, Kp - K)))
    b2d = (b_sum / div).reshape(Cout, 1)

    out_flat = _conv4d_pallas(x_flat, w_stk, b2d, t_out=t_out, n_slices=n_slices,
                              ntau=ntau, hp=Hp, wp=Wp, n_out=n_out)
    # Crop the flat-slice "garbage" columns and restore PyTorch layout.
    out = out_flat[..., :D * Hp * Wp].reshape(B, t_out, Cout, D, Hp, Wp)[..., :H, :W]
    return jnp.transpose(out, (0, 2, 1, 3, 4, 5))          # (B, Cout, t_out, D, H, W)


# ---------------- pure-JAX reference (mirrors the PyTorch forward) ----------------
def _conv3d_ref(x_cl, w, b):  # x_cl: (B,D,H,W,Cin), w: (Cout,Cin,3,3,3)
    w_t = jnp.transpose(w, (2, 3, 4, 1, 0))
    y = jax.lax.conv_general_dilated(
        x_cl, w_t, window_strides=(1, 1, 1), padding="SAME",
        dimension_numbers=("NDHWC", "DHWIO", "NDHWC"))
    return y + b


def conv4d_ref(x, params):
    w1, b1, w2, b2, w3, b3 = params
    _, _, T, _, _, _ = x.shape
    outs = []
    for t in range(T):
        if t + 2 < T:
            xs = [jnp.transpose(x[:, :, t + k], (0, 2, 3, 4, 1)) for k in range(3)]
            y = (_conv3d_ref(xs[0], w1, b1) + _conv3d_ref(xs[1], w2, b2)
                 + _conv3d_ref(xs[2], w3, b3)) / 3.0
            outs.append(jnp.transpose(y, (0, 4, 1, 2, 3)))
    if not outs:
        y = _conv3d_ref(jnp.transpose(x[:, :, 0], (0, 2, 3, 4, 1)), w1, b1)
        outs.append(jnp.transpose(y, (0, 4, 1, 2, 3)))
    return jnp.stack(outs, axis=2)


if __name__ == "__main__":
    B, Cin, Cout = 2, 4, 8
    T, D, H, W = 5, 4, 8, 8

    key = jax.random.PRNGKey(0)
    ks = jax.random.split(key, 7)
    fan_in = Cin * 3 * 3 * 3
    bound = 1.0 / np.sqrt(fan_in)

    def init_w(k):
        return jax.random.uniform(k, (Cout, Cin, 3, 3, 3), jnp.float32, -bound, bound)

    def init_b(k):
        return jax.random.uniform(k, (Cout,), jnp.float32, -bound, bound)

    params = (init_w(ks[0]), init_b(ks[1]),
              init_w(ks[2]), init_b(ks[3]),
              init_w(ks[4]), init_b(ks[5]))
    x = jax.random.normal(ks[6], (B, Cin, T, D, H, W), jnp.float32)

    out = jax.block_until_ready(conv4d_forward(x, params))
    ref = jax.block_until_ready(conv4d_ref(x, params))

    assert out.shape == (B, Cout, T - 2, D, H, W), out.shape
    np.testing.assert_allclose(np.asarray(out), np.asarray(ref), rtol=1e-4, atol=1e-4)
    print("KERNEL_OK")
</pallas_src>

<mosaic_0001>
module attributes {stable_mosaic.version = 11 : i64} {
  func.func @_conv4d_kernel(%arg0: i32, %arg1: memref<1x5x4x768xf32, #tpu.memory_space<vmem>>, %arg2: memref<24x128xf32, #tpu.memory_space<vmem>>, %arg3: memref<8x1xf32, #tpu.memory_space<vmem>>, %arg4: memref<1x3x8x512xf32, #tpu.memory_space<vmem>>, %arg5: memref<128x512xf32, #tpu.memory_space<vmem>>) attributes {dimension_semantics = [#tpu.dimension_semantics<parallel>], iteration_bounds = array<i64: 2>, scalar_prefetch = 0 : i64, scratch_operands = 1 : i64, tpu.core_type = #tpu.core_type<tc>, window_params = [{transform_indices = @transform_0, window_bounds = array<i64: 1, 5, 4, 768>}, {pipeline_mode = #tpu.pipeline_mode<synchronous>, transform_indices = @transform_1, window_bounds = array<i64: 24, 128>}, {pipeline_mode = #tpu.pipeline_mode<synchronous>, transform_indices = @transform_2, window_bounds = array<i64: 8, 1>}, {transform_indices = @transform_3, window_bounds = array<i64: 1, 3, 8, 512>}]} {
    %cst = arith.constant 0.000000e+00 : f32
    %0 = vector.broadcast %cst : f32 to vector<20x512xf32>
    %c108 = arith.constant 108 : index
    %c0 = arith.constant 0 : index
    %1 = vector.load %arg5[%c108, %c0] : memref<128x512xf32, #tpu.memory_space<vmem>>, vector<20x512xf32>
    tpu.vector_store %arg5[%c108, %c0], %0 {strides = array<i32>} : memref<128x512xf32, #tpu.memory_space<vmem>>, vector<20x512xf32>,
    %c0_0 = arith.constant 0 : index
    %c0_1 = arith.constant 0 : index
    %2 = vector.load %arg2[%c0_0, %c0_1] : memref<24x128xf32, #tpu.memory_space<vmem>>, vector<24x128xf32>
    %c0_2 = arith.constant 0 : index
    %c0_3 = arith.constant 0 : index
    %3 = vector.load %arg3[%c0_2, %c0_3] : memref<8x1xf32, #tpu.memory_space<vmem>>, vector<8x1xf32>
    %c0_4 = arith.constant 0 : index
    %c0_5 = arith.constant 0 : index
    %c0_6 = arith.constant 0 : index
    %c0_7 = arith.constant 0 : index
    %4 = vector.load %arg1[%c0_4, %c0_5, %c0_6, %c0_7] : memref<1x5x4x768xf32, #tpu.memory_space<vmem>>, vector<1x1x4x512xf32>
    %5 = vector.shape_cast %4 : vector<1x1x4x512xf32> to vector<4x512xf32>
    %c511_i32 = arith.constant 511 : i32
    %6 = tpu.dynamic_rotate %5 by %c511_i32 dim 1 : vector<4x512xf32>, i32 -> vector<4x512xf32>
    %7 = tpu.concatenate %5, %6 in 0 : vector<4x512xf32>, vector<4x512xf32> -> vector<8x512xf32>
    %c0_8 = arith.constant 0 : index
    %c0_9 = arith.constant 0 : index
    %8 = vector.load %arg5[%c0_8, %c0_9] : memref<128x512xf32, #tpu.memory_space<vmem>>, vector<8x512xf32>
    tpu.vector_store %arg5[%c0_8, %c0_9], %7 {strides = array<i32>} : memref<128x512xf32, #tpu.memory_space<vmem>>, vector<8x512xf32>,
    %c510_i32 = arith.constant 510 : i32
    %9 = tpu.dynamic_rotate %5 by %c510_i32 dim 1 : vector<4x512xf32>, i32 -> vector<4x512xf32>
    %c502_i32 = arith.constant 502 : i32
    %10 = tpu.dynamic_rotate %5 by %c502_i32 dim 1 : vector<4x512xf32>, i32 -> vector<4x512xf32>
    %11 = tpu.concatenate %9, %10 in 0 : vector<4x512xf32>, vector<4x512xf32> -> vector<8x512xf32>
    %c8 = arith.constant 8 : index
    %c0_10 = arith.constant 0 : index
    %12 = vector.load %arg5[%c8, %c0_10] : memref<128x512xf32, #tpu.memory_space<vmem>>, vector<8x512xf32>
    tpu.vector_store %arg5[%c8, %c0_10], %11 {strides = array<i32>} : memref<128x512xf32, #tpu.memory_space<vmem>>, vector<8x512xf32>,
    %c501_i32 = arith.constant 501 : i32
    %13 = tpu.dynamic_rotate %5 by %c501_i32 dim 1 : vector<4x512xf32>, i32 -> vector<4x512xf32>
    %c500_i32 = arith.constant 500 : i32
    %14 = tpu.dynamic_rotate %5 by %c500_i32 dim 1 : vector<4x512xf32>, i32 -> vector<4x512xf32>
    %15 = tpu.concatenate %13, %14 in 0 : vector<4x512xf32>, vector<4x512xf32> -> vector<8x512xf32>
    %c16 = arith.constant 16 : index
    %c0_11 = arith.constant 0 : index
    %16 = vector.load %arg5[%c16, %c0_11] : memref<128x512xf32, #tpu.memory_space<vmem>>, vector<8x512xf32>
    tpu.vector_store %arg5[%c16, %c0_11], %15 {strides = array<i32>} : memref<128x512xf32, #tpu.memory_space<vmem>>, vector<8x512xf32>,
    %c492_i32 = arith.constant 492 : i32
    %17 = tpu.dynamic_rotate %5 by %c492_i32 dim 1 : vector<4x512xf32>, i32 -> vector<4x512xf32>
    %c491_i32 = arith.constant 491 : i32
    %18 = tpu.dynamic_rotate %5 by %c491_i32 dim 1 : vector<4x512xf32>, i32 -> vector<4x512xf32>
    %19 = tpu.concatenate %17, %18 in 0 : vector<4x512xf32>, vector<4x512xf32> -> vector<8x512xf32>
    %c24 = arith.constant 24 : index
    %c0_12 = arith.constant 0 : index
    %20 = vector.load %arg5[%c24, %c0_12] : memref<128x512xf32, #tpu.memory_space<vmem>>, vector<8x512xf32>
    tpu.vector_store %arg5[%c24, %c0_12], %19 {strides = array<i32>} : memref<128x512xf32, #tpu.memory_space<vmem>>, vector<8x512xf32>,
    %c490_i32 = arith.constant 490 : i32
    %21 = tpu.dynamic_rotate %5 by %c490_i32 dim 1 : vector<4x512xf32>, i32 -> vector<4x512xf32>
    %c0_13 = arith.constant 0 : index
    %c0_14 = arith.constant 0 : index
    %c0_15 = arith.constant 0 : index
    %c100 = arith.constant 100 : index
    %22 = vector.load %arg1[%c0_13, %c0_14, %c0_15, %c100] : memref<1x5x4x768xf32, #tpu.memory_space<vmem>>, vector<1x1x4x512xf32>
    %23 = vector.shape_cast %22 : vector<1x1x4x512xf32> to vector<4x512xf32>
    %24 = tpu.concatenate %21, %23 in 0 : vector<4x512xf32>, vector<4x512xf32> -> vector<8x512xf32>
    %c32 = arith.constant 32 : index
    %c0_16 = arith.constant 0 : index
    %25 = vector.load %arg5[%c32, %c0_16] : memref<128x512xf32, #tpu.memory_space<vmem>>, vector<8x512xf32>
    tpu.vector_store %arg5[%c32, %c0_16], %24 {strides = array<i32>} : memref<128x512xf32, #tpu.memory_space<vmem>>, vector<8x512xf32>,
    %c511_i32_17 = arith.constant 511 : i32
    %26 = tpu.dynamic_rotate %23 by %c511_i32_17 dim 1 : vector<4x512xf32>, i32 -> vector<4x512xf32>
    %c510_i32_18 = arith.constant 510 : i32
    %27 = tpu.dynamic_rotate %23 by %c510_i32_18 dim 1 : vector<4x512xf32>, i32 -> vector<4x512xf32>
    %28 = tpu.concatenate %26, %27 in 0 : vector<4x512xf32>, vector<4x512xf32> -> vector<8x512xf32>
    %c40 = arith.constant 40 : index
    %c0_19 = arith.constant 0 : index
    %29 = vector.load %arg5[%c40, %c0_19] : memref<128x512xf32, #tpu.memory_space<vmem>>, vector<8x512xf32>
    tpu.vector_store %arg5[%c40, %c0_19], %28 {strides = array<i32>} : memref<128x512xf32, #tpu.memory_space<vmem>>, vector<8x512xf32>,
    %c502_i32_20 = arith.constant 502 : i32
    %30 = tpu.dynamic_rotate %23 by %c502_i32_20 dim 1 : vector<4x512xf32>, i32 -> vector<4x512xf32>
    %c501_i32_21 = arith.constant 501 : i32
    %31 = tpu.dynamic_rotate %23 by %c501_i32_21 dim 1 : vector<4x512xf32>, i32 -> vector<4x512xf32>
    %32 = tpu.concatenate %30, %31 in 0 : vector<4x512xf32>, vector<4x512xf32> -> vector<8x512xf32>
    %c48 = arith.constant 48 : index
    %c0_22 = arith.constant 0 : index
    %33 = vector.load %arg5[%c48, %c0_22] : memref<128x512xf32, #tpu.memory_space<vmem>>, vector<8x512xf32>
    tpu.vector_store %arg5[%c48, %c0_22], %32 {strides = array<i32>} : memref<128x512xf32, #tpu.memory_space<vmem>>, vector<8x512xf32>,
    %c500_i32_23 = arith.constant 500 : i32
    %34 = tpu.dynamic_rotate %23 by %c500_i32_23 dim 1 : vector<4x512xf32>, i32 -> vector<4x512xf32>
    %c492_i32_24 = arith.constant 492 : i32
    %35 = tpu.dynamic_rotate %23 by %c492_i32_24 dim 1 : vector<4x512xf32>, i32 -> vector<4x512xf32>
    %36 = tpu.concatenate %34, %35 in 0 : vector<4x512xf32>, vector<4x512xf32> -> vector<8x512xf32>
    %c56 = arith.constant 56 : index
    %c0_25 = arith.constant 0 : index
    %37 = vector.load %arg5[%c56, %c0_25] : memref<128x512xf32, #tpu.memory_space<vmem>>, vector<8x512xf32>
    tpu.vector_store %arg5[%c56, %c0_25], %36 {strides = array<i32>} : memref<128x512xf32, #tpu.memory_space<vmem>>, vector<8x512xf32>,
    %c491_i32_26 = arith.constant 491 : i32
    %38 = tpu.dynamic_rotate %23 by %c491_i32_26 dim 1 : vector<4x512xf32>, i32 -> vector<4x512xf32>
    %c490_i32_27 = arith.constant 490 : i32
    %39 = tpu.dynamic_rotate %23 by %c490_i32_27 dim 1 : vector<4x512xf32>, i32 -> vector<4x512xf32>
    %40 = tpu.concatenate %38, %39 in 0 : vector<4x512xf32>, vector<4x512xf32> -> vector<8x512xf32>
    %c64 = arith.constant 64 : index
    %c0_28 = arith.constant 0 : index
    %41 = vector.load %arg5[%c64, %c0_28] : memref<128x512xf32, #tpu.memory_space<vmem>>, vector<8x512xf32>
    tpu.vector_store %arg5[%c64, %c0_28], %40 {strides = array<i32>} : memref<128x512xf32, #tpu.memory_space<vmem>>, vector<8x512xf32>,
    %c0_29 = arith.constant 0 : index
    %c0_30 = arith.constant 0 : index
    %c0_31 = arith.constant 0 : index
    %c200 = arith.constant 200 : index
    %42 = vector.load %arg1[%c0_29, %c0_30, %c0_31, %c200] : memref<1x5x4x768xf32, #tpu.memory_space<vmem>>, vector<1x1x4x512xf32>
    %43 = vector.shape_cast %42 : vector<1x1x4x512xf32> to vector<4x512xf32>
    %c511_i32_32 = arith.constant 511 : i32
    %44 = tpu.dynamic_rotate %43 by %c511_i32_32 dim 1 : vector<4x512xf32>, i32 -> vector<4x512xf32>
    %45 = tpu.concatenate %43, %44 in 0 : vector<4x512xf32>, vector<4x512xf32> -> vector<8x512xf32>
    %c72 = arith.constant 72 : index
    %c0_33 = arith.constant 0 : index
    %46 = vector.load %arg5[%c72, %c0_33] : memref<128x512xf32, #tpu.memory_space<vmem>>, vector<8x512xf32>
    tpu.vector_store %arg5[%c72, %c0_33], %45 {strides = array<i32>} : memref<128x512xf32, #tpu.memory_space<vmem>>, vector<8x512xf32>,
    %c510_i32_34 = arith.constant 510 : i32
    %47 = tpu.dynamic_rotate %43 by %c510_i32_34 dim 1 : vector<4x512xf32>, i32 -> vector<4x512xf32>
    %c502_i32_35 = arith.constant 502 : i32
    %48 = tpu.dynamic_rotate %43 by %c502_i32_35 dim 1 : vector<4x512xf32>, i32 -> vector<4x512xf32>
    %49 = tpu.concatenate %47, %48 in 0 : vector<4x512xf32>, vector<4x512xf32> -> vector<8x512xf32>
    %c80 = arith.constant 80 : index
    %c0_36 = arith.constant 0 : index
    %50 = vector.load %arg5[%c80, %c0_36] : memref<128x512xf32, #tpu.memory_space<vmem>>, vector<8x512xf32>
    tpu.vector_store %arg5[%c80, %c0_36], %49 {strides = array<i32>} : memref<128x512xf32, #tpu.memory_space<vmem>>, vector<8x512xf32>,
    %c501_i32_37 = arith.constant 501 : i32
    %51 = tpu.dynamic_rotate %43 by %c501_i32_37 dim 1 : vector<4x512xf32>, i32 -> vector<4x512xf32>
    %c500_i32_38 = arith.constant 500 : i32
    %52 = tpu.dynamic_rotate %43 by %c500_i32_38 dim 1 : vector<4x512xf32>, i32 -> vector<4x512xf32>
    %53 = tpu.concatenate %51, %52 in 0 : vector<4x512xf32>, vector<4x512xf32> -> vector<8x512xf32>
    %c88 = arith.constant 88 : index
    %c0_39 = arith.constant 0 : index
    %54 = vector.load %arg5[%c88, %c0_39] : memref<128x512xf32, #tpu.memory_space<vmem>>, vector<8x512xf32>
    tpu.vector_store %arg5[%c88, %c0_39], %53 {strides = array<i32>} : memref<128x512xf32, #tpu.memory_space<vmem>>, vector<8x512xf32>,
    %c492_i32_40 = arith.constant 492 : i32
    %55 = tpu.dynamic_rotate %43 by %c492_i32_40 dim 1 : vector<4x512xf32>, i32 -> vector<4x512xf32>
    %c491_i32_41 = arith.constant 491 : i32
    %56 = tpu.dynamic_rotate %43 by %c491_i32_41 dim 1 : vector<4x512xf32>, i32 -> vector<4x512xf32>
    %57 = tpu.concatenate %55, %56 in 0 : vector<4x512xf32>, vector<4x512xf32> -> vector<8x512xf32>
    %c96 = arith.constant 96 : index
    %c0_42 = arith.constant 0 : index
    %58 = vector.load %arg5[%c96, %c0_42] : memref<128x512xf32, #tpu.memory_space<vmem>>, vector<8x512xf32>
    tpu.vector_store %arg5[%c96, %c0_42], %57 {strides = array<i32>} : memref<128x512xf32, #tpu.memory_space<vmem>>, vector<8x512xf32>,
    %c490_i32_43 = arith.constant 490 : i32
    %59 = tpu.dynamic_rotate %43 by %c490_i32_43 dim 1 : vector<4x512xf32>, i32 -> vector<4x512xf32>
    %c104 = arith.constant 104 : index
    %c0_44 = arith.constant 0 : index
    %60 = vector.load %arg5[%c104, %c0_44] : memref<128x512xf32, #tpu.memory_space<vmem>>, vector<4x512xf32>
    tpu.vector_store %arg5[%c104, %c0_44], %59 {strides = array<i32>} : memref<128x512xf32, #tpu.memory_space<vmem>>, vector<4x512xf32>,
    %c0_45 = arith.constant 0 : index
    %c0_46 = arith.constant 0 : index
    %61 = vector.load %arg5[%c0_45, %c0_46] : memref<128x512xf32, #tpu.memory_space<vmem>>, vector<128x512xf32>
    %cst_47 = arith.constant dense<0.000000e+00> : vector<24x512xf32>
    %62 = tpu.matmul %2, %61, %cst_47 {dimension_numbers = #tpu.dot_dimension_numbers<[1], [0], [0], [1], [0, 0, 1, 1], [], []>} : vector<24x128xf32>, vector<128x512xf32>, vector<24x512xf32> -> vector<24x512xf32>
    %63 = vector.extract_strided_slice %62 {offsets = [0, 0], sizes = [8, 512], strides = [1, 1]} : vector<24x512xf32> to vector<8x512xf32>
    %64 = vector.broadcast %3 : vector<8x1xf32> to vector<8x512xf32>
    %65 = arith.addf %63, %64 : vector<8x512xf32>
    %c0_48 = arith.constant 0 : index
    %c0_49 = arith.constant 0 : index
    %c0_50 = arith.constant 0 : index
    %c0_51 = arith.constant 0 : index
    %66 = vector.load %arg4[%c0_48, %c0_49, %c0_50, %c0_51] : memref<1x3x8x512xf32, #tpu.memory_space<vmem>>, vector<1x1x8x512xf32>
    %67 = vector.shape_cast %66 : vector<1x1x8x512xf32> to vector<8x512xf32>
    %68 = vector.shape_cast %65 : vector<8x512xf32> to vector<1x1x8x512xf32>
    tpu.vector_store %arg4[%c0_48, %c0_49, %c0_50, %c0_51], %68 {strides = array<i32>} : memref<1x3x8x512xf32, #tpu.memory_space<vmem>>, vector<1x1x8x512xf32>,
    %c0_52 = arith.constant 0 : index
    %c1 = arith.constant 1 : index
    %c0_53 = arith.constant 0 : index
    %c0_54 = arith.constant 0 : index
    %69 = vector.load %arg1[%c0_52, %c1, %c0_53, %c0_54] : memref<1x5x4x768xf32, #tpu.memory_space<vmem>>, vector<1x1x4x512xf32>
    %70 = vector.shape_cast %69 : vector<1x1x4x512xf32> to vector<4x512xf32>
    %c511_i32_55 = arith.constant 511 : i32
    %71 = tpu.dynamic_rotate %70 by %c511_i32_55 dim 1 : vector<4x512xf32>, i32 -> vector<4x512xf32>
    %72 = tpu.concatenate %70, %71 in 0 : vector<4x512xf32>, vector<4x512xf32> -> vector<8x512xf32>
    %c0_56 = arith.constant 0 : index
    %c0_57 = arith.constant 0 : index
    %73 = vector.load %arg5[%c0_56, %c0_57] : memref<128x512xf32, #tpu.memory_space<vmem>>, vector<8x512xf32>
    tpu.vector_store %arg5[%c0_56, %c0_57], %72 {strides = array<i32>} : memref<128x512xf32, #tpu.memory_space<vmem>>, vector<8x512xf32>,
    %c510_i32_58 = arith.constant 510 : i32
    %74 = tpu.dynamic_rotate %70 by %c510_i32_58 dim 1 : vector<4x512xf32>, i32 -> vector<4x512xf32>
    %c502_i32_59 = arith.constant 502 : i32
    %75 = tpu.dynamic_rotate %70 by %c502_i32_59 dim 1 : vector<4x512xf32>, i32 -> vector<4x512xf32>
    %76 = tpu.concatenate %74, %75 in 0 : vector<4x512xf32>, vector<4x512xf32> -> vector<8x512xf32>
    %c8_60 = arith.constant 8 : index
    %c0_61 = arith.constant 0 : index
    %77 = vector.load %arg5[%c8_60, %c0_61] : memref<128x512xf32, #tpu.memory_space<vmem>>, vector<8x512xf32>
    tpu.vector_store %arg5[%c8_60, %c0_61], %76 {strides = array<i32>} : memref<128x512xf32, #tpu.memory_space<vmem>>, vector<8x512xf32>,
    %c501_i32_62 = arith.constant 501 : i32
    %78 = tpu.dynamic_rotate %70 by %c501_i32_62 dim 1 : vector<4x512xf32>, i32 -> vector<4x512xf32>
    %c500_i32_63 = arith.constant 500 : i32
    %79 = tpu.dynamic_rotate %70 by %c500_i32_63 dim 1 : vector<4x512xf32>, i32 -> vector<4x512xf32>
    %80 = tpu.concatenate %78, %79 in 0 : vector<4x512xf32>, vector<4x512xf32> -> vector<8x512xf32>
    %c16_64 = arith.constant 16 : index
    %c0_65 = arith.constant 0 : index
    %81 = vector.load %arg5[%c16_64, %c0_65] : memref<128x512xf32, #tpu.memory_space<vmem>>, vector<8x512xf32>
    tpu.vector_store %arg5[%c16_64, %c0_65], %80 {strides = array<i32>} : memref<128x512xf32, #tpu.memory_space<vmem>>, vector<8x512xf32>,
    %c492_i32_66 = arith.constant 492 : i32
    %82 = tpu.dynamic_rotate %70 by %c492_i32_66 dim 1 : vector<4x512xf32>, i32 -> vector<4x512xf32>
    %c491_i32_67 = arith.constant 491 : i32
    %83 = tpu.dynamic_rotate %70 by %c491_i32_67 dim 1 : vector<4x512xf32>, i32 -> vector<4x512xf32>
    %84 = tpu.concatenate %82, %83 in 0 : vector<4x512xf32>, vector<4x512xf32> -> vector<8x512xf32>
    %c24_68 = arith.constant 24 : index
    %c0_69 = arith.constant 0 : index
    %85 = vector.load %arg5[%c24_68, %c0_69] : memref<128x512xf32, #tpu.memory_space<vmem>>, vector<8x512xf32>
    tpu.vector_store %arg5[%c24_68, %c0_69], %84 {strides = array<i32>} : memref<128x512xf32, #tpu.memory_space<vmem>>, vector<8x512xf32>,
    %c490_i32_70 = arith.constant 490 : i32
    %86 = tpu.dynamic_rotate %70 by %c490_i32_70 dim 1 : vector<4x512xf32>, i32 -> vector<4x512xf32>
    %c0_71 = arith.constant 0 : index
    %c1_72 = arith.constant 1 : index
    %c0_73 = arith.constant 0 : index
    %c100_74 = arith.constant 100 : index
    %87 = vector.load %arg1[%c0_71, %c1_72, %c0_73, %c100_74] : memref<1x5x4x768xf32, #tpu.memory_space<vmem>>, vector<1x1x4x512xf32>
    %88 = vector.shape_cast %87 : vector<1x1x4x512xf32> to vector<4x512xf32>
    %89 = tpu.concatenate %86, %88 in 0 : vector<4x512xf32>, vector<4x512xf32> -> vector<8x512xf32>
    %c32_75 = arith.constant 32 : index
    %c0_76 = arith.constant 0 : index
    %90 = vector.load %arg5[%c32_75, %c0_76] : memref<128x512xf32, #tpu.memory_space<vmem>>, vector<8x512xf32>
    tpu.vector_store %arg5[%c32_75, %c0_76], %89 {strides = array<i32>} : memref<128x512xf32, #tpu.memory_space<vmem>>, vector<8x512xf32>,
    %c511_i32_77 = arith.constant 511 : i32
    %91 = tpu.dynamic_rotate %88 by %c511_i32_77 dim 1 : vector<4x512xf32>, i32 -> vector<4x512xf32>
    %c510_i32_78 = arith.constant 510 : i32
    %92 = tpu.dynamic_rotate %88 by %c510_i32_78 dim 1 : vector<4x512xf32>, i32 -> vector<4x512xf32>
    %93 = tpu.concatenate %91, %92 in 0 : vector<4x512xf32>, vector<4x512xf32> -> vector<8x512xf32>
    %c40_79 = arith.constant 40 : index
    %c0_80 = arith.constant 0 : index
    %94 = vector.load %arg5[%c40_79, %c0_80] : memref<128x512xf32, #tpu.memory_space<vmem>>, vector<8x512xf32>
    tpu.vector_store %arg5[%c40_79, %c0_80], %93 {strides = array<i32>} : memref<128x512xf32, #tpu.memory_space<vmem>>, vector<8x512xf32>,
    %c502_i32_81 = arith.constant 502 : i32
    %95 = tpu.dynamic_rotate %88 by %c502_i32_81 dim 1 : vector<4x512xf32>, i32 -> vector<4x512xf32>
    %c501_i32_82 = arith.constant 501 : i32
    %96 = tpu.dynamic_rotate %88 by %c501_i32_82 dim 1 : vector<4x512xf32>, i32 -> vector<4x512xf32>
    %97 = tpu.concatenate %95, %96 in 0 : vector<4x512xf32>, vector<4x512xf32> -> vector<8x512xf32>
    %c48_83 = arith.constant 48 : index
    %c0_84 = arith.constant 0 : index
    %98 = vector.load %arg5[%c48_83, %c0_84] : memref<128x512xf32, #tpu.memory_space<vmem>>, vector<8x512xf32>
    tpu.vector_store %arg5[%c48_83, %c0_84], %97 {strides = array<i32>} : memref<128x512xf32, #tpu.memory_space<vmem>>, vector<8x512xf32>,
    %c500_i32_85 = arith.constant 500 : i32
    %99 = tpu.dynamic_rotate %88 by %c500_i32_85 dim 1 : vector<4x512xf32>, i32 -> vector<4x512xf32>
    %c492_i32_86 = arith.constant 492 : i32
    %100 = tpu.dynamic_rotate %88 by %c492_i32_86 dim 1 : vector<4x512xf32>, i32 -> vector<4x512xf32>
    %101 = tpu.concatenate %99, %100 in 0 : vector<4x512xf32>, vector<4x512xf32> -> vector<8x512xf32>
    %c56_87 = arith.constant 56 : index
    %c0_88 = arith.constant 0 : index
    %102 = vector.load %arg5[%c56_87, %c0_88] : memref<128x512xf32, #tpu.memory_space<vmem>>, vector<8x512xf32>
    tpu.vector_store %arg5[%c56_87, %c0_88], %101 {strides = array<i32>} : memref<128x512xf32, #tpu.memory_space<vmem>>, vector<8x512xf32>,
    %c491_i32_89 = arith.constant 491 : i32
    %103 = tpu.dynamic_rotate %88 by %c491_i32_89 dim 1 : vector<4x512xf32>, i32 -> vector<4x512xf32>
    %c490_i32_90 = arith.constant 490 : i32
    %104 = tpu.dynamic_rotate %88 by %c490_i32_90 dim 1 : vector<4x512xf32>, i32 -> vector<4x512xf32>
    %105 = tpu.concatenate %103, %104 in 0 : vector<4x512xf32>, vector<4x512xf32> -> vector<8x512xf32>
    %c64_91 = arith.constant 64 : index
    %c0_92 = arith.constant 0 : index
    %106 = vector.load %arg5[%c64_91, %c0_92] : memref<128x512xf32, #tpu.memory_space<vmem>>, vector<8x512xf32>
    tpu.vector_store %arg5[%c64_91, %c0_92], %105 {strides = array<i32>} : memref<128x512xf32, #tpu.memory_space<vmem>>, vector<8x512xf32>,
    %c0_93 = arith.constant 0 : index
    %c1_94 = arith.constant 1 : index
    %c0_95 = arith.constant 0 : index
    %c200_96 = arith.constant 200 : index
    %107 = vector.load %arg1[%c0_93, %c1_94, %c0_95, %c200_96] : memref<1x5x4x768xf32, #tpu.memory_space<vmem>>, vector<1x1x4x512xf32>
    %108 = vector.shape_cast %107 : vector<1x1x4x512xf32> to vector<4x512xf32>
    %c511_i32_97 = arith.constant 511 : i32
    %109 = tpu.dynamic_rotate %108 by %c511_i32_97 dim 1 : vector<4x512xf32>, i32 -> vector<4x512xf32>
    %110 = tpu.concatenate %108, %109 in 0 : vector<4x512xf32>, vector<4x512xf32> -> vector<8x512xf32>
    %c72_98 = arith.constant 72 : index
    %c0_99 = arith.constant 0 : index
    %111 = vector.load %arg5[%c72_98, %c0_99] : memref<128x512xf32, #tpu.memory_space<vmem>>, vector<8x512xf32>
    tpu.vector_store %arg5[%c72_98, %c0_99], %110 {strides = array<i32>} : memref<128x512xf32, #tpu.memory_space<vmem>>, vector<8x512xf32>,
    %c510_i32_100 = arith.constant 510 : i32
    %112 = tpu.dynamic_rotate %108 by %c510_i32_100 dim 1 : vector<4x512xf32>, i32 -> vector<4x512xf32>
    %c502_i32_101 = arith.constant 502 : i32
    %113 = tpu.dynamic_rotate %108 by %c502_i32_101 dim 1 : vector<4x512xf32>, i32 -> vector<4x512xf32>
    %114 = tpu.concatenate %112, %113 in 0 : vector<4x512xf32>, vector<4x512xf32> -> vector<8x512xf32>
    %c80_102 = arith.constant 80 : index
    %c0_103 = arith.constant 0 : index
    %115 = vector.load %arg5[%c80_102, %c0_103] : memref<128x512xf32, #tpu.memory_space<vmem>>, vector<8x512xf32>
    tpu.vector_store %arg5[%c80_102, %c0_103], %114 {strides = array<i32>} : memref<128x512xf32, #tpu.memory_space<vmem>>, vector<8x512xf32>,
    %c501_i32_104 = arith.constant 501 : i32
    %116 = tpu.dynamic_rotate %108 by %c501_i32_104 dim 1 : vector<4x512xf32>, i32 -> vector<4x512xf32>
    %c500_i32_105 = arith.constant 500 : i32
    %117 = tpu.dynamic_rotate %108 by %c500_i32_105 dim 1 : vector<4x512xf32>, i32 -> vector<4x512xf32>
    %118 = tpu.concatenate %116, %117 in 0 : vector<4x512xf32>, vector<4x512xf32> -> vector<8x512xf32>
    %c88_106 = arith.constant 88 : index
    %c0_107 = arith.constant 0 : index
    %119 = vector.load %arg5[%c88_106, %c0_107] : memref<128x512xf32, #tpu.memory_space<vmem>>, vector<8x512xf32>
    tpu.vector_store %arg5[%c88_106, %c0_107], %118 {strides = array<i32>} : memref<128x512xf32, #tpu.memory_space<vmem>>, vector<8x512xf32>,
    %c492_i32_108 = arith.constant 492 : i32
    %120 = tpu.dynamic_rotate %108 by %c492_i32_108 dim 1 : vector<4x512xf32>, i32 -> vector<4x512xf32>
    %c491_i32_109 = arith.constant 491 : i32
    %121 = tpu.dynamic_rotate %108 by %c491_i32_109 dim 1 : vector<4x512xf32>, i32 -> vector<4x512xf32>
    %122 = tpu.concatenate %120, %121 in 0 : vector<4x512xf32>, vector<4x512xf32> -> vector<8x512xf32>
    %c96_110 = arith.constant 96 : index
    %c0_111 = arith.constant 0 : index
    %123 = vector.load %arg5[%c96_110, %c0_111] : memref<128x512xf32, #tpu.memory_space<vmem>>, vector<8x512xf32>
    tpu.vector_store %arg5[%c96_110, %c0_111], %122 {strides = array<i32>} : memref<128x512xf32, #tpu.memory_space<vmem>>, vector<8x512xf32>,
    %c490_i32_112 = arith.constant 490 : i32
    %124 = tpu.dynamic_rotate %108 by %c490_i32_112 dim 1 : vector<4x512xf32>, i32 -> vector<4x512xf32>
    %c104_113 = arith.constant 104 : index
    %c0_114 = arith.constant 0 : index
    %125 = vector.load %arg5[%c104_113, %c0_114] : memref<128x512xf32, #tpu.memory_space<vmem>>, vector<4x512xf32>
    tpu.vector_store %arg5[%c104_113, %c0_114], %124 {strides = array<i32>} : memref<128x512xf32, #tpu.memory_space<vmem>>, vector<4x512xf32>,
    %c0_115 = arith.constant 0 : index
    %c0_116 = arith.constant 0 : index
    %126 = vector.load %arg5[%c0_115, %c0_116] : memref<128x512xf32, #tpu.memory_space<vmem>>, vector<128x512xf32>
    %cst_117 = arith.constant dense<0.000000e+00> : vector<24x512xf32>
    %127 = tpu.matmul %2, %126, %cst_117 {dimension_numbers = #tpu.dot_dimension_numbers<[1], [0], [0], [1], [0, 0, 1, 1], [], []>} : vector<24x128xf32>, vector<128x512xf32>, vector<24x512xf32> -> vector<24x512xf32>
    %128 = vector.extract_strided_slice %127 {offsets = [0, 0], sizes = [8, 512], strides = [1, 1]} : vector<24x512xf32> to vector<8x512xf32>
    %129 = vector.broadcast %3 : vector<8x1xf32> to vector<8x512xf32>
    %130 = arith.addf %128, %129 : vector<8x512xf32>
    %c0_118 = arith.constant 0 : index
    %c1_119 = arith.constant 1 : index
    %c0_120 = arith.constant 0 : index
    %c0_121 = arith.constant 0 : index
    %131 = vector.load %arg4[%c0_118, %c1_119, %c0_120, %c0_121] : memref<1x3x8x512xf32, #tpu.memory_space<vmem>>, vector<1x1x8x512xf32>
    %132 = vector.shape_cast %131 : vector<1x1x8x512xf32> to vector<8x512xf32>
    %133 = vector.shape_cast %130 : vector<8x512xf32> to vector<1x1x8x512xf32>
    tpu.vector_store %arg4[%c0_118, %c1_119, %c0_120, %c0_121], %133 {strides = array<i32>} : memref<1x3x8x512xf32, #tpu.memory_space<vmem>>, vector<1x1x8x512xf32>,
    %134 = vector.extract_strided_slice %127 {offsets = [8, 0], sizes = [8, 512], strides = [1, 1]} : vector<24x512xf32> to vector<8x512xf32>
    %c0_122 = arith.constant 0 : index
    %c0_123 = arith.constant 0 : index
    %c0_124 = arith.constant 0 : index
    %c0_125 = arith.constant 0 : index
    %135 = vector.load %arg4[%c0_122, %c0_123, %c0_124, %c0_125] : memref<1x3x8x512xf32, #tpu.memory_space<vmem>>, vector<1x1x8x512xf32>
    %136 = vector.shape_cast %135 : vector<1x1x8x512xf32> to vector<8x512xf32>
    %137 = arith.addf %136, %134 : vector<8x512xf32>
    %c0_126 = arith.constant 0 : index
    %c0_127 = arith.constant 0 : index
    %c0_128 = arith.constant 0 : index
    %c0_129 = arith.constant 0 : index
    %138 = vector.load %arg4[%c0_126, %c0_127, %c0_128, %c0_129] : memref<1x3x8x512xf32, #tpu.memory_space<vmem>>, vector<1x1x8x512xf32>
    %139 = vector.shape_cast %138 : vector<1x1x8x512xf32> to vector<8x512xf32>
    %140 = vector.shape_cast %137 : vector<8x512xf32> to vector<1x1x8x512xf32>
    tpu.vector_store %arg4[%c0_126, %c0_127, %c0_128, %c0_129], %140 {strides = array<i32>} : memref<1x3x8x512xf32, #tpu.memory_space<vmem>>, vector<1x1x8x512xf32>,
    %c0_130 = arith.constant 0 : index
    %c2 = arith.constant 2 : index
    %c0_131 = arith.constant 0 : index
    %c0_132 = arith.constant 0 : index
    %141 = vector.load %arg1[%c0_130, %c2, %c0_131, %c0_132] : memref<1x5x4x768xf32, #tpu.memory_space<vmem>>, vector<1x1x4x512xf32>
    %142 = vector.shape_cast %141 : vector<1x1x4x512xf32> to vector<4x512xf32>
    %c511_i32_133 = arith.constant 511 : i32
    %143 = tpu.dynamic_rotate %142 by %c511_i32_133 dim 1 : vector<4x512xf32>, i32 -> vector<4x512xf32>
    %144 = tpu.concatenate %142, %143 in 0 : vector<4x512xf32>, vector<4x512xf32> -> vector<8x512xf32>
    %c0_134 = arith.constant 0 : index
    %c0_135 = arith.constant 0 : index
    %145 = vector.load %arg5[%c0_134, %c0_135] : memref<128x512xf32, #tpu.memory_space<vmem>>, vector<8x512xf32>
    tpu.vector_store %arg5[%c0_134, %c0_135], %144 {strides = array<i32>} : memref<128x512xf32, #tpu.memory_space<vmem>>, vector<8x512xf32>,
    %c510_i32_136 = arith.constant 510 : i32
    %146 = tpu.dynamic_rotate %142 by %c510_i32_136 dim 1 : vector<4x512xf32>, i32 -> vector<4x512xf32>
    %c502_i32_137 = arith.constant 502 : i32
    %147 = tpu.dynamic_rotate %142 by %c502_i32_137 dim 1 : vector<4x512xf32>, i32 -> vector<4x512xf32>
    %148 = tpu.concatenate %146, %147 in 0 : vector<4x512xf32>, vector<4x512xf32> -> vector<8x512xf32>
    %c8_138 = arith.constant 8 : index
    %c0_139 = arith.constant 0 : index
    %149 = vector.load %arg5[%c8_138, %c0_139] : memref<128x512xf32, #tpu.memory_space<vmem>>, vector<8x512xf32>
    tpu.vector_store %arg5[%c8_138, %c0_139], %148 {strides = array<i32>} : memref<128x512xf32, #tpu.memory_space<vmem>>, vector<8x512xf32>,
    %c501_i32_140 = arith.constant 501 : i32
    %150 = tpu.dynamic_rotate %142 by %c501_i32_140 dim 1 : vector<4x512xf32>, i32 -> vector<4x512xf32>
    %c500_i32_141 = arith.constant 500 : i32
    %151 = tpu.dynamic_rotate %142 by %c500_i32_141 dim 1 : vector<4x512xf32>, i32 -> vector<4x512xf32>
    %152 = tpu.concatenate %150, %151 in 0 : vector<4x512xf32>, vector<4x512xf32> -> vector<8x512xf32>
    %c16_142 = arith.constant 16 : index
    %c0_143 = arith.constant 0 : index
    %153 = vector.load %arg5[%c16_142, %c0_143] : memref<128x512xf32, #tpu.memory_space<vmem>>, vector<8x512xf32>
    tpu.vector_store %arg5[%c16_142, %c0_143], %152 {strides = array<i32>} : memref<128x512xf32, #tpu.memory_space<vmem>>, vector<8x512xf32>,
    %c492_i32_144 = arith.constant 492 : i32
    %154 = tpu.dynamic_rotate %142 by %c492_i32_144 dim 1 : vector<4x512xf32>, i32 -> vector<4x512xf32>
    %c491_i32_145 = arith.constant 491 : i32
    %155 = tpu.dynamic_rotate %142 by %c491_i32_145 dim 1 : vector<4x512xf32>, i32 -> vector<4x512xf32>
    %156 = tpu.concatenate %154, %155 in 0 : vector<4x512xf32>, vector<4x512xf32> -> vector<8x512xf32>
    %c24_146 = arith.constant 24 : index
    %c0_147 = arith.constant 0 : index
    %157 = vector.load %arg5[%c24_146, %c0_147] : memref<128x512xf32, #tpu.memory_space<vmem>>, vector<8x512xf32>
    tpu.vector_store %arg5[%c24_146, %c0_147], %156 {strides = array<i32>} : memref<128x512xf32, #tpu.memory_space<vmem>>, vector<8x512xf32>,
    %c490_i32_148 = arith.constant 490 : i32
    %158 = tpu.dynamic_rotate %142 by %c490_i32_148 dim 1 : vector<4x512xf32>, i32 -> vector<4x512xf32>
    %c0_149 = arith.constant 0 : index
    %c2_150 = arith.constant 2 : index
    %c0_151 = arith.constant 0 : index
    %c100_152 = arith.constant 100 : index
    %159 = vector.load %arg1[%c0_149, %c2_150, %c0_151, %c100_152] : memref<1x5x4x768xf32, #tpu.memory_space<vmem>>, vector<1x1x4x512xf32>
    %160 = vector.shape_cast %159 : vector<1x1x4x512xf32> to vector<4x512xf32>
    %161 = tpu.concatenate %158, %160 in 0 : vector<4x512xf32>, vector<4x512xf32> -> vector<8x512xf32>
    %c32_153 = arith.constant 32 : index
    %c0_154 = arith.constant 0 : index
    %162 = vector.load %arg5[%c32_153, %c0_154] : memref<128x512xf32, #tpu.memory_space<vmem>>, vector<8x512xf32>
    tpu.vector_store %arg5[%c32_153, %c0_154], %161 {strides = array<i32>} : memref<128x512xf32, #tpu.memory_space<vmem>>, vector<8x512xf32>,
    %c511_i32_155 = arith.constant 511 : i32
    %163 = tpu.dynamic_rotate %160 by %c511_i32_155 dim 1 : vector<4x512xf32>, i32 -> vector<4x512xf32>
    %c510_i32_156 = arith.constant 510 : i32
    %164 = tpu.dynamic_rotate %160 by %c510_i32_156 dim 1 : vector<4x512xf32>, i32 -> vector<4x512xf32>
    %165 = tpu.concatenate %163, %164 in 0 : vector<4x512xf32>, vector<4x512xf32> -> vector<8x512xf32>
    %c40_157 = arith.constant 40 : index
    %c0_158 = arith.constant 0 : index
    %166 = vector.load %arg5[%c40_157, %c0_158] : memref<128x512xf32, #tpu.memory_space<vmem>>, vector<8x512xf32>
    tpu.vector_store %arg5[%c40_157, %c0_158], %165 {strides = array<i32>} : memref<128x512xf32, #tpu.memory_space<vmem>>, vector<8x512xf32>,
    %c502_i32_159 = arith.constant 502 : i32
    %167 = tpu.dynamic_rotate %160 by %c502_i32_159 dim 1 : vector<4x512xf32>, i32 -> vector<4x512xf32>
    %c501_i32_160 = arith.constant 501 : i32
    %168 = tpu.dynamic_rotate %160 by %c501_i32_160 dim 1 : vector<4x512xf32>, i32 -> vector<4x512xf32>
    %169 = tpu.concatenate %167, %168 in 0 : vector<4x512xf32>, vector<4x512xf32> -> vector<8x512xf32>
    %c48_161 = arith.constant 48 : index
    %c0_162 = arith.constant 0 : index
    %170 = vector.load %arg5[%c48_161, %c0_162] : memref<128x512xf32, #tpu.memory_space<vmem>>, vector<8x512xf32>
    tpu.vector_store %arg5[%c48_161, %c0_162], %169 {strides = array<i32>} : memref<128x512xf32, #tpu.memory_space<vmem>>, vector<8x512xf32>,
    %c500_i32_163 = arith.constant 500 : i32
    %171 = tpu.dynamic_rotate %160 by %c500_i32_163 dim 1 : vector<4x512xf32>, i32 -> vector<4x512xf32>
    %c492_i32_164 = arith.constant 492 : i32
    %172 = tpu.dynamic_rotate %160 by %c492_i32_164 dim 1 : vector<4x512xf32>, i32 -> vector<4x512xf32>
    %173 = tpu.concatenate %171, %172 in 0 : vector<4x512xf32>, vector<4x512xf32> -> vector<8x512xf32>
    %c56_165 = arith.constant 56 : index
    %c0_166 = arith.constant 0 : index
    %174 = vector.load %arg5[%c56_165, %c0_166] : memref<128x512xf32, #tpu.memory_space<vmem>>, vector<8x512xf32>
    tpu.vector_store %arg5[%c56_165, %c0_166], %173 {strides = array<i32>} : memref<128x512xf32, #tpu.memory_space<vmem>>, vector<8x512xf32>,
    %c491_i32_167 = arith.constant 491 : i32
    %175 = tpu.dynamic_rotate %160 by %c491_i32_167 dim 1 : vector<4x512xf32>, i32 -> vector<4x512xf32>
    %c490_i32_168 = arith.constant 490 : i32
    %176 = tpu.dynamic_rotate %160 by %c490_i32_168 dim 1 : vector<4x512xf32>, i32 -> vector<4x512xf32>
    %177 = tpu.concatenate %175, %176 in 0 : vector<4x512xf32>, vector<4x512xf32> -> vector<8x512xf32>
    %c64_169 = arith.constant 64 : index
    %c0_170 = arith.constant 0 : index
    %178 = vector.load %arg5[%c64_169, %c0_170] : memref<128x512xf32, #tpu.memory_space<vmem>>, vector<8x512xf32>
    tpu.vector_store %arg5[%c64_169, %c0_170], %177 {strides = array<i32>} : memref<128x512xf32, #tpu.memory_space<vmem>>, vector<8x512xf32>,
    %c0_171 = arith.constant 0 : index
    %c2_172 = arith.constant 2 : index
    %c0_173 = arith.constant 0 : index
    %c200_174 = arith.constant 200 : index
    %179 = vector.load %arg1[%c0_171, %c2_172, %c0_173, %c200_174] : memref<1x5x4x768xf32, #tpu.memory_space<vmem>>, vector<1x1x4x512xf32>
    %180 = vector.shape_cast %179 : vector<1x1x4x512xf32> to vector<4x512xf32>
    %c511_i32_175 = arith.constant 511 : i32
    %181 = tpu.dynamic_rotate %180 by %c511_i32_175 dim 1 : vector<4x512xf32>, i32 -> vector<4x512xf32>
    %182 = tpu.concatenate %180, %181 in 0 : vector<4x512xf32>, vector<4x512xf32> -> vector<8x512xf32>
    %c72_176 = arith.constant 72 : index
    %c0_177 = arith.constant 0 : index
    %183 = vector.load %arg5[%c72_176, %c0_177] : memref<128x512xf32, #tpu.memory_space<vmem>>, vector<8x512xf32>
    tpu.vector_store %arg5[%c72_176, %c0_177], %182 {strides = array<i32>} : memref<128x512xf32, #tpu.memory_space<vmem>>, vector<8x512xf32>,
    %c510_i32_178 = arith.constant 510 : i32
    %184 = tpu.dynamic_rotate %180 by %c510_i32_178 dim 1 : vector<4x512xf32>, i32 -> vector<4x512xf32>
    %c502_i32_179 = arith.constant 502 : i32
    %185 = tpu.dynamic_rotate %180 by %c502_i32_179 dim 1 : vector<4x512xf32>, i32 -> vector<4x512xf32>
    %186 = tpu.concatenate %184, %185 in 0 : vector<4x512xf32>, vector<4x512xf32> -> vector<8x512xf32>
    %c80_180 = arith.constant 80 : index
    %c0_181 = arith.constant 0 : index
    %187 = vector.load %arg5[%c80_180, %c0_181] : memref<128x512xf32, #tpu.memory_space<vmem>>, vector<8x512xf32>
    tpu.vector_store %arg5[%c80_180, %c0_181], %186 {strides = array<i32>} : memref<128x512xf32, #tpu.memory_space<vmem>>, vector<8x512xf32>,
    %c501_i32_182 = arith.constant 501 : i32
    %188 = tpu.dynamic_rotate %180 by %c501_i32_182 dim 1 : vector<4x512xf32>, i32 -> vector<4x512xf32>
    %c500_i32_183 = arith.constant 500 : i32
    %189 = tpu.dynamic_rotate %180 by %c500_i32_183 dim 1 : vector<4x512xf32>, i32 -> vector<4x512xf32>
    %190 = tpu.concatenate %188, %189 in 0 : vector<4x512xf32>, vector<4x512xf32> -> vector<8x512xf32>
    %c88_184 = arith.constant 88 : index
    %c0_185 = arith.constant 0 : index
    %191 = vector.load %arg5[%c88_184, %c0_185] : memref<128x512xf32, #tpu.memory_space<vmem>>, vector<8x512xf32>
    tpu.vector_store %arg5[%c88_184, %c0_185], %190 {strides = array<i32>} : memref<128x512xf32, #tpu.memory_space<vmem>>, vector<8x512xf32>,
    %c492_i32_186 = arith.constant 492 : i32
    %192 = tpu.dynamic_rotate %180 by %c492_i32_186 dim 1 : vector<4x512xf32>, i32 -> vector<4x512xf32>
    %c491_i32_187 = arith.constant 491 : i32
    %193 = tpu.dynamic_rotate %180 by %c491_i32_187 dim 1 : vector<4x512xf32>, i32 -> vector<4x512xf32>
    %194 = tpu.concatenate %192, %193 in 0 : vector<4x512xf32>, vector<4x512xf32> -> vector<8x512xf32>
    %c96_188 = arith.constant 96 : index
    %c0_189 = arith.constant 0 : index
    %195 = vector.load %arg5[%c96_188, %c0_189] : memref<128x512xf32, #tpu.memory_space<vmem>>, vector<8x512xf32>
    tpu.vector_store %arg5[%c96_188, %c0_189], %194 {strides = array<i32>} : memref<128x512xf32, #tpu.memory_space<vmem>>, vector<8x512xf32>,
    %c490_i32_190 = arith.constant 490 : i32
    %196 = tpu.dynamic_rotate %180 by %c490_i32_190 dim 1 : vector<4x512xf32>, i32 -> vector<4x512xf32>
    %c104_191 = arith.constant 104 : index
    %c0_192 = arith.constant 0 : index
    %197 = vector.load %arg5[%c104_191, %c0_192] : memref<128x512xf32, #tpu.memory_space<vmem>>, vector<4x512xf32>
    tpu.vector_store %arg5[%c104_191, %c0_192], %196 {strides = array<i32>} : memref<128x512xf32, #tpu.memory_space<vmem>>, vector<4x512xf32>,
    %c0_193 = arith.constant 0 : index
    %c0_194 = arith.constant 0 : index
    %198 = vector.load %arg5[%c0_193, %c0_194] : memref<128x512xf32, #tpu.memory_space<vmem>>, vector<128x512xf32>
    %cst_195 = arith.constant dense<0.000000e+00> : vector<24x512xf32>
    %199 = tpu.matmul %2, %198, %cst_195 {dimension_numbers = #tpu.dot_dimension_numbers<[1], [0], [0], [1], [0, 0, 1, 1], [], []>} : vector<24x128xf32>, vector<128x512xf32>, vector<24x512xf32> -> vector<24x512xf32>
    %200 = vector.extract_strided_slice %199 {offsets = [0, 0], sizes = [8, 512], strides = [1, 1]} : vector<24x512xf32> to vector<8x512xf32>
    %201 = vector.broadcast %3 : vector<8x1xf32> to vector<8x512xf32>
    %202 = arith.addf %200, %201 : vector<8x512xf32>
    %c0_196 = arith.constant 0 : index
    %c2_197 = arith.constant 2 : index
    %c0_198 = arith.constant 0 : index
    %c0_199 = arith.constant 0 : index
    %203 = vector.load %arg4[%c0_196, %c2_197, %c0_198, %c0_199] : memref<1x3x8x512xf32, #tpu.memory_space<vmem>>, vector<1x1x8x512xf32>
    %204 = vector.shape_cast %203 : vector<1x1x8x512xf32> to vector<8x512xf32>
    %205 = vector.shape_cast %202 : vector<8x512xf32> to vector<1x1x8x512xf32>
    tpu.vector_store %arg4[%c0_196, %c2_197, %c0_198, %c0_199], %205 {strides = array<i32>} : memref<1x3x8x512xf32, #tpu.memory_space<vmem>>, vector<1x1x8x512xf32>,
    %206 = vector.extract_strided_slice %199 {offsets = [8, 0], sizes = [8, 512], strides = [1, 1]} : vector<24x512xf32> to vector<8x512xf32>
    %c0_200 = arith.constant 0 : index
    %c1_201 = arith.constant 1 : index
    %c0_202 = arith.constant 0 : index
    %c0_203 = arith.constant 0 : index
    %207 = vector.load %arg4[%c0_200, %c1_201, %c0_202, %c0_203] : memref<1x3x8x512xf32, #tpu.memory_space<vmem>>, vector<1x1x8x512xf32>
    %208 = vector.shape_cast %207 : vector<1x1x8x512xf32> to vector<8x512xf32>
    %209 = arith.addf %208, %206 : vector<8x512xf32>
    %c0_204 = arith.constant 0 : index
    %c1_205 = arith.constant 1 : index
    %c0_206 = arith.constant 0 : index
    %c0_207 = arith.constant 0 : index
    %210 = vector.load %arg4[%c0_204, %c1_205, %c0_206, %c0_207] : memref<1x3x8x512xf32, #tpu.memory_space<vmem>>, vector<1x1x8x512xf32>
    %211 = vector.shape_cast %210 : vector<1x1x8x512xf32> to vector<8x512xf32>
    %212 = vector.shape_cast %209 : vector<8x512xf32> to vector<1x1x8x512xf32>
    tpu.vector_store %arg4[%c0_204, %c1_205, %c0_206, %c0_207], %212 {strides = array<i32>} : memref<1x3x8x512xf32, #tpu.memory_space<vmem>>, vector<1x1x8x512xf32>,
    %213 = vector.extract_strided_slice %199 {offsets = [16, 0], sizes = [8, 512], strides = [1, 1]} : vector<24x512xf32> to vector<8x512xf32>
    %c0_208 = arith.constant 0 : index
    %c0_209 = arith.constant 0 : index
    %c0_210 = arith.constant 0 : index
    %c0_211 = arith.constant 0 : index
    %214 = vector.load %arg4[%c0_208, %c0_209, %c0_210, %c0_211] : memref<1x3x8x512xf32, #tpu.memory_space<vmem>>, vector<1x1x8x512xf32>
    %215 = vector.shape_cast %214 : vector<1x1x8x512xf32> to vector<8x512xf32>
    %216 = arith.addf %215, %213 : vector<8x512xf32>
    %c0_212 = arith.constant 0 : index
    %c0_213 = arith.constant 0 : index
    %c0_214 = arith.constant 0 : index
    %c0_215 = arith.constant 0 : index
    %217 = vector.load %arg4[%c0_212, %c0_213, %c0_214, %c0_215] : memref<1x3x8x512xf32, #tpu.memory_space<vmem>>, vector<1x1x8x512xf32>
    %218 = vector.shape_cast %217 : vector<1x1x8x512xf32> to vector<8x512xf32>
    %219 = vector.shape_cast %216 : vector<8x512xf32> to vector<1x1x8x512xf32>
    tpu.vector_store %arg4[%c0_212, %c0_213, %c0_214, %c0_215], %219 {strides = array<i32>} : memref<1x3x8x512xf32, #tpu.memory_space<vmem>>, vector<1x1x8x512xf32>,
    %c0_216 = arith.constant 0 : index
    %c3 = arith.constant 3 : index
    %c0_217 = arith.constant 0 : index
    %c0_218 = arith.constant 0 : index
    %220 = vector.load %arg1[%c0_216, %c3, %c0_217, %c0_218] : memref<1x5x4x768xf32, #tpu.memory_space<vmem>>, vector<1x1x4x512xf32>
    %221 = vector.shape_cast %220 : vector<1x1x4x512xf32> to vector<4x512xf32>
    %c511_i32_219 = arith.constant 511 : i32
    %222 = tpu.dynamic_rotate %221 by %c511_i32_219 dim 1 : vector<4x512xf32>, i32 -> vector<4x512xf32>
    %223 = tpu.concatenate %221, %222 in 0 : vector<4x512xf32>, vector<4x512xf32> -> vector<8x512xf32>
    %c0_220 = arith.constant 0 : index
    %c0_221 = arith.constant 0 : index
    %224 = vector.load %arg5[%c0_220, %c0_221] : memref<128x512xf32, #tpu.memory_space<vmem>>, vector<8x512xf32>
    tpu.vector_store %arg5[%c0_220, %c0_221], %223 {strides = array<i32>} : memref<128x512xf32, #tpu.memory_space<vmem>>, vector<8x512xf32>,
    %c510_i32_222 = arith.constant 510 : i32
    %225 = tpu.dynamic_rotate %221 by %c510_i32_222 dim 1 : vector<4x512xf32>, i32 -> vector<4x512xf32>
    %c502_i32_223 = arith.constant 502 : i32
    %226 = tpu.dynamic_rotate %221 by %c502_i32_223 dim 1 : vector<4x512xf32>, i32 -> vector<4x512xf32>
    %227 = tpu.concatenate %225, %226 in 0 : vector<4x512xf32>, vector<4x512xf32> -> vector<8x512xf32>
    %c8_224 = arith.constant 8 : index
    %c0_225 = arith.constant 0 : index
    %228 = vector.load %arg5[%c8_224, %c0_225] : memref<128x512xf32, #tpu.memory_space<vmem>>, vector<8x512xf32>
    tpu.vector_store %arg5[%c8_224, %c0_225], %227 {strides = array<i32>} : memref<128x512xf32, #tpu.memory_space<vmem>>, vector<8x512xf32>,
    %c501_i32_226 = arith.constant 501 : i32
    %229 = tpu.dynamic_rotate %221 by %c501_i32_226 dim 1 : vector<4x512xf32>, i32 -> vector<4x512xf32>
    %c500_i32_227 = arith.constant 500 : i32
    %230 = tpu.dynamic_rotate %221 by %c500_i32_227 dim 1 : vector<4x512xf32>, i32 -> vector<4x512xf32>
    %231 = tpu.concatenate %229, %230 in 0 : vector<4x512xf32>, vector<4x512xf32> -> vector<8x512xf32>
    %c16_228 = arith.constant 16 : index
    %c0_229 = arith.constant 0 : index
    %232 = vector.load %arg5[%c16_228, %c0_229] : memref<128x512xf32, #tpu.memory_space<vmem>>, vector<8x512xf32>
    tpu.vector_store %arg5[%c16_228, %c0_229], %231 {strides = array<i32>} : memref<128x512xf32, #tpu.memory_space<vmem>>, vector<8x512xf32>,
    %c492_i32_230 = arith.constant 492 : i32
    %233 = tpu.dynamic_rotate %221 by %c492_i32_230 dim 1 : vector<4x512xf32>, i32 -> vector<4x512xf32>
    %c491_i32_231 = arith.constant 491 : i32
    %234 = tpu.dynamic_rotate %221 by %c491_i32_231 dim 1 : vector<4x512xf32>, i32 -> vector<4x512xf32>
    %235 = tpu.concatenate %233, %234 in 0 : vector<4x512xf32>, vector<4x512xf32> -> vector<8x512xf32>
    %c24_232 = arith.constant 24 : index
    %c0_233 = arith.constant 0 : index
    %236 = vector.load %arg5[%c24_232, %c0_233] : memref<128x512xf32, #tpu.memory_space<vmem>>, vector<8x512xf32>
    tpu.vector_store %arg5[%c24_232, %c0_233], %235 {strides = array<i32>} : memref<128x512xf32, #tpu.memory_space<vmem>>, vector<8x512xf32>,
    %c490_i32_234 = arith.constant 490 : i32
    %237 = tpu.dynamic_rotate %221 by %c490_i32_234 dim 1 : vector<4x512xf32>, i32 -> vector<4x512xf32>
    %c0_235 = arith.constant 0 : index
    %c3_236 = arith.constant 3 : index
    %c0_237 = arith.constant 0 : index
    %c100_238 = arith.constant 100 : index
    %238 = vector.load %arg1[%c0_235, %c3_236, %c0_237, %c100_238] : memref<1x5x4x768xf32, #tpu.memory_space<vmem>>, vector<1x1x4x512xf32>
    %239 = vector.shape_cast %238 : vector<1x1x4x512xf32> to vector<4x512xf32>
    %240 = tpu.concatenate %237, %239 in 0 : vector<4x512xf32>, vector<4x512xf32> -> vector<8x512xf32>
    %c32_239 = arith.constant 32 : index
    %c0_240 = arith.constant 0 : index
    %241 = vector.load %arg5[%c32_239, %c0_240] : memref<128x512xf32, #tpu.memory_space<vmem>>, vector<8x512xf32>
    tpu.vector_store %arg5[%c32_239, %c0_240], %240 {strides = array<i32>} : memref<128x512xf32, #tpu.memory_space<vmem>>, vector<8x512xf32>,
    %c511_i32_241 = arith.constant 511 : i32
    %242 = tpu.dynamic_rotate %239 by %c511_i32_241 dim 1 : vector<4x512xf32>, i32 -> vector<4x512xf32>
    %c510_i32_242 = arith.constant 510 : i32
    %243 = tpu.dynamic_rotate %239 by %c510_i32_242 dim 1 : vector<4x512xf32>, i32 -> vector<4x512xf32>
    %244 = tpu.concatenate %242, %243 in 0 : vector<4x512xf32>, vector<4x512xf32> -> vector<8x512xf32>
    %c40_243 = arith.constant 40 : index
    %c0_244 = arith.constant 0 : index
    %245 = vector.load %arg5[%c40_243, %c0_244] : memref<128x512xf32, #tpu.memory_space<vmem>>, vector<8x512xf32>
    tpu.vector_store %arg5[%c40_243, %c0_244], %244 {strides = array<i32>} : memref<128x512xf32, #tpu.memory_space<vmem>>, vector<8x512xf32>,
    %c502_i32_245 = arith.constant 502 : i32
    %246 = tpu.dynamic_rotate %239 by %c502_i32_245 dim 1 : vector<4x512xf32>, i32 -> vector<4x512xf32>
    %c501_i32_246 = arith.constant 501 : i32
    %247 = tpu.dynamic_rotate %239 by %c501_i32_246 dim 1 : vector<4x512xf32>, i32 -> vector<4x512xf32>
    %248 = tpu.concatenate %246, %247 in 0 : vector<4x512xf32>, vector<4x512xf32> -> vector<8x512xf32>
    %c48_247 = arith.constant 48 : index
    %c0_248 = arith.constant 0 : index
    %249 = vector.load %arg5[%c48_247, %c0_248] : memref<128x512xf32, #tpu.memory_space<vmem>>, vector<8x512xf32>
    tpu.vector_store %arg5[%c48_247, %c0_248], %248 {strides = array<i32>} : memref<128x512xf32, #tpu.memory_space<vmem>>, vector<8x512xf32>,
    %c500_i32_249 = arith.constant 500 : i32
    %250 = tpu.dynamic_rotate %239 by %c500_i32_249 dim 1 : vector<4x512xf32>, i32 -> vector<4x512xf32>
    %c492_i32_250 = arith.constant 492 : i32
    %251 = tpu.dynamic_rotate %239 by %c492_i32_250 dim 1 : vector<4x512xf32>, i32 -> vector<4x512xf32>
    %252 = tpu.concatenate %250, %251 in 0 : vector<4x512xf32>, vector<4x512xf32> -> vector<8x512xf32>
    %c56_251 = arith.constant 56 : index
    %c0_252 = arith.constant 0 : index
    %253 = vector.load %arg5[%c56_251, %c0_252] : memref<128x512xf32, #tpu.memory_space<vmem>>, vector<8x512xf32>
    tpu.vector_store %arg5[%c56_251, %c0_252], %252 {strides = array<i32>} : memref<128x512xf32, #tpu.memory_space<vmem>>, vector<8x512xf32>,
    %c491_i32_253 = arith.constant 491 : i32
    %254 = tpu.dynamic_rotate %239 by %c491_i32_253 dim 1 : vector<4x512xf32>, i32 -> vector<4x512xf32>
    %c490_i32_254 = arith.constant 490 : i32
    %255 = tpu.dynamic_rotate %239 by %c490_i32_254 dim 1 : vector<4x512xf32>, i32 -> vector<4x512xf32>
    %256 = tpu.concatenate %254, %255 in 0 : vector<4x512xf32>, vector<4x512xf32> -> vector<8x512xf32>
    %c64_255 = arith.constant 64 : index
    %c0_256 = arith.constant 0 : index
    %257 = vector.load %arg5[%c64_255, %c0_256] : memref<128x512xf32, #tpu.memory_space<vmem>>, vector<8x512xf32>
    tpu.vector_store %arg5[%c64_255, %c0_256], %256 {strides = array<i32>} : memref<128x512xf32, #tpu.memory_space<vmem>>, vector<8x512xf32>,
    %c0_257 = arith.constant 0 : index
    %c3_258 = arith.constant 3 : index
    %c0_259 = arith.constant 0 : index
    %c200_260 = arith.constant 200 : index
    %258 = vector.load %arg1[%c0_257, %c3_258, %c0_259, %c200_260] : memref<1x5x4x768xf32, #tpu.memory_space<vmem>>, vector<1x1x4x512xf32>
    %259 = vector.shape_cast %258 : vector<1x1x4x512xf32> to vector<4x512xf32>
    %c511_i32_261 = arith.constant 511 : i32
    %260 = tpu.dynamic_rotate %259 by %c511_i32_261 dim 1 : vector<4x512xf32>, i32 -> vector<4x512xf32>
    %261 = tpu.concatenate %259, %260 in 0 : vector<4x512xf32>, vector<4x512xf32> -> vector<8x512xf32>
    %c72_262 = arith.constant 72 : index
    %c0_263 = arith.constant 0 : index
    %262 = vector.load %arg5[%c72_262, %c0_263] : memref<128x512xf32, #tpu.memory_space<vmem>>, vector<8x512xf32>
    tpu.vector_store %arg5[%c72_262, %c0_263], %261 {strides = array<i32>} : memref<128x512xf32, #tpu.memory_space<vmem>>, vector<8x512xf32>,
    %c510_i32_264 = arith.constant 510 : i32
    %263 = tpu.dynamic_rotate %259 by %c510_i32_264 dim 1 : vector<4x512xf32>, i32 -> vector<4x512xf32>
    %c502_i32_265 = arith.constant 502 : i32
    %264 = tpu.dynamic_rotate %259 by %c502_i32_265 dim 1 : vector<4x512xf32>, i32 -> vector<4x512xf32>
    %265 = tpu.concatenate %263, %264 in 0 : vector<4x512xf32>, vector<4x512xf32> -> vector<8x512xf32>
    %c80_266 = arith.constant 80 : index
    %c0_267 = arith.constant 0 : index
    %266 = vector.load %arg5[%c80_266, %c0_267] : memref<128x512xf32, #tpu.memory_space<vmem>>, vector<8x512xf32>
    tpu.vector_store %arg5[%c80_266, %c0_267], %265 {strides = array<i32>} : memref<128x512xf32, #tpu.memory_space<vmem>>, vector<8x512xf32>,
    %c501_i32_268 = arith.constant 501 : i32
    %267 = tpu.dynamic_rotate %259 by %c501_i32_268 dim 1 : vector<4x512xf32>, i32 -> vector<4x512xf32>
    %c500_i32_269 = arith.constant 500 : i32
    %268 = tpu.dynamic_rotate %259 by %c500_i32_269 dim 1 : vector<4x512xf32>, i32 -> vector<4x512xf32>
    %269 = tpu.concatenate %267, %268 in 0 : vector<4x512xf32>, vector<4x512xf32> -> vector<8x512xf32>
    %c88_270 = arith.constant 88 : index
    %c0_271 = arith.constant 0 : index
    %270 = vector.load %arg5[%c88_270, %c0_271] : memref<128x512xf32, #tpu.memory_space<vmem>>, vector<8x512xf32>
    tpu.vector_store %arg5[%c88_270, %c0_271], %269 {strides = array<i32>} : memref<128x512xf32, #tpu.memory_space<vmem>>, vector<8x512xf32>,
    %c492_i32_272 = arith.constant 492 : i32
    %271 = tpu.dynamic_rotate %259 by %c492_i32_272 dim 1 : vector<4x512xf32>, i32 -> vector<4x512xf32>
    %c491_i32_273 = arith.constant 491 : i32
    %272 = tpu.dynamic_rotate %259 by %c491_i32_273 dim 1 : vector<4x512xf32>, i32 -> vector<4x512xf32>
    %273 = tpu.concatenate %271, %272 in 0 : vector<4x512xf32>, vector<4x512xf32> -> vector<8x512xf32>
    %c96_274 = arith.constant 96 : index
    %c0_275 = arith.constant 0 : index
    %274 = vector.load %arg5[%c96_274, %c0_275] : memref<128x512xf32, #tpu.memory_space<vmem>>, vector<8x512xf32>
    tpu.vector_store %arg5[%c96_274, %c0_275], %273 {strides = array<i32>} : memref<128x512xf32, #tpu.memory_space<vmem>>, vector<8x512xf32>,
    %c490_i32_276 = arith.constant 490 : i32
    %275 = tpu.dynamic_rotate %259 by %c490_i32_276 dim 1 : vector<4x512xf32>, i32 -> vector<4x512xf32>
    %c104_277 = arith.constant 104 : index
    %c0_278 = arith.constant 0 : index
    %276 = vector.load %arg5[%c104_277, %c0_278] : memref<128x512xf32, #tpu.memory_space<vmem>>, vector<4x512xf32>
    tpu.vector_store %arg5[%c104_277, %c0_278], %275 {strides = array<i32>} : memref<128x512xf32, #tpu.memory_space<vmem>>, vector<4x512xf32>,
    %c0_279 = arith.constant 0 : index
    %c0_280 = arith.constant 0 : index
    %277 = vector.load %arg5[%c0_279, %c0_280] : memref<128x512xf32, #tpu.memory_space<vmem>>, vector<128x512xf32>
    %cst_281 = arith.constant dense<0.000000e+00> : vector<24x512xf32>
    %278 = tpu.matmul %2, %277, %cst_281 {dimension_numbers = #tpu.dot_dimension_numbers<[1], [0], [0], [1], [0, 0, 1, 1], [], []>} : vector<24x128xf32>, vector<128x512xf32>, vector<24x512xf32> -> vector<24x512xf32>
    %279 = vector.extract_strided_slice %278 {offsets = [8, 0], sizes = [8, 512], strides = [1, 1]} : vector<24x512xf32> to vector<8x512xf32>
    %c0_282 = arith.constant 0 : index
    %c2_283 = arith.constant 2 : index
    %c0_284 = arith.constant 0 : index
    %c0_285 = arith.constant 0 : index
    %280 = vector.load %arg4[%c0_282, %c2_283, %c0_284, %c0_285] : memref<1x3x8x512xf32, #tpu.memory_space<vmem>>, vector<1x1x8x512xf32>
    %281 = vector.shape_cast %280 : vector<1x1x8x512xf32> to vector<8x512xf32>
    %282 = arith.addf %281, %279 : vector<8x512xf32>
    %c0_286 = arith.constant 0 : index
    %c2_287 = arith.constant 2 : index
    %c0_288 = arith.constant 0 : index
    %c0_289 = arith.constant 0 : index
    %283 = vector.load %arg4[%c0_286, %c2_287, %c0_288, %c0_289] : memref<1x3x8x512xf32, #tpu.memory_space<vmem>>, vector<1x1x8x512xf32>
    %284 = vector.shape_cast %283 : vector<1x1x8x512xf32> to vector<8x512xf32>
    %285 = vector.shape_cast %282 : vector<8x512xf32> to vector<1x1x8x512xf32>
    tpu.vector_store %arg4[%c0_286, %c2_287, %c0_288, %c0_289], %285 {strides = array<i32>} : memref<1x3x8x512xf32, #tpu.memory_space<vmem>>, vector<1x1x8x512xf32>,
    %286 = vector.extract_strided_slice %278 {offsets = [16, 0], sizes = [8, 512], strides = [1, 1]} : vector<24x512xf32> to vector<8x512xf32>
    %c0_290 = arith.constant 0 : index
    %c1_291 = arith.constant 1 : index
    %c0_292 = arith.constant 0 : index
    %c0_293 = arith.constant 0 : index
    %287 = vector.load %arg4[%c0_290, %c1_291, %c0_292, %c0_293] : memref<1x3x8x512xf32, #tpu.memory_space<vmem>>, vector<1x1x8x512xf32>
    %288 = vector.shape_cast %287 : vector<1x1x8x512xf32> to vector<8x512xf32>
    %289 = arith.addf %288, %286 : vector<8x512xf32>
    %c0_294 = arith.constant 0 : index
    %c1_295 = arith.constant 1 : index
    %c0_296 = arith.constant 0 : index
    %c0_297 = arith.constant 0 : index
    %290 = vector.load %arg4[%c0_294, %c1_295, %c0_296, %c0_297] : memref<1x3x8x512xf32, #tpu.memory_space<vmem>>, vector<1x1x8x512xf32>
    %291 = vector.shape_cast %290 : vector<1x1x8x512xf32> to vector<8x512xf32>
    %292 = vector.shape_cast %289 : vector<8x512xf32> to vector<1x1x8x512xf32>
    tpu.vector_store %arg4[%c0_294, %c1_295, %c0_296, %c0_297], %292 {strides = array<i32>} : memref<1x3x8x512xf32, #tpu.memory_space<vmem>>, vector<1x1x8x512xf32>,
    %c0_298 = arith.constant 0 : index
    %c4 = arith.constant 4 : index
    %c0_299 = arith.constant 0 : index
    %c0_300 = arith.constant 0 : index
    %293 = vector.load %arg1[%c0_298, %c4, %c0_299, %c0_300] : memref<1x5x4x768xf32, #tpu.memory_space<vmem>>, vector<1x1x4x512xf32>
    %294 = vector.shape_cast %293 : vector<1x1x4x512xf32> to vector<4x512xf32>
    %c511_i32_301 = arith.constant 511 : i32
    %295 = tpu.dynamic_rotate %294 by %c511_i32_301 dim 1 : vector<4x512xf32>, i32 -> vector<4x512xf32>
    %296 = tpu.concatenate %294, %295 in 0 : vector<4x512xf32>, vector<4x512xf32> -> vector<8x512xf32>
    %c0_302 = arith.constant 0 : index
    %c0_303 = arith.constant 0 : index
    %297 = vector.load %arg5[%c0_302, %c0_303] : memref<128x512xf32, #tpu.memory_space<vmem>>, vector<8x512xf32>
    tpu.vector_store %arg5[%c0_302, %c0_303], %296 {strides = array<i32>} : memref<128x512xf32, #tpu.memory_space<vmem>>, vector<8x512xf32>,
    %c510_i32_304 = arith.constant 510 : i32
    %298 = tpu.dynamic_rotate %294 by %c510_i32_304 dim 1 : vector<4x512xf32>, i32 -> vector<4x512xf32>
    %c502_i32_305 = arith.constant 502 : i32
    %299 = tpu.dynamic_rotate %294 by %c502_i32_305 dim 1 : vector<4x512xf32>, i32 -> vector<4x512xf32>
    %300 = tpu.concatenate %298, %299 in 0 : vector<4x512xf32>, vector<4x512xf32> -> vector<8x512xf32>
    %c8_306 = arith.constant 8 : index
    %c0_307 = arith.constant 0 : index
    %301 = vector.load %arg5[%c8_306, %c0_307] : memref<128x512xf32, #tpu.memory_space<vmem>>, vector<8x512xf32>
    tpu.vector_store %arg5[%c8_306, %c0_307], %300 {strides = array<i32>} : memref<128x512xf32, #tpu.memory_space<vmem>>, vector<8x512xf32>,
    %c501_i32_308 = arith.constant 501 : i32
    %302 = tpu.dynamic_rotate %294 by %c501_i32_308 dim 1 : vector<4x512xf32>, i32 -> vector<4x512xf32>
    %c500_i32_309 = arith.constant 500 : i32
    %303 = tpu.dynamic_rotate %294 by %c500_i32_309 dim 1 : vector<4x512xf32>, i32 -> vector<4x512xf32>
    %304 = tpu.concatenate %302, %303 in 0 : vector<4x512xf32>, vector<4x512xf32> -> vector<8x512xf32>
    %c16_310 = arith.constant 16 : index
    %c0_311 = arith.constant 0 : index
    %305 = vector.load %arg5[%c16_310, %c0_311] : memref<128x512xf32, #tpu.memory_space<vmem>>, vector<8x512xf32>
    tpu.vector_store %arg5[%c16_310, %c0_311], %304 {strides = array<i32>} : memref<128x512xf32, #tpu.memory_space<vmem>>, vector<8x512xf32>,
    %c492_i32_312 = arith.constant 492 : i32
    %306 = tpu.dynamic_rotate %294 by %c492_i32_312 dim 1 : vector<4x512xf32>, i32 -> vector<4x512xf32>
    %c491_i32_313 = arith.constant 491 : i32
    %307 = tpu.dynamic_rotate %294 by %c491_i32_313 dim 1 : vector<4x512xf32>, i32 -> vector<4x512xf32>
    %308 = tpu.concatenate %306, %307 in 0 : vector<4x512xf32>, vector<4x512xf32> -> vector<8x512xf32>
    %c24_314 = arith.constant 24 : index
    %c0_315 = arith.constant 0 : index
    %309 = vector.load %arg5[%c24_314, %c0_315] : memref<128x512xf32, #tpu.memory_space<vmem>>, vector<8x512xf32>
    tpu.vector_store %arg5[%c24_314, %c0_315], %308 {strides = array<i32>} : memref<128x512xf32, #tpu.memory_space<vmem>>, vector<8x512xf32>,
    %c490_i32_316 = arith.constant 490 : i32
    %310 = tpu.dynamic_rotate %294 by %c490_i32_316 dim 1 : vector<4x512xf32>, i32 -> vector<4x512xf32>
    %c0_317 = arith.constant 0 : index
    %c4_318 = arith.constant 4 : index
    %c0_319 = arith.constant 0 : index
    %c100_320 = arith.constant 100 : index
    %311 = vector.load %arg1[%c0_317, %c4_318, %c0_319, %c100_320] : memref<1x5x4x768xf32, #tpu.memory_space<vmem>>, vector<1x1x4x512xf32>
    %312 = vector.shape_cast %311 : vector<1x1x4x512xf32> to vector<4x512xf32>
    %313 = tpu.concatenate %310, %312 in 0 : vector<4x512xf32>, vector<4x512xf32> -> vector<8x512xf32>
    %c32_321 = arith.constant 32 : index
    %c0_322 = arith.constant 0 : index
    %314 = vector.load %arg5[%c32_321, %c0_322] : memref<128x512xf32, #tpu.memory_space<vmem>>, vector<8x512xf32>
    tpu.vector_store %arg5[%c32_321, %c0_322], %313 {strides = array<i32>} : memref<128x512xf32, #tpu.memory_space<vmem>>, vector<8x512xf32>,
    %c511_i32_323 = arith.constant 511 : i32
    %315 = tpu.dynamic_rotate %312 by %c511_i32_323 dim 1 : vector<4x512xf32>, i32 -> vector<4x512xf32>
    %c510_i32_324 = arith.constant 510 : i32
    %316 = tpu.dynamic_rotate %312 by %c510_i32_324 dim 1 : vector<4x512xf32>, i32 -> vector<4x512xf32>
    %317 = tpu.concatenate %315, %316 in 0 : vector<4x512xf32>, vector<4x512xf32> -> vector<8x512xf32>
    %c40_325 = arith.constant 40 : index
    %c0_326 = arith.constant 0 : index
    %318 = vector.load %arg5[%c40_325, %c0_326] : memref<128x512xf32, #tpu.memory_space<vmem>>, vector<8x512xf32>
    tpu.vector_store %arg5[%c40_325, %c0_326], %317 {strides = array<i32>} : memref<128x512xf32, #tpu.memory_space<vmem>>, vector<8x512xf32>,
    %c502_i32_327 = arith.constant 502 : i32
    %319 = tpu.dynamic_rotate %312 by %c502_i32_327 dim 1 : vector<4x512xf32>, i32 -> vector<4x512xf32>
    %c501_i32_328 = arith.constant 501 : i32
    %320 = tpu.dynamic_rotate %312 by %c501_i32_328 dim 1 : vector<4x512xf32>, i32 -> vector<4x512xf32>
    %321 = tpu.concatenate %319, %320 in 0 : vector<4x512xf32>, vector<4x512xf32> -> vector<8x512xf32>
    %c48_329 = arith.constant 48 : index
    %c0_330 = arith.constant 0 : index
    %322 = vector.load %arg5[%c48_329, %c0_330] : memref<128x512xf32, #tpu.memory_space<vmem>>, vector<8x512xf32>
    tpu.vector_store %arg5[%c48_329, %c0_330], %321 {strides = array<i32>} : memref<128x512xf32, #tpu.memory_space<vmem>>, vector<8x512xf32>,
    %c500_i32_331 = arith.constant 500 : i32
    %323 = tpu.dynamic_rotate %312 by %c500_i32_331 dim 1 : vector<4x512xf32>, i32 -> vector<4x512xf32>
    %c492_i32_332 = arith.constant 492 : i32
    %324 = tpu.dynamic_rotate %312 by %c492_i32_332 dim 1 : vector<4x512xf32>, i32 -> vector<4x512xf32>
    %325 = tpu.concatenate %323, %324 in 0 : vector<4x512xf32>, vector<4x512xf32> -> vector<8x512xf32>
    %c56_333 = arith.constant 56 : index
    %c0_334 = arith.constant 0 : index
    %326 = vector.load %arg5[%c56_333, %c0_334] : memref<128x512xf32, #tpu.memory_space<vmem>>, vector<8x512xf32>
    tpu.vector_store %arg5[%c56_333, %c0_334], %325 {strides = array<i32>} : memref<128x512xf32, #tpu.memory_space<vmem>>, vector<8x512xf32>,
    %c491_i32_335 = arith.constant 491 : i32
    %327 = tpu.dynamic_rotate %312 by %c491_i32_335 dim 1 : vector<4x512xf32>, i32 -> vector<4x512xf32>
    %c490_i32_336 = arith.constant 490 : i32
    %328 = tpu.dynamic_rotate %312 by %c490_i32_336 dim 1 : vector<4x512xf32>, i32 -> vector<4x512xf32>
    %329 = tpu.concatenate %327, %328 in 0 : vector<4x512xf32>, vector<4x512xf32> -> vector<8x512xf32>
    %c64_337 = arith.constant 64 : index
    %c0_338 = arith.constant 0 : index
    %330 = vector.load %arg5[%c64_337, %c0_338] : memref<128x512xf32, #tpu.memory_space<vmem>>, vector<8x512xf32>
    tpu.vector_store %arg5[%c64_337, %c0_338], %329 {strides = array<i32>} : memref<128x512xf32, #tpu.memory_space<vmem>>, vector<8x512xf32>,
    %c0_339 = arith.constant 0 : index
    %c4_340 = arith.constant 4 : index
    %c0_341 = arith.constant 0 : index
    %c200_342 = arith.constant 200 : index
    %331 = vector.load %arg1[%c0_339, %c4_340, %c0_341, %c200_342] : memref<1x5x4x768xf32, #tpu.memory_space<vmem>>, vector<1x1x4x512xf32>
    %332 = vector.shape_cast %331 : vector<1x1x4x512xf32> to vector<4x512xf32>
    %c511_i32_343 = arith.constant 511 : i32
    %333 = tpu.dynamic_rotate %332 by %c511_i32_343 dim 1 : vector<4x512xf32>, i32 -> vector<4x512xf32>
    %334 = tpu.concatenate %332, %333 in 0 : vector<4x512xf32>, vector<4x512xf32> -> vector<8x512xf32>
    %c72_344 = arith.constant 72 : index
    %c0_345 = arith.constant 0 : index
    %335 = vector.load %arg5[%c72_344, %c0_345] : memref<128x512xf32, #tpu.memory_space<vmem>>, vector<8x512xf32>
    tpu.vector_store %arg5[%c72_344, %c0_345], %334 {strides = array<i32>} : memref<128x512xf32, #tpu.memory_space<vmem>>, vector<8x512xf32>,
    %c510_i32_346 = arith.constant 510 : i32
    %336 = tpu.dynamic_rotate %332 by %c510_i32_346 dim 1 : vector<4x512xf32>, i32 -> vector<4x512xf32>
    %c502_i32_347 = arith.constant 502 : i32
    %337 = tpu.dynamic_rotate %332 by %c502_i32_347 dim 1 : vector<4x512xf32>, i32 -> vector<4x512xf32>
    %338 = tpu.concatenate %336, %337 in 0 : vector<4x512xf32>, vector<4x512xf32> -> vector<8x512xf32>
    %c80_348 = arith.constant 80 : index
    %c0_349 = arith.constant 0 : index
    %339 = vector.load %arg5[%c80_348, %c0_349] : memref<128x512xf32, #tpu.memory_space<vmem>>, vector<8x512xf32>
    tpu.vector_store %arg5[%c80_348, %c0_349], %338 {strides = array<i32>} : memref<128x512xf32, #tpu.memory_space<vmem>>, vector<8x512xf32>,
    %c501_i32_350 = arith.constant 501 : i32
    %340 = tpu.dynamic_rotate %332 by %c501_i32_350 dim 1 : vector<4x512xf32>, i32 -> vector<4x512xf32>
    %c500_i32_351 = arith.constant 500 : i32
    %341 = tpu.dynamic_rotate %332 by %c500_i32_351 dim 1 : vector<4x512xf32>, i32 -> vector<4x512xf32>
    %342 = tpu.concatenate %340, %341 in 0 : vector<4x512xf32>, vector<4x512xf32> -> vector<8x512xf32>
    %c88_352 = arith.constant 88 : index
    %c0_353 = arith.constant 0 : index
    %343 = vector.load %arg5[%c88_352, %c0_353] : memref<128x512xf32, #tpu.memory_space<vmem>>, vector<8x512xf32>
    tpu.vector_store %arg5[%c88_352, %c0_353], %342 {strides = array<i32>} : memref<128x512xf32, #tpu.memory_space<vmem>>, vector<8x512xf32>,
    %c492_i32_354 = arith.constant 492 : i32
    %344 = tpu.dynamic_rotate %332 by %c492_i32_354 dim 1 : vector<4x512xf32>, i32 -> vector<4x512xf32>
    %c491_i32_355 = arith.constant 491 : i32
    %345 = tpu.dynamic_rotate %332 by %c491_i32_355 dim 1 : vector<4x512xf32>, i32 -> vector<4x512xf32>
    %346 = tpu.concatenate %344, %345 in 0 : vector<4x512xf32>, vector<4x512xf32> -> vector<8x512xf32>
    %c96_356 = arith.constant 96 : index
    %c0_357 = arith.constant 0 : index
    %347 = vector.load %arg5[%c96_356, %c0_357] : memref<128x512xf32, #tpu.memory_space<vmem>>, vector<8x512xf32>
    tpu.vector_store %arg5[%c96_356, %c0_357], %346 {strides = array<i32>} : memref<128x512xf32, #tpu.memory_space<vmem>>, vector<8x512xf32>,
    %c490_i32_358 = arith.constant 490 : i32
    %348 = tpu.dynamic_rotate %332 by %c490_i32_358 dim 1 : vector<4x512xf32>, i32 -> vector<4x512xf32>
    %c104_359 = arith.constant 104 : index
    %c0_360 = arith.constant 0 : index
    %349 = vector.load %arg5[%c104_359, %c0_360] : memref<128x512xf32, #tpu.memory_space<vmem>>, vector<4x512xf32>
    tpu.vector_store %arg5[%c104_359, %c0_360], %348 {strides = array<i32>} : memref<128x512xf32, #tpu.memory_space<vmem>>, vector<4x512xf32>,
    %c0_361 = arith.constant 0 : index
    %c0_362 = arith.constant 0 : index
    %350 = vector.load %arg5[%c0_361, %c0_362] : memref<128x512xf32, #tpu.memory_space<vmem>>, vector<128x512xf32>
    %cst_363 = arith.constant dense<0.000000e+00> : vector<24x512xf32>
    %351 = tpu.matmul %2, %350, %cst_363 {dimension_numbers = #tpu.dot_dimension_numbers<[1], [0], [0], [1], [0, 0, 1, 1], [], []>} : vector<24x128xf32>, vector<128x512xf32>, vector<24x512xf32> -> vector<24x512xf32>
    %352 = vector.extract_strided_slice %351 {offsets = [16, 0], sizes = [8, 512], strides = [1, 1]} : vector<24x512xf32> to vector<8x512xf32>
    %c0_364 = arith.constant 0 : index
    %c2_365 = arith.constant 2 : index
    %c0_366 = arith.constant 0 : index
    %c0_367 = arith.constant 0 : index
    %353 = vector.load %arg4[%c0_364, %c2_365, %c0_366, %c0_367] : memref<1x3x8x512xf32, #tpu.memory_space<vmem>>, vector<1x1x8x512xf32>
    %354 = vector.shape_cast %353 : vector<1x1x8x512xf32> to vector<8x512xf32>
    %355 = arith.addf %354, %352 : vector<8x512xf32>
    %c0_368 = arith.constant 0 : index
    %c2_369 = arith.constant 2 : index
    %c0_370 = arith.constant 0 : index
    %c0_371 = arith.constant 0 : index
    %356 = vector.load %arg4[%c0_368, %c2_369, %c0_370, %c0_371] : memref<1x3x8x512xf32, #tpu.memory_space<vmem>>, vector<1x1x8x512xf32>
    %357 = vector.shape_cast %356 : vector<1x1x8x512xf32> to vector<8x512xf32>
    %358 = vector.shape_cast %355 : vector<8x512xf32> to vector<1x1x8x512xf32>
    tpu.vector_store %arg4[%c0_368, %c2_369, %c0_370, %c0_371], %358 {strides = array<i32>} : memref<1x3x8x512xf32, #tpu.memory_space<vmem>>, vector<1x1x8x512xf32>,
    return
  }
  func.func @transform_0(%arg0: i32) -> (i32, i32, i32, i32) {
    %c0_i32 = arith.constant 0 : i32
    %c0_i32_0 = arith.constant 0 : i32
    %c0_i32_1 = arith.constant 0 : i32
    %c0_i32_2 = arith.constant 0 : i32
    return %arg0, %c0_i32, %c0_i32_0, %c0_i32_1 : i32, i32, i32, i32
  }
  func.func @transform_1(%arg0: i32) -> (i32, i32) {
    %c0_i32 = arith.constant 0 : i32
    %c0_i32_0 = arith.constant 0 : i32
    %c0_i32_1 = arith.constant 0 : i32
    return %c0_i32, %c0_i32_0 : i32, i32
  }
  func.func @transform_2(%arg0: i32) -> (i32, i32) {
    %c0_i32 = arith.constant 0 : i32
    %c0_i32_0 = arith.constant 0 : i32
    %c0_i32_1 = arith.constant 0 : i32
    return %c0_i32, %c0_i32_0 : i32, i32
  }
  func.func @transform_3(%arg0: i32) -> (i32, i32, i32, i32) {
    %c0_i32 = arith.constant 0 : i32
    %c0_i32_0 = arith.constant 0 : i32
    %c0_i32_1 = arith.constant 0 : i32
    %c0_i32_2 = arith.constant 0 : i32
    return %arg0, %c0_i32, %c0_i32_0, %c0_i32_1 : i32, i32, i32, i32
  }
}

</mosaic_0001>

<llo_original>
// kernel: tpu_custom_call.1
$region0: #{tpu_custom_call.1}
  #allocation0 [shape = 'u32[]', space=smem, size = 0x4, offset = 0x4, fixed_abs, tag = 'smem constant byte address 0x4 - core index']
  #allocation1 [shape = 'u32[144,128]{1,0:T(1,128)}', space=vmem, size = 0x12000, scoped, tag = 'internal scratch']
  #allocation2 [shape = 'f32[128,512]{1,0:T(8,128)}', space=vmem, size = 0x40000, scoped, tag = 'scratch operand']
  %s0 = inlined_call_operand.hbm [shape: f32[2,5,4,768], index: 0, kind: input, shape index: {}]
  %s1 = inlined_call_operand.hbm [shape: f32[24,128], index: 1, kind: input, shape index: {}]
  %s2 = inlined_call_operand.vmem [shape: f32[8,1], index: 2, kind: input, shape index: {}]
  %s3 = inlined_call_operand.hbm [shape: f32[2,3,8,512], index: 3, kind: output, shape index: {}]
  %s4 = sld [smem:[#allocation0]]
  $region53: #{tpu_custom_call.1} parent=0
    _
  %s6 = ssub.s32 1, %s4
  %s7 = scalar_select 0, %s6, %s4
  $region1: #{tpu_custom_call.1} parent=0
    #allocation3 [shape = 'u8[122880]{0}', space=vmem, size = 0x1e000, scoped, tag = 'input window, operand 0']
    #allocation4 [shape = 's32[2]{0}', space=sflag, size = 0x8, scoped, tag = 'scoped memory for tpu_custom_call.1']
    #allocation5 [shape = 's32[2]{0}', space=sflag, size = 0x8, scoped, tag = 'scoped memory for tpu_custom_call.1']
    #allocation6 [shape = 'u8[12288]{0}', space=vmem, size = 0x3000, scoped, tag = 'input window, operand 1, single buffered']
    #allocation7 [shape = 's32[1]{0}', space=sflag, size = 0x4, scoped, tag = 'scoped memory for tpu_custom_call.1']
    #allocation8 [shape = 'u8[98304]{0}', space=vmem, size = 0x18000, scoped, tag = 'output window, operand 0']
    %8 = vsyncpa [#allocation4], 0
    %s9 = scalar_lea.sflag [#allocation4], 1
    %10 = vsyncpa %s9, 0
    %11 = vsyncpa [#allocation7], 0
    %12 = vsyncpa [#allocation5], 0
    %s13 = scalar_lea.sflag [#allocation5], 1
    %14 = vsyncpa %s13, 0
    loop: start=0, step=1, limit=4
    $region2: #{tpu_custom_call.1} parent=1 // loop_pre_header
      _
    $region3: #{tpu_custom_call.1} parent=1 // loop_header
      %s16 = sphi 0, %s20
      %p17 = scmp.ge.s32.totalorder %s16, 4
      %s26 = sphi 0, %s28
      %s29 = sphi 0, %s26
      %s30 = sphi 0, %s29
      %s46 = sphi 0, %s30
      %s50 = sphi 0, %s50
      %s52 = sphi 0, %s50
      %s53 = sphi 0, %s52
      %s67 = sphi 0, %s53
      %s71 = sphi 0, %s71
      %s73 = sphi 0, %s71
      %s74 = sphi 0, %s73
      %s88 = sphi 0, %s74
      %s94 = sphi 0, %s96
      %s97 = sphi 0, %s94
      %s98 = sphi 0, %s97
      %s114 = sphi 0, %s98
    $region4: #{tpu_custom_call.1} parent=1 // loop_header_branch
      %19 = sbr.rel (%p17) target = $region8
    $region5: #{tpu_custom_call.1} parent=1 // loop_body
      %s21 = ssub.s32 %s16, 1
      %s22 = ssub.s32 %s16, 2
      %s23 = sadd.s32 %s16, 1
      %s24 = ssub.s32 %s16, %s23
      %p25 = scmp.eq.s32.totalorder %s24, 0
      %s27 = sadd.s32 %s26, 1
      %s28 = scalar_select %p25, %s26, %s27
      %p31 = pneg %p25
      %p32 = scmp.eq.s32.totalorder %s16, 1
      %p33 = por %p31, %p32
      %p34 = scmp.ne.s32.totalorder %s26, %s29
      %p35 = scmp.eq.s32.totalorder %s16, 0
      %p36 = por %p34, %p35
      %p37 = scmp.ne.s32.totalorder %s26, %s29
      %p38 = scmp.eq.s32.totalorder %s21, 1
      %p39 = por %p37, %p38
      %p40 = scmp.ne.s32.totalorder %s29, %s30
      %p41 = scmp.eq.s32.totalorder %s21, 0
      %p42 = por %p40, %p41
      %p43 = scmp.ne.s32.totalorder %s29, %s30
      %p44 = scmp.eq.s32.totalorder %s22, 1
      %p45 = por %p43, %p44
      %p47 = scmp.ne.s32.totalorder %s30, %s46
      %p48 = scmp.eq.s32.totalorder %s22, 0
      %p49 = por %p47, %p48
      %s51 = sadd.s32 %s50, 1
      %p54 = scmp.eq.s32.totalorder %s16, 1
      %p55 = scmp.ne.s32.totalorder %s50, %s52
      %p56 = scmp.eq.s32.totalorder %s16, 0
      %p57 = por %p55, %p56
      %p58 = scmp.ne.s32.totalorder %s50, %s52
      %p59 = scmp.eq.s32.totalorder %s21, 1
      %p60 = por %p58, %p59
      %p61 = scmp.ne.s32.totalorder %s52, %s53
      %p62 = scmp.eq.s32.totalorder %s21, 0
      %p63 = por %p61, %p62
      %p64 = scmp.ne.s32.totalorder %s52, %s53
      %p65 = scmp.eq.s32.totalorder %s22, 1
      %p66 = por %p64, %p65
      %p68 = scmp.ne.s32.totalorder %s53, %s67
      %p69 = scmp.eq.s32.totalorder %s22, 0
      %p70 = por %p68, %p69
      %s72 = sadd.s32 %s71, 1
      %p75 = scmp.eq.s32.totalorder %s16, 1
      %p76 = scmp.ne.s32.totalorder %s71, %s73
      %p77 = scmp.eq.s32.totalorder %s16, 0
      %p78 = por %p76, %p77
      %p79 = scmp.ne.s32.totalorder %s71, %s73
      %p80 = scmp.eq.s32.totalorder %s21, 1
      %p81 = por %p79, %p80
      %p82 = scmp.ne.s32.totalorder %s73, %s74
      %p83 = scmp.eq.s32.totalorder %s21, 0
      %p84 = por %p82, %p83
      %p85 = scmp.ne.s32.totalorder %s73, %s74
      %p86 = scmp.eq.s32.totalorder %s22, 1
      %p87 = por %p85, %p86
      %p89 = scmp.ne.s32.totalorder %s74, %s88
      %p90 = scmp.eq.s32.totalorder %s22, 0
      %p91 = por %p89, %p90
      %s92 = ssub.s32 %s16, %s23
      %p93 = scmp.eq.s32.totalorder %s92, 0
      %s95 = sadd.s32 %s94, 1
      %s96 = scalar_select %p93, %s94, %s95
      %p99 = pneg %p93
      %p100 = scmp.eq.s32.totalorder %s16, 1
      %p101 = por %p99, %p100
      %p102 = scmp.ne.s32.totalorder %s94, %s97
      %p103 = scmp.eq.s32.totalorder %s16, 0
      %p104 = por %p102, %p103
      %p105 = scmp.ne.s32.totalorder %s94, %s97
      %p106 = scmp.eq.s32.totalorder %s21, 1
      %p107 = por %p105, %p106
      %p108 = scmp.ne.s32.totalorder %s97, %s98
      %p109 = scmp.eq.s32.totalorder %s21, 0
      %p110 = por %p108, %p109
      %p111 = scmp.ne.s32.totalorder %s97, %s98
      %p112 = scmp.eq.s32.totalorder %s22, 1
      %p113 = por %p111, %p112
      %p115 = scmp.ne.s32.totalorder %s98, %s114
      %p116 = scmp.eq.s32.totalorder %s22, 0
      %p117 = por %p115, %p116
      %p118 = scmp.le.s32.totalorder 1, %s16
      %p119 = scmp.lt.s32.totalorder %s16, 3
      %p120 = pnand %p118, %p119
      %p121 = pneg %p120
      // Predicated region
      $region9: #{tpu_custom_call.1} parent=5 // pred_check
        _
      $region10: #{tpu_custom_call.1} parent=5 // pred_check_branch
        %123 = sbr.rel (%p120) target = $region12
      $region11: #{tpu_custom_call.1} parent=5 // pred_region
        %s124 = ssub.s32 %s16, 1
        // Predicated region
        $region13: #{tpu_custom_call.1} parent=11 // pred_check
          %p125 = pneg %p63
        $region14: #{tpu_custom_call.1} parent=11 // pred_check_branch
          %127 = sbr.rel (%p125) target = $region16
        $region15: #{tpu_custom_call.1} parent=11 // pred_region
          %s129 = ssub.s32 384, 384
          %130 = vsyncadd [#allocation7], %s129
          %s131 = sshll.u32 [#allocation6], 4
          %s132 = int_to_ptr.vmem [resolvable:$true] %s131
          %137 = dma.hbm_to_vmem [thread:$0]  %s1, 384, %s132, [#allocation7], 128, 128, 8
        $region16: #{tpu_custom_call.1} parent=11 // pred_fallthru
          _
        // Predicated region
        $region17: #{tpu_custom_call.1} parent=11 // pred_check
          %p138 = pneg %p84
        $region18: #{tpu_custom_call.1} parent=11 // pred_check_branch
          %140 = sbr.rel (%p138) target = $region20
        $region19: #{tpu_custom_call.1} parent=11 // pred_region
          _
        $region20: #{tpu_custom_call.1} parent=11 // pred_fallthru
          _
      $region12: #{tpu_custom_call.1} parent=5 // pred_fallthru
        _
      %p141 = scmp.lt.s32.totalorder %s16, 2
      // Predicated region
      $region21: #{tpu_custom_call.1} parent=5 // pred_check
        %p142 = pneg %p141
      $region22: #{tpu_custom_call.1} parent=5 // pred_check_branch
        %144 = sbr.rel (%p142) target = $region24
      $region23: #{tpu_custom_call.1} parent=5 // pred_region
        // Predicated region
        $region25: #{tpu_custom_call.1} parent=23 // pred_check
          %p145 = pneg %p36
        $region26: #{tpu_custom_call.1} parent=23 // pred_check_branch
          %147 = sbr.rel (%p145) target = $region28
        $region27: #{tpu_custom_call.1} parent=23 // pred_region
          %s148 = sand.u32 %s26, 1
          %s149 = scalar_lea.sflag [#allocation4], %s148
          %s150 = sand.u32 %s26, 1
          %s151 = smul.addr %s150, 120
          %s152 = scalar_lea.vmem [#allocation3], %s151
          %s154 = ssub.s32 1920, 1920
          %155 = vsyncadd %s149, %s154
          %s156 = smul.addr %s16, 30
          %s157 = smul.addr %s156, 64
          %s158 = scalar_lea.hbm %s0, %s157
          %s159 = sshll.u32 %s152, 4
          %s160 = int_to_ptr.vmem [resolvable:$true] %s159
          %165 = dma.hbm_to_vmem [thread:$0]  %s158, 1920, %s160, %s149, 384, 384, 24
        $region28: #{tpu_custom_call.1} parent=23 // pred_fallthru
          _
      $region24: #{tpu_custom_call.1} parent=5 // pred_fallthru
        _
      %p166 = scmp.le.s32.totalorder 1, %s16
      %p167 = scmp.lt.s32.totalorder %s16, 3
      %p168 = pnand %p166, %p167
      %p169 = pneg %p168
      // Predicated region
      $region29: #{tpu_custom_call.1} parent=5 // pred_check
        _
      $region30: #{tpu_custom_call.1} parent=5 // pred_check_branch
        %171 = sbr.rel (%p168) target = $region32
      $region31: #{tpu_custom_call.1} parent=5 // pred_region
        %s172 = ssub.s32 %s16, 1
        %s173 = sand.u32 %s29, 1
        %s174 = scalar_lea.sflag [#allocation4], %s173
        %s175 = sand.u32 %s29, 1
        %s176 = smul.addr %s175, 120
        %s177 = scalar_lea.vmem [#allocation3], %s176
        // Predicated region
        $region33: #{tpu_custom_call.1} parent=31 // pred_check
          %p178 = pneg %p42
        $region34: #{tpu_custom_call.1} parent=31 // pred_check_branch
          %180 = sbr.rel (%p178) target = $region36
        $region35: #{tpu_custom_call.1} parent=31 // pred_region
          %181 = dma.done %s174, 1920
        $region36: #{tpu_custom_call.1} parent=31 // pred_fallthru
          _
        // Predicated region
        $region37: #{tpu_custom_call.1} parent=31 // pred_check
          %p182 = pneg %p63
        $region38: #{tpu_custom_call.1} parent=31 // pred_check_branch
          %184 = sbr.rel (%p182) target = $region40
        $region39: #{tpu_custom_call.1} parent=31 // pred_region
          %185 = dma.done [#allocation7], 384
        $region40: #{tpu_custom_call.1} parent=31 // pred_fallthru
          _
        %s186 = sand.u32 %s29, 1
        %s187 = scalar_lea.sflag [#allocation4], %s186
        %s188 = sand.u32 %s29, 1
        %s189 = smul.addr %s188, 120
        %s190 = scalar_lea.vmem [#allocation3], %s189
        %p191 = pneg %p42
        %p192 = pneg %p39
        %p193 = pneg %p63
        %p194 = pneg %p60
        %p195 = pneg %p84
        %p196 = pneg %p81
        %p197 = pneg %p110
        %p198 = pneg %p107
        %s199 = sand.u32 %s97, 1
        %s200 = scalar_lea.sflag [#allocation5], %s199
        %s201 = sand.u32 %s97, 1
        %s202 = smul.addr %s201, 96
        %s203 = scalar_lea.vmem [#allocation8], %s202
        %204 = vst [vmem:[#allocation2 + $0x1a0] sm:$0xf0] 0.0
        %205 = vst [vmem:[#allocation2 + $0x1a8] sm:$0xf0] 0.0
        %206 = vst [vmem:[#allocation2 + $0x1b0] sm:$0xf0] 0.0
        %207 = vst [vmem:[#allocation2 + $0x1b8] sm:$0xf0] 0.0
        %208 = vst [vmem:[#allocation2 + $0x1c0] sm:$0xff] 0.0
        %209 = vst [vmem:[#allocation2 + $0x1c8] sm:$0xff] 0.0
        %210 = vst [vmem:[#allocation2 + $0x1d0] sm:$0xff] 0.0
        %211 = vst [vmem:[#allocation2 + $0x1d8] sm:$0xff] 0.0
        %212 = vst [vmem:[#allocation2 + $0x1e0] sm:$0xff] 0.0
        %213 = vst [vmem:[#allocation2 + $0x1e8] sm:$0xff] 0.0
        %214 = vst [vmem:[#allocation2 + $0x1f0] sm:$0xff] 0.0
        %215 = vst [vmem:[#allocation2 + $0x1f8] sm:$0xff] 0.0
        %v216 = vld [vmem:[#allocation6] sm:$0xff]
        %v217 = vld [vmem:[#allocation6 + $0x8] sm:$0xff]
        %v218 = vld [vmem:[#allocation6 + $0x10] sm:$0xff]
        %v219 = vld [vmem:[%s2] sm:$0xff]
        %v220 = vld [vmem:[%s177] sm:$0xff]
        %v221 = vld [vmem:[%s177 + $0x8] sm:$0xff]
        %v224 = vcombine.high %v220, %v220
        %v225 = vcombine.high %v221, %v221
        %228 = vrot.lane.b32.xlu0 %v220, 127
        %v229 = vpop.permute.xlu0 %228
        %230 = vrot.lane.b32.xlu0 %v224, 127
        %v231 = vpop.permute.xlu0 %230
        %232 = vrot.lane.b32.xlu0 %v221, 127
        %v233 = vpop.permute.xlu0 %232
        %234 = vrot.lane.b32.xlu0 %v225, 127
        %v235 = vpop.permute.xlu0 %234
        %v236 = vlaneseq
        %v237 = vand.u32 %v236, 127
        %vm238 = vcmp.lt.s32.totalorder %v237, 127
        %v239 = vsel %vm238, %v233, %v235
        %v240 = vsel %vm238, %v231, %v233
        %v241 = vsel %vm238, %v229, %v231
        %v242 = vsel %vm238, %v235, %v229
        %v247 = vrot.slane %v241, 4
        %v248 = vrot.slane %v240, 4
        %v249 = vrot.slane %v239, 4
        %v250 = vrot.slane %v242, 4
        %vm255 = vcmask 1043456
        %v256 = vsel %vm255, %v220, %v247
        %v257 = vsel %vm255, %v224, %v248
        %v258 = vsel %vm255, %v221, %v249
        %v259 = vsel %vm255, %v225, %v250
        %260 = vst [vmem:[#allocation2] sm:$0xff] %v256
        %261 = vst [vmem:[#allocation2 + $0x8] sm:$0xff] %v257
        %262 = vst [vmem:[#allocation2 + $0x10] sm:$0xff] %v258
        %263 = vst [vmem:[#allocation2 + $0x18] sm:$0xff] %v259
        %264 = vrot.lane.b32.xlu0 %v220, 126
        %v265 = vpop.permute.xlu0 %264
        %266 = vrot.lane.b32.xlu0 %v224, 126
        %v267 = vpop.permute.xlu0 %266
        %268 = vrot.lane.b32.xlu0 %v221, 126
        %v269 = vpop.permute.xlu0 %268
        %270 = vrot.lane.b32.xlu0 %v225, 126
        %v271 = vpop.permute.xlu0 %270
        %vm272 = vcmp.lt.s32.totalorder %v237, 126
        %v273 = vsel %vm272, %v269, %v271
        %v274 = vsel %vm272, %v267, %v269
        %v275 = vsel %vm272, %v265, %v267
        %v276 = vsel %vm272, %v271, %v265
        %277 = vrot.lane.b32.xlu0 %v220, 118
        %v278 = vpop.permute.xlu0 %277
        %279 = vrot.lane.b32.xlu0 %v224, 118
        %v280 = vpop.permute.xlu0 %279
        %281 = vrot.lane.b32.xlu0 %v221, 118
        %v282 = vpop.permute.xlu0 %281
        %283 = vrot.lane.b32.xlu0 %v225, 118
        %v284 = vpop.permute.xlu0 %283
        %vm285 = vcmp.lt.s32.totalorder %v237, 118
        %v286 = vsel %vm285, %v282, %v284
        %v287 = vsel %vm285, %v280, %v282
        %v288 = vsel %vm285, %v278, %v280
        %v289 = vsel %vm285, %v284, %v278
        %v294 = vrot.slane %v288, 4
        %v295 = vrot.slane %v287, 4
        %v296 = vrot.slane %v286, 4
        %v297 = vrot.slane %v289, 4
        %v302 = vsel %vm255, %v275, %v294
        %v303 = vsel %vm255, %v274, %v295
        %v304 = vsel %vm255, %v273, %v296
        %v305 = vsel %vm255, %v276, %v297
        %306 = vst [vmem:[#allocation2 + $0x20] sm:$0xff] %v302
        %307 = vst [vmem:[#allocation2 + $0x28] sm:$0xff] %v303
        %308 = vst [vmem:[#allocation2 + $0x30] sm:$0xff] %v304
        %309 = vst [vmem:[#allocation2 + $0x38] sm:$0xff] %v305
        %310 = vrot.lane.b32.xlu0 %v220, 117
        %v311 = vpop.permute.xlu0 %310
        %312 = vrot.lane.b32.xlu0 %v224, 117
        %v313 = vpop.permute.xlu0 %312
        %314 = vrot.lane.b32.xlu0 %v221, 117
        %v315 = vpop.permute.xlu0 %314
        %316 = vrot.lane.b32.xlu0 %v225, 117
        %v317 = vpop.permute.xlu0 %316
        %vm318 = vcmp.lt.s32.totalorder %v237, 117
        %v319 = vsel %vm318, %v315, %v317
        %v320 = vsel %vm318, %v313, %v315
        %v321 = vsel %vm318, %v311, %v313
        %v322 = vsel %vm318, %v317, %v311
        %323 = vrot.lane.b32.xlu0 %v220, 116
        %v324 = vpop.permute.xlu0 %323
        %325 = vrot.lane.b32.xlu0 %v224, 116
        %v326 = vpop.permute.xlu0 %325
        %327 = vrot.lane.b32.xlu0 %v221, 116
        %v328 = vpop.permute.xlu0 %327
        %329 = vrot.lane.b32.xlu0 %v225, 116
        %v330 = vpop.permute.xlu0 %329
        %vm331 = vcmp.lt.s32.totalorder %v237, 116
        %v332 = vsel %vm331, %v328, %v330
        %v333 = vsel %vm331, %v326, %v328
        %v334 = vsel %vm331, %v324, %v326
        %v335 = vsel %vm331, %v330, %v324
        %v340 = vrot.slane %v334, 4
        %v341 = vrot.slane %v333, 4
        %v342 = vrot.slane %v332, 4
        %v343 = vrot.slane %v335, 4
        %v348 = vsel %vm255, %v321, %v340
        %v349 = vsel %vm255, %v320, %v341
        %v350 = vsel %vm255, %v319, %v342
        %v351 = vsel %vm255, %v322, %v343
        %352 = vst [vmem:[#allocation2 + $0x40] sm:$0xff] %v348
        %353 = vst [vmem:[#allocation2 + $0x48] sm:$0xff] %v349
        %354 = vst [vmem:[#allocation2 + $0x50] sm:$0xff] %v350
        %355 = vst [vmem:[#allocation2 + $0x58] sm:$0xff] %v351
        %356 = vrot.lane.b32.xlu0 %v220, 108
        %v357 = vpop.permute.xlu0 %356
        %358 = vrot.lane.b32.xlu0 %v224, 108
        %v359 = vpop.permute.xlu0 %358
        %360 = vrot.lane.b32.xlu0 %v221, 108
        %v361 = vpop.permute.xlu0 %360
        %362 = vrot.lane.b32.xlu0 %v225, 108
        %v363 = vpop.permute.xlu0 %362
        %vm364 = vcmp.lt.s32.totalorder %v237, 108
        %v365 = vsel %vm364, %v361, %v363
        %v366 = vsel %vm364, %v359, %v361
        %v367 = vsel %vm364, %v357, %v359
        %v368 = vsel %vm364, %v363, %v357
        %369 = vrot.lane.b32.xlu0 %v220, 107
        %v370 = vpop.permute.xlu0 %369
        %371 = vrot.lane.b32.xlu0 %v224, 107
        %v372 = vpop.permute.xlu0 %371
        %373 = vrot.lane.b32.xlu0 %v221, 107
        %v374 = vpop.permute.xlu0 %373
        %375 = vrot.lane.b32.xlu0 %v225, 107
        %v376 = vpop.permute.xlu0 %375
        %vm377 = vcmp.lt.s32.totalorder %v237, 107
        %v378 = vsel %vm377, %v374, %v376
        %v379 = vsel %vm377, %v372, %v374
        %v380 = vsel %vm377, %v370, %v372
        %v381 = vsel %vm377, %v376, %v370
        %v386 = vrot.slane %v380, 4
        %v387 = vrot.slane %v379, 4
        %v388 = vrot.slane %v378, 4
        %v389 = vrot.slane %v381, 4
        %v394 = vsel %vm255, %v367, %v386
        %v395 = vsel %vm255, %v366, %v387
        %v396 = vsel %vm255, %v365, %v388
        %v397 = vsel %vm255, %v368, %v389
        %398 = vst [vmem:[#allocation2 + $0x60] sm:$0xff] %v394
        %399 = vst [vmem:[#allocation2 + $0x68] sm:$0xff] %v395
        %400 = vst [vmem:[#allocation2 + $0x70] sm:$0xff] %v396
        %401 = vst [vmem:[#allocation2 + $0x78] sm:$0xff] %v397
        %402 = vrot.lane.b32.xlu0 %v220, 106
        %v403 = vpop.permute.xlu0 %402
        %404 = vrot.lane.b32.xlu0 %v224, 106
        %v405 = vpop.permute.xlu0 %404
        %406 = vrot.lane.b32.xlu0 %v221, 106
        %v407 = vpop.permute.xlu0 %406
        %408 = vrot.lane.b32.xlu0 %v225, 106
        %v409 = vpop.permute.xlu0 %408
        %vm410 = vcmp.lt.s32.totalorder %v237, 106
        %v411 = vsel %vm410, %v407, %v409
        %v412 = vsel %vm410, %v405, %v407
        %v413 = vsel %vm410, %v403, %v405
        %v414 = vsel %vm410, %v409, %v403
        %v415 = vld [vmem:[%s177] sm:$0xff]
        %v416 = vld [vmem:[%s177 + $0x8] sm:$0xff]
        %v417 = vld [vmem:[%s177 + $0x10] sm:$0xf]
        %v421 = vcombine.low %v415, %v415
        %v422 = vcombine.low %v416, %v416
        %v423 = vcombine.low %v417, %v417
        %424 = vrot.lane.b32.xlu0 %v421, 28
        %v425 = vpop.permute.xlu0 %424
        %426 = vrot.lane.b32.xlu0 %v415, 28
        %v427 = vpop.permute.xlu0 %426
        %428 = vrot.lane.b32.xlu0 %v422, 28
        %v429 = vpop.permute.xlu0 %428
        %430 = vrot.lane.b32.xlu0 %v416, 28
        %v431 = vpop.permute.xlu0 %430
        %432 = vrot.lane.b32.xlu0 %v423, 28
        %v433 = vpop.permute.xlu0 %432
        %vm434 = vcmask 228352
        %v435 = vsel %vm434, %v425, %v427
        %v436 = vsel %vm434, %v427, %v429
        %v437 = vsel %vm434, %v429, %v431
        %v438 = vsel %vm434, %v431, %v433
        %v443 = vsel %vm255, %v413, %v435
        %v444 = vsel %vm255, %v412, %v436
        %v445 = vsel %vm255, %v411, %v437
        %v446 = vsel %vm255, %v414, %v438
        %447 = vst [vmem:[#allocation2 + $0x80] sm:$0xff] %v443
        %448 = vst [vmem:[#allocation2 + $0x88] sm:$0xff] %v444
        %449 = vst [vmem:[#allocation2 + $0x90] sm:$0xff] %v445
        %450 = vst [vmem:[#allocation2 + $0x98] sm:$0xff] %v446
        %v451 = vcombine.high %v415, %v415
        %v452 = vcombine.high %v416, %v416
        %453 = vrot.lane.b32.xlu0 %v451, 28
        %v454 = vpop.permute.xlu0 %453
        %455 = vrot.lane.b32.xlu0 %v452, 28
        %v456 = vpop.permute.xlu0 %455
        %457 = vrot.lane.b32.xlu0 %v417, 28
        %v458 = vpop.permute.xlu0 %457
        %v459 = vsel %vm434, %v427, %v454
        %v460 = vsel %vm434, %v454, %v431
        %v461 = vsel %vm434, %v431, %v456
        %v462 = vsel %vm434, %v456, %v458
        %467 = vrot.lane.b32.xlu0 %v459, 127
        %v468 = vpop.permute.xlu0 %467
        %469 = vrot.lane.b32.xlu0 %v460, 127
        %v470 = vpop.permute.xlu0 %469
        %471 = vrot.lane.b32.xlu0 %v461, 127
        %v472 = vpop.permute.xlu0 %471
        %473 = vrot.lane.b32.xlu0 %v462, 127
        %v474 = vpop.permute.xlu0 %473
        %v475 = vsel %vm238, %v472, %v474
        %v476 = vsel %vm238, %v470, %v472
        %v477 = vsel %vm238, %v468, %v470
        %v478 = vsel %vm238, %v474, %v468
        %479 = vrot.lane.b32.xlu0 %v459, 126
        %v480 = vpop.permute.xlu0 %479
        %481 = vrot.lane.b32.xlu0 %v460, 126
        %v482 = vpop.permute.xlu0 %481
        %483 = vrot.lane.b32.xlu0 %v461, 126
        %v484 = vpop.permute.xlu0 %483
        %485 = vrot.lane.b32.xlu0 %v462, 126
        %v486 = vpop.permute.xlu0 %485
        %v487 = vsel %vm272, %v484, %v486
        %v488 = vsel %vm272, %v482, %v484
        %v489 = vsel %vm272, %v480, %v482
        %v490 = vsel %vm272, %v486, %v480
        %v495 = vrot.slane %v489, 4
        %v496 = vrot.slane %v488, 4
        %v497 = vrot.slane %v487, 4
        %v498 = vrot.slane %v490, 4
        %v503 = vsel %vm255, %v477, %v495
        %v504 = vsel %vm255, %v476, %v496
        %v505 = vsel %vm255, %v475, %v497
        %v506 = vsel %vm255, %v478, %v498
        %507 = vst [vmem:[#allocation2 + $0xa0] sm:$0xff] %v503
        %508 = vst [vmem:[#allocation2 + $0xa8] sm:$0xff] %v504
        %509 = vst [vmem:[#allocation2 + $0xb0] sm:$0xff] %v505
        %510 = vst [vmem:[#allocation2 + $0xb8] sm:$0xff] %v506
        %511 = vrot.lane.b32.xlu0 %v459, 118
        %v512 = vpop.permute.xlu0 %511
        %513 = vrot.lane.b32.xlu0 %v460, 118
        %v514 = vpop.permute.xlu0 %513
        %515 = vrot.lane.b32.xlu0 %v461, 118
        %v516 = vpop.permute.xlu0 %515
        %517 = vrot.lane.b32.xlu0 %v462, 118
        %v518 = vpop.permute.xlu0 %517
        %v519 = vsel %vm285, %v516, %v518
        %v520 = vsel %vm285, %v514, %v516
        %v521 = vsel %vm285, %v512, %v514
        %v522 = vsel %vm285, %v518, %v512
        %523 = vrot.lane.b32.xlu0 %v459, 117
        %v524 = vpop.permute.xlu0 %523
        %525 = vrot.lane.b32.xlu0 %v460, 117
        %v526 = vpop.permute.xlu0 %525
        %527 = vrot.lane.b32.xlu0 %v461, 117
        %v528 = vpop.permute.xlu0 %527
        %529 = vrot.lane.b32.xlu0 %v462, 117
        %v530 = vpop.permute.xlu0 %529
        %v531 = vsel %vm318, %v528, %v530
        %v532 = vsel %vm318, %v526, %v528
        %v533 = vsel %vm318, %v524, %v526
        %v534 = vsel %vm318, %v530, %v524
        %v539 = vrot.slane %v533, 4
        %v540 = vrot.slane %v532, 4
        %v541 = vrot.slane %v531, 4
        %v542 = vrot.slane %v534, 4
        %v547 = vsel %vm255, %v521, %v539
        %v548 = vsel %vm255, %v520, %v540
        %v549 = vsel %vm255, %v519, %v541
        %v550 = vsel %vm255, %v522, %v542
        %551 = vst [vmem:[#allocation2 + $0xc0] sm:$0xff] %v547
        %552 = vst [vmem:[#allocation2 + $0xc8] sm:$0xff] %v548
        %553 = vst [vmem:[#allocation2 + $0xd0] sm:$0xff] %v549
        %554 = vst [vmem:[#allocation2 + $0xd8] sm:$0xff] %v550
        %555 = vrot.lane.b32.xlu0 %v459, 116
        %v556 = vpop.permute.xlu0 %555
        %557 = vrot.lane.b32.xlu0 %v460, 116
        %v558 = vpop.permute.xlu0 %557
        %559 = vrot.lane.b32.xlu0 %v461, 116
        %v560 = vpop.permute.xlu0 %559
        %561 = vrot.lane.b32.xlu0 %v462, 116
        %v562 = vpop.permute.xlu0 %561
        %v563 = vsel %vm331, %v560, %v562
        %v564 = vsel %vm331, %v558, %v560
        %v565 = vsel %vm331, %v556, %v558
        %v566 = vsel %vm331, %v562, %v556
        %567 = vrot.lane.b32.xlu0 %v459, 108
        %v568 = vpop.permute.xlu0 %567
        %569 = vrot.lane.b32.xlu0 %v460, 108
        %v570 = vpop.permute.xlu0 %569
        %571 = vrot.lane.b32.xlu0 %v461, 108
        %v572 = vpop.permute.xlu0 %571
        %573 = vrot.lane.b32.xlu0 %v462, 108
        %v574 = vpop.permute.xlu0 %573
        %v575 = vsel %vm364, %v572, %v574
        %v576 = vsel %vm364, %v570, %v572
        %v577 = vsel %vm364, %v568, %v570
        %v578 = vsel %vm364, %v574, %v568
        %v583 = vrot.slane %v577, 4
        %v584 = vrot.slane %v576, 4
        %v585 = vrot.slane %v575, 4
        %v586 = vrot.slane %v578, 4
        %v591 = vsel %vm255, %v565, %v583
        %v592 = vsel %vm255, %v564, %v584
        %v593 = vsel %vm255, %v563, %v585
        %v594 = vsel %vm255, %v566, %v586
        %595 = vst [vmem:[#allocation2 + $0xe0] sm:$0xff] %v591
        %596 = vst [vmem:[#allocation2 + $0xe8] sm:$0xff] %v592
        %597 = vst [vmem:[#allocation2 + $0xf0] sm:$0xff] %v593
        %598 = vst [vmem:[#allocation2 + $0xf8] sm:$0xff] %v594
        %599 = vrot.lane.b32.xlu0 %v459, 107
        %v600 = vpop.permute.xlu0 %599
        %601 = vrot.lane.b32.xlu0 %v460, 107
        %v602 = vpop.permute.xlu0 %601
        %603 = vrot.lane.b32.xlu0 %v461, 107
        %v604 = vpop.permute.xlu0 %603
        %605 = vrot.lane.b32.xlu0 %v462, 107
        %v606 = vpop.permute.xlu0 %605
        %v607 = vsel %vm377, %v604, %v606
        %v608 = vsel %vm377, %v602, %v604
        %v609 = vsel %vm377, %v600, %v602
        %v610 = vsel %vm377, %v606, %v600
        %611 = vrot.lane.b32.xlu0 %v459, 106
        %v612 = vpop.permute.xlu0 %611
        %613 = vrot.lane.b32.xlu0 %v460, 106
        %v614 = vpop.permute.xlu0 %613
        %615 = vrot.lane.b32.xlu0 %v461, 106
        %v616 = vpop.permute.xlu0 %615
        %617 = vrot.lane.b32.xlu0 %v462, 106
        %v618 = vpop.permute.xlu0 %617
        %v619 = vsel %vm410, %v616, %v618
        %v620 = vsel %vm410, %v614, %v616
        %v621 = vsel %vm410, %v612, %v614
        %v622 = vsel %vm410, %v618, %v612
        %v627 = vrot.slane %v621, 4
        %v628 = vrot.slane %v620, 4
        %v629 = vrot.slane %v619, 4
        %v630 = vrot.slane %v622, 4
        %v635 = vsel %vm255, %v609, %v627
        %v636 = vsel %vm255, %v608, %v628
        %v637 = vsel %vm255, %v607, %v629
        %v638 = vsel %vm255, %v610, %v630
        %639 = vst [vmem:[#allocation2 + $0x100] sm:$0xff] %v635
        %640 = vst [vmem:[#allocation2 + $0x108] sm:$0xff] %v636
        %641 = vst [vmem:[#allocation2 + $0x110] sm:$0xff] %v637
        %642 = vst [vmem:[#allocation2 + $0x118] sm:$0xff] %v638
        %v643 = vld [vmem:[%s177 + $0x4] sm:$0xff]
        %v644 = vld [vmem:[%s177 + $0xc] sm:$0xff]
        %v645 = vld [vmem:[%s177 + $0x14] sm:$0xf]
        %v649 = vcombine.high %v643, %v643
        %v650 = vcombine.high %v644, %v644
        %651 = vrot.lane.b32.xlu0 %v643, 56
        %v652 = vpop.permute.xlu0 %651
        %653 = vrot.lane.b32.xlu0 %v649, 56
        %v654 = vpop.permute.xlu0 %653
        %655 = vrot.lane.b32.xlu0 %v644, 56
        %v656 = vpop.permute.xlu0 %655
        %657 = vrot.lane.b32.xlu0 %v650, 56
        %v658 = vpop.permute.xlu0 %657
        %659 = vrot.lane.b32.xlu0 %v645, 56
        %v660 = vpop.permute.xlu0 %659
        %vm661 = vcmask 457728
        %v662 = vsel %vm661, %v652, %v654
        %v663 = vsel %vm661, %v654, %v656
        %v664 = vsel %vm661, %v656, %v658
        %v665 = vsel %vm661, %v658, %v660
        %670 = vrot.lane.b32.xlu0 %v662, 127
        %v671 = vpop.permute.xlu0 %670
        %672 = vrot.lane.b32.xlu0 %v663, 127
        %v673 = vpop.permute.xlu0 %672
        %674 = vrot.lane.b32.xlu0 %v664, 127
        %v675 = vpop.permute.xlu0 %674
        %676 = vrot.lane.b32.xlu0 %v665, 127
        %v677 = vpop.permute.xlu0 %676
        %v678 = vsel %vm238, %v675, %v677
        %v679 = vsel %vm238, %v673, %v675
        %v680 = vsel %vm238, %v671, %v673
        %v681 = vsel %vm238, %v677, %v671
        %v688 = vrot.slane %v680, 4
        %v689 = vrot.slane %v679, 4
        %v690 = vrot.slane %v678, 4
        %v691 = vrot.slane %v681, 4
        %692 = vrot.lane.b32.xlu0 %v688, 72
        %v693 = vpop.permute.xlu0 %692
        %694 = vrot.lane.b32.xlu0 %v689, 72
        %v695 = vpop.permute.xlu0 %694
        %696 = vrot.lane.b32.xlu0 %v690, 72
        %v697 = vpop.permute.xlu0 %696
        %698 = vrot.lane.b32.xlu0 %v691, 72
        %v699 = vpop.permute.xlu0 %698
        %vm700 = vcmask 588800
        %v701 = vsel %vm700, %v693, %v695
        %v702 = vsel %vm700, %v695, %v697
        %v703 = vsel %vm700, %v697, %v699
        %v709 = vsel %vm255, %v643, %v693
        %v710 = vsel %vm255, %v649, %v701
        %v711 = vsel %vm255, %v644, %v702
        %v712 = vsel %vm255, %v650, %v703
        %v713 = vsel %vm255, %v645, %v699
        %719 = vrot.lane.b32.xlu0 %v709, 56
        %v720 = vpop.permute.xlu0 %719
        %721 = vrot.lane.b32.xlu0 %v710, 56
        %v722 = vpop.permute.xlu0 %721
        %723 = vrot.lane.b32.xlu0 %v711, 56
        %v724 = vpop.permute.xlu0 %723
        %725 = vrot.lane.b32.xlu0 %v712, 56
        %v726 = vpop.permute.xlu0 %725
        %727 = vrot.lane.b32.xlu0 %v713, 56
        %v728 = vpop.permute.xlu0 %727
        %v729 = vsel %vm661, %v720, %v722
        %v730 = vsel %vm661, %v722, %v724
        %v731 = vsel %vm661, %v724, %v726
        %v732 = vsel %vm661, %v726, %v728
        %737 = vst [vmem:[#allocation2 + $0x120] sm:$0xff] %v729
        %738 = vst [vmem:[#allocation2 + $0x128] sm:$0xff] %v730
        %739 = vst [vmem:[#allocation2 + $0x130] sm:$0xff] %v731
        %740 = vst [vmem:[#allocation2 + $0x138] sm:$0xff] %v732
        %741 = vrot.lane.b32.xlu0 %v662, 126
        %v742 = vpop.permute.xlu0 %741
        %743 = vrot.lane.b32.xlu0 %v663, 126
        %v744 = vpop.permute.xlu0 %743
        %745 = vrot.lane.b32.xlu0 %v664, 126
        %v746 = vpop.permute.xlu0 %745
        %747 = vrot.lane.b32.xlu0 %v665, 126
        %v748 = vpop.permute.xlu0 %747
        %v749 = vsel %vm272, %v746, %v748
        %v750 = vsel %vm272, %v744, %v746
        %v751 = vsel %vm272, %v742, %v744
        %v752 = vsel %vm272, %v748, %v742
        %753 = vrot.lane.b32.xlu0 %v662, 118
        %v754 = vpop.permute.xlu0 %753
        %755 = vrot.lane.b32.xlu0 %v663, 118
        %v756 = vpop.permute.xlu0 %755
        %757 = vrot.lane.b32.xlu0 %v664, 118
        %v758 = vpop.permute.xlu0 %757
        %759 = vrot.lane.b32.xlu0 %v665, 118
        %v760 = vpop.permute.xlu0 %759
        %v761 = vsel %vm285, %v758, %v760
        %v762 = vsel %vm285, %v756, %v758
        %v763 = vsel %vm285, %v754, %v756
        %v764 = vsel %vm285, %v760, %v754
        %v769 = vrot.slane %v763, 4
        %v770 = vrot.slane %v762, 4
        %v771 = vrot.slane %v761, 4
        %v772 = vrot.slane %v764, 4
        %v777 = vsel %vm255, %v751, %v769
        %v778 = vsel %vm255, %v750, %v770
        %v779 = vsel %vm255, %v749, %v771
        %v780 = vsel %vm255, %v752, %v772
        %781 = vst [vmem:[#allocation2 + $0x140] sm:$0xff] %v777
        %782 = vst [vmem:[#allocation2 + $0x148] sm:$0xff] %v778
        %783 = vst [vmem:[#allocation2 + $0x150] sm:$0xff] %v779
        %784 = vst [vmem:[#allocation2 + $0x158] sm:$0xff] %v780
        %785 = vrot.lane.b32.xlu0 %v662, 117
        %v786 = vpop.permute.xlu0 %785
        %787 = vrot.lane.b32.xlu0 %v663, 117
        %v788 = vpop.permute.xlu0 %787
        %789 = vrot.lane.b32.xlu0 %v664, 117
        %v790 = vpop.permute.xlu0 %789
        %791 = vrot.lane.b32.xlu0 %v665, 117
        %v792 = vpop.permute.xlu0 %791
        %v793 = vsel %vm318, %v790, %v792
        %v794 = vsel %vm318, %v788, %v790
        %v795 = vsel %vm318, %v786, %v788
        %v796 = vsel %vm318, %v792, %v786
        %797 = vrot.lane.b32.xlu0 %v662, 116
        %v798 = vpop.permute.xlu0 %797
        %799 = vrot.lane.b32.xlu0 %v663, 116
        %v800 = vpop.permute.xlu0 %799
        %801 = vrot.lane.b32.xlu0 %v664, 116
        %v802 = vpop.permute.xlu0 %801
        %803 = vrot.lane.b32.xlu0 %v665, 116
        %v804 = vpop.permute.xlu0 %803
        %v805 = vsel %vm331, %v802, %v804
        %v806 = vsel %vm331, %v800, %v802
        %v807 = vsel %vm331, %v798, %v800
        %v808 = vsel %vm331, %v804, %v798
        %v813 = vrot.slane %v807, 4
        %v814 = vrot.slane %v806, 4
        %v815 = vrot.slane %v805, 4
        %v816 = vrot.slane %v808, 4
        %v821 = vsel %vm255, %v795, %v813
        %v822 = vsel %vm255, %v794, %v814
        %v823 = vsel %vm255, %v793, %v815
        %v824 = vsel %vm255, %v796, %v816
        %825 = vst [vmem:[#allocation2 + $0x160] sm:$0xff] %v821
        %826 = vst [vmem:[#allocation2 + $0x168] sm:$0xff] %v822
        %827 = vst [vmem:[#allocation2 + $0x170] sm:$0xff] %v823
        %828 = vst [vmem:[#allocation2 + $0x178] sm:$0xff] %v824
        %829 = vrot.lane.b32.xlu0 %v662, 108
        %v830 = vpop.permute.xlu0 %829
        %831 = vrot.lane.b32.xlu0 %v663, 108
        %v832 = vpop.permute.xlu0 %831
        %833 = vrot.lane.b32.xlu0 %v664, 108
        %v834 = vpop.permute.xlu0 %833
        %835 = vrot.lane.b32.xlu0 %v665, 108
        %v836 = vpop.permute.xlu0 %835
        %v837 = vsel %vm364, %v834, %v836
        %v838 = vsel %vm364, %v832, %v834
        %v839 = vsel %vm364, %v830, %v832
        %v840 = vsel %vm364, %v836, %v830
        %841 = vrot.lane.b32.xlu0 %v662, 107
        %v842 = vpop.permute.xlu0 %841
        %843 = vrot.lane.b32.xlu0 %v663, 107
        %v844 = vpop.permute.xlu0 %843
        %845 = vrot.lane.b32.xlu0 %v664, 107
        %v846 = vpop.permute.xlu0 %845
        %847 = vrot.lane.b32.xlu0 %v665, 107
        %v848 = vpop.permute.xlu0 %847
        %v849 = vsel %vm377, %v846, %v848
        %v850 = vsel %vm377, %v844, %v846
        %v851 = vsel %vm377, %v842, %v844
        %v852 = vsel %vm377, %v848, %v842
        %v857 = vrot.slane %v851, 4
        %v858 = vrot.slane %v850, 4
        %v859 = vrot.slane %v849, 4
        %v860 = vrot.slane %v852, 4
        %v865 = vsel %vm255, %v839, %v857
        %v866 = vsel %vm255, %v838, %v858
        %v867 = vsel %vm255, %v837, %v859
        %v868 = vsel %vm255, %v840, %v860
        %869 = vst [vmem:[#allocation2 + $0x180] sm:$0xff] %v865
        %870 = vst [vmem:[#allocation2 + $0x188] sm:$0xff] %v866
        %871 = vst [vmem:[#allocation2 + $0x190] sm:$0xff] %v867
        %872 = vst [vmem:[#allocation2 + $0x198] sm:$0xff] %v868
        %873 = vrot.lane.b32.xlu0 %v662, 106
        %v874 = vpop.permute.xlu0 %873
        %875 = vrot.lane.b32.xlu0 %v663, 106
        %v876 = vpop.permute.xlu0 %875
        %877 = vrot.lane.b32.xlu0 %v664, 106
        %v878 = vpop.permute.xlu0 %877
        %879 = vrot.lane.b32.xlu0 %v665, 106
        %v880 = vpop.permute.xlu0 %879
        %v881 = vsel %vm410, %v878, %v880
        %v882 = vsel %vm410, %v876, %v878
        %v883 = vsel %vm410, %v874, %v876
        %v884 = vsel %vm410, %v880, %v874
        %885 = vst [vmem:[#allocation2 + $0x1a0] sm:$0xf] %v883
        %886 = vst [vmem:[#allocation2 + $0x1a8] sm:$0xf] %v882
        %887 = vst [vmem:[#allocation2 + $0x1b0] sm:$0xf] %v881
        %888 = vst [vmem:[#allocation2 + $0x1b8] sm:$0xf] %v884
        %v889 = vld [vmem:[#allocation2] sm:$0xff]
        %v890 = vld [vmem:[#allocation2 + $0x8] sm:$0xff]
        %v891 = vld [vmem:[#allocation2 + $0x10] sm:$0xff]
        %v892 = vld [vmem:[#allocation2 + $0x18] sm:$0xff]
        %v893 = vld [vmem:[#allocation2 + $0x20] sm:$0xff]
        %v894 = vld [vmem:[#allocation2 + $0x28] sm:$0xff]
        %v895 = vld [vmem:[#allocation2 + $0x30] sm:$0xff]
        %v896 = vld [vmem:[#allocation2 + $0x38] sm:$0xff]
        %v897 = vld [vmem:[#allocation2 + $0x40] sm:$0xff]
        %v898 = vld [vmem:[#allocation2 + $0x48] sm:$0xff]
        %v899 = vld [vmem:[#allocation2 + $0x50] sm:$0xff]
        %v900 = vld [vmem:[#allocation2 + $0x58] sm:$0xff]
        %v901 = vld [vmem:[#allocation2 + $0x60] sm:$0xff]
        %v902 = vld [vmem:[#allocation2 + $0x68] sm:$0xff]
        %v903 = vld [vmem:[#allocation2 + $0x70] sm:$0xff]
        %v904 = vld [vmem:[#allocation2 + $0x78] sm:$0xff]
        %v905 = vld [vmem:[#allocation2 + $0x80] sm:$0xff]
        %v906 = vld [vmem:[#allocation2 + $0x88] sm:$0xff]
        %v907 = vld [vmem:[#allocation2 + $0x90] sm:$0xff]
        %v908 = vld [vmem:[#allocation2 + $0x98] sm:$0xff]
        %v909 = vld [vmem:[#allocation2 + $0xa0] sm:$0xff]
        %v910 = vld [vmem:[#allocation2 + $0xa8] sm:$0xff]
        %v911 = vld [vmem:[#allocation2 + $0xb0] sm:$0xff]
        %v912 = vld [vmem:[#allocation2 + $0xb8] sm:$0xff]
        %v913 = vld [vmem:[#allocation2 + $0xc0] sm:$0xff]
        %v914 = vld [vmem:[#allocation2 + $0xc8] sm:$0xff]
        %v915 = vld [vmem:[#allocation2 + $0xd0] sm:$0xff]
        %v916 = vld [vmem:[#allocation2 + $0xd8] sm:$0xff]
        %v917 = vld [vmem:[#allocation2 + $0xe0] sm:$0xff]
        %v918 = vld [vmem:[#allocation2 + $0xe8] sm:$0xff]
        %v919 = vld [vmem:[#allocation2 + $0xf0] sm:$0xff]
        %v920 = vld [vmem:[#allocation2 + $0xf8] sm:$0xff]
        %v921 = vld [vmem:[#allocation2 + $0x100] sm:$0xff]
        %v922 = vld [vmem:[#allocation2 + $0x108] sm:$0xff]
        %v923 = vld [vmem:[#allocation2 + $0x110] sm:$0xff]
        %v924 = vld [vmem:[#allocation2 + $0x118] sm:$0xff]
        %v925 = vld [vmem:[#allocation2 + $0x120] sm:$0xff]
        %v926 = vld [vmem:[#allocation2 + $0x128] sm:$0xff]
        %v927 = vld [vmem:[#allocation2 + $0x130] sm:$0xff]
        %v928 = vld [vmem:[#allocation2 + $0x138] sm:$0xff]
        %v929 = vld [vmem:[#allocation2 + $0x140] sm:$0xff]
        %v930 = vld [vmem:[#allocation2 + $0x148] sm:$0xff]
        %v931 = vld [vmem:[#allocation2 + $0x150] sm:$0xff]
        %v932 = vld [vmem:[#allocation2 + $0x158] sm:$0xff]
        %v933 = vld [vmem:[#allocation2 + $0x160] sm:$0xff]
        %v934 = vld [vmem:[#allocation2 + $0x168] sm:$0xff]
        %v935 = vld [vmem:[#allocation2 + $0x170] sm:$0xff]
        %v936 = vld [vmem:[#allocation2 + $0x178] sm:$0xff]
        %v937 = vld [vmem:[#allocation2 + $0x180] sm:$0xff]
        %v938 = vld [vmem:[#allocation2 + $0x188] sm:$0xff]
        %v939 = vld [vmem:[#allocation2 + $0x190] sm:$0xff]
        %v940 = vld [vmem:[#allocation2 + $0x198] sm:$0xff]
        %v941 = vld [vmem:[#allocation2 + $0x1a0] sm:$0xff]
        %v942 = vld [vmem:[#allocation2 + $0x1a8] sm:$0xff]
        %v943 = vld [vmem:[#allocation2 + $0x1b0] sm:$0xff]
        %v944 = vld [vmem:[#allocation2 + $0x1b8] sm:$0xff]
        %v945 = vld [vmem:[#allocation2 + $0x1c0] sm:$0xff]
        %v946 = vld [vmem:[#allocation2 + $0x1c8] sm:$0xff]
        %v947 = vld [vmem:[#allocation2 + $0x1d0] sm:$0xff]
        %v948 = vld [vmem:[#allocation2 + $0x1d8] sm:$0xff]
        %v949 = vld [vmem:[#allocation2 + $0x1e0] sm:$0xff]
        %v950 = vld [vmem:[#allocation2 + $0x1e8] sm:$0xff]
        %v951 = vld [vmem:[#allocation2 + $0x1f0] sm:$0xff]
        %v952 = vld [vmem:[#allocation2 + $0x1f8] sm:$0xff]
        %953 = vmatprep.subr.mxu0 %v950
        %954 = vmatpush1.msra.mxu0 %v949
        %955 = vmatprep.subr.mxu0 %v946
        %956 = vmatpush1.msra.mxu0 %v945
        %957 = vmatprep.subr.mxu0 %v942
        %958 = vmatpush1.msra.mxu0 %v941
        %959 = vmatprep.subr.mxu0 %v938
        %960 = vmatpush1.msra.mxu0 %v937
        %961 = vmatprep.subr.mxu0 %v934
        %962 = vmatpush1.msra.mxu0 %v933
        %963 = vmatprep.subr.mxu0 %v930
        %964 = vmatpush1.msra.mxu0 %v929
        %965 = vmatprep.subr.mxu0 %v926
        %966 = vmatpush1.msra.mxu0 %v925
        %967 = vmatprep.subr.mxu0 %v922
        %968 = vmatpush1.msra.mxu0 %v921
        %969 = vmatprep.subr.mxu0 %v918
        %970 = vmatpush1.msra.mxu0 %v917
        %971 = vmatprep.subr.mxu0 %v914
        %972 = vmatpush1.msra.mxu0 %v913
        %973 = vmatprep.subr.mxu0 %v910
        %974 = vmatpush1.msra.mxu0 %v909
        %975 = vmatprep.subr.mxu0 %v906
        %976 = vmatpush1.msra.mxu0 %v905
        %977 = vmatprep.subr.mxu0 %v902
        %978 = vmatpush1.msra.mxu0 %v901
        %979 = vmatprep.subr.mxu0 %v898
        %980 = vmatpush1.msra.mxu0 %v897
        %981 = vmatprep.subr.mxu0 %v894
        %982 = vmatpush1.msra.mxu0 %v893
        %983 = vmatprep.subr.mxu0 %v890
        %984 = vmatpush1.msra.mxu0 %v889
        %985 = vmatprep.subr.mxu0 0.0
        %986 = vmatpush2.msra.mxu0 0.0
        %987 = vmatprep.subr.mxu0 0.0
        %988 = vmatpush2.msra.mxu0 0.0
        %989 = vmatprep.subr.mxu0 0.0
        %990 = vmatpush2.msra.mxu0 0.0
        %991 = vmatprep.subr.mxu0 0.0
        %992 = vmatpush2.msra.mxu0 0.0
        %993 = vmatprep.subr.mxu0 0.0
        %994 = vmatpush2.msra.mxu0 0.0
        %995 = vmatprep.subr.mxu0 0.0
        %996 = vmatpush2.msra.mxu0 0.0
        %997 = vmatprep.subr.mxu0 0.0
        %998 = vmatpush2.msra.mxu0 0.0
        %999 = vmatprep.subr.mxu0 0.0
        %1000 = vmatpush2.msra.mxu0 0.0
        %1001 = vmatprep.subr.mxu0 0.0
        %1002 = vmatpush2.msra.mxu0 0.0
        %1003 = vmatprep.subr.mxu0 0.0
        %1004 = vmatpush2.msra.mxu0 0.0
        %1005 = vmatprep.subr.mxu0 0.0
        %1006 = vmatpush2.msra.mxu0 0.0
        %1007 = vmatprep.subr.mxu0 0.0
        %1008 = vmatpush2.msra.mxu0 0.0
        %1009 = vmatprep.subr.mxu0 0.0
        %1010 = vmatpush2.msra.mxu0 0.0
        %1011 = vmatprep.subr.mxu0 0.0
        %1012 = vmatpush2.msra.mxu0 0.0
        %1013 = vmatprep.subr.mxu0 0.0
        %1014 = vmatpush2.msra.mxu0 0.0
        %1015 = vmatprep.subr.mxu0 0.0
        %1016 = vmatpush2.msra.mxu0 0.0
        %1017 = vmatprep.mubr.f32.mxu0 0.0
        %1018 = vmatmul.mubr.f32.gmra.mxu0 %v216
        %v1019 = vpop.f32.mrf.mxu0
        %v1020 = vadd.f32 0.0, %v1019
        %v1021 = vpop.f32.mrf.mxu0
        %v1022 = vadd.f32 0.0, %v1021
        %1023 = vmatprep.mubr.f32.mxu0 0.0
        %1024 = vmatmul.mubr.f32.gmra.mxu0 %v217
        %v1025 = vpop.f32.mrf.mxu0
        %v1026 = vpop.f32.mrf.mxu0
        %1027 = vmatprep.mubr.f32.mxu0 0.0
        %1028 = vmatmul.mubr.f32.gmra.mxu0 %v218
        %v1029 = vpop.f32.mrf.mxu0
        %v1030 = vpop.f32.mrf.mxu0
        %1031 = vdwg.mxu0
        %1032 = vmatprep.subr.mxu0 %v952
        %1033 = vmatpush1.msra.mxu0 %v951
        %1034 = vmatprep.subr.mxu0 %v948
        %1035 = vmatpush1.msra.mxu0 %v947
        %1036 = vmatprep.subr.mxu0 %v944
        %1037 = vmatpush1.msra.mxu0 %v943
        %1038 = vmatprep.subr.mxu0 %v940
        %1039 = vmatpush1.msra.mxu0 %v939
        %1040 = vmatprep.subr.mxu0 %v936
        %1041 = vmatpush1.msra.mxu0 %v935
        %1042 = vmatprep.subr.mxu0 %v932
        %1043 = vmatpush1.msra.mxu0 %v931
        %1044 = vmatprep.subr.mxu0 %v928
        %1045 = vmatpush1.msra.mxu0 %v927
        %1046 = vmatprep.subr.mxu0 %v924
        %1047 = vmatpush1.msra.mxu0 %v923
        %1048 = vmatprep.subr.mxu0 %v920
        %1049 = vmatpush1.msra.mxu0 %v919
        %1050 = vmatprep.subr.mxu0 %v916
        %1051 = vmatpush1.msra.mxu0 %v915
        %1052 = vmatprep.subr.mxu0 %v912
        %1053 = vmatpush1.msra.mxu0 %v911
        %1054 = vmatprep.subr.mxu0 %v908
        %1055 = vmatpush1.msra.mxu0 %v907
        %1056 = vmatprep.subr.mxu0 %v904
        %1057 = vmatpush1.msra.mxu0 %v903
        %1058 = vmatprep.subr.mxu0 %v900
        %1059 = vmatpush1.msra.mxu0 %v899
        %1060 = vmatprep.subr.mxu0 %v896
        %1061 = vmatpush1.msra.mxu0 %v895
        %1062 = vmatprep.subr.mxu0 %v892
        %1063 = vmatpush1.msra.mxu0 %v891
        %1064 = vmatprep.subr.mxu0 0.0
        %1065 = vmatpush2.msra.mxu0 0.0
        %1066 = vmatprep.subr.mxu0 0.0
        %1067 = vmatpush2.msra.mxu0 0.0
        %1068 = vmatprep.subr.mxu0 0.0
        %1069 = vmatpush2.msra.mxu0 0.0
        %1070 = vmatprep.subr.mxu0 0.0
        %1071 = vmatpush2.msra.mxu0 0.0
        %1072 = vmatprep.subr.mxu0 0.0
        %1073 = vmatpush2.msra.mxu0 0.0
        %1074 = vmatprep.subr.mxu0 0.0
        %1075 = vmatpush2.msra.mxu0 0.0
        %1076 = vmatprep.subr.mxu0 0.0
        %1077 = vmatpush2.msra.mxu0 0.0
        %1078 = vmatprep.subr.mxu0 0.0
        %1079 = vmatpush2.msra.mxu0 0.0
        %1080 = vmatprep.subr.mxu0 0.0
        %1081 = vmatpush2.msra.mxu0 0.0
        %1082 = vmatprep.subr.mxu0 0.0
        %1083 = vmatpush2.msra.mxu0 0.0
        %1084 = vmatprep.subr.mxu0 0.0
        %1085 = vmatpush2.msra.mxu0 0.0
        %1086 = vmatprep.subr.mxu0 0.0
        %1087 = vmatpush2.msra.mxu0 0.0
        %1088 = vmatprep.subr.mxu0 0.0
        %1089 = vmatpush2.msra.mxu0 0.0
        %1090 = vmatprep.subr.mxu0 0.0
        %1091 = vmatpush2.msra.mxu0 0.0
        %1092 = vmatprep.subr.mxu0 0.0
        %1093 = vmatpush2.msra.mxu0 0.0
        %1094 = vmatprep.subr.mxu0 0.0
        %1095 = vmatpush2.msra.mxu0 0.0
        %1096 = vmatprep.mubr.f32.mxu0 0.0
        %1097 = vmatmul.mubr.f32.gmra.mxu0 %v216
        %v1098 = vpop.f32.mrf.mxu0
        %v1099 = vadd.f32 0.0, %v1098
        %v1100 = vpop.f32.mrf.mxu0
        %v1101 = vadd.f32 0.0, %v1100
        %1102 = vmatprep.mubr.f32.mxu0 0.0
        %1103 = vmatmul.mubr.f32.gmra.mxu0 %v217
        %v1104 = vpop.f32.mrf.mxu0
        %v1105 = vpop.f32.mrf.mxu0
        %1106 = vmatprep.mubr.f32.mxu0 0.0
        %1107 = vmatmul.mubr.f32.gmra.mxu0 %v218
        %v1108 = vpop.f32.mrf.mxu0
        %v1109 = vpop.f32.mrf.mxu0
        %1110 = vdwg.mxu0
        %1112 = vset.pattern.permute.xlu0 0
        %1113 = vperm.xlu0 %1112, %v219
        %v1114 = vpop.permute.xlu0 %1113
        %v1116 = vadd.f32 %v1020, %v1114
        %v1117 = vadd.f32 %v1022, %v1114
        %v1118 = vadd.f32 %v1099, %v1114
        %v1119 = vadd.f32 %v1101, %v1114
        %1120 = vst [vmem:[%s203] sm:$0xff] %v1116
        %1121 = vst [vmem:[%s203 + $0x8] sm:$0xff] %v1117
        %1122 = vst [vmem:[%s203 + $0x10] sm:$0xff] %v1118
        %1123 = vst [vmem:[%s203 + $0x18] sm:$0xff] %v1119
        %s1124 = scalar_lea.vmem %s177, 24 [#allocation3]
        %v1125 = vld [vmem:[%s1124] sm:$0xff]
        %v1126 = vld [vmem:[%s1124 + $0x8] sm:$0xff]
        %v1129 = vcombine.high %v1125, %v1125
        %v1130 = vcombine.high %v1126, %v1126
        %1133 = vrot.lane.b32.xlu0 %v1125, 127
        %v1134 = vpop.permute.xlu0 %1133
        %1135 = vrot.lane.b32.xlu0 %v1129, 127
        %v1136 = vpop.permute.xlu0 %1135
        %1137 = vrot.lane.b32.xlu0 %v1126, 127
        %v1138 = vpop.permute.xlu0 %1137
        %1139 = vrot.lane.b32.xlu0 %v1130, 127
        %v1140 = vpop.permute.xlu0 %1139
        %v1141 = vsel %vm238, %v1138, %v1140
        %v1142 = vsel %vm238, %v1136, %v1138
        %v1143 = vsel %vm238, %v1134, %v1136
        %v1144 = vsel %vm238, %v1140, %v1134
        %v1149 = vrot.slane %v1143, 4
        %v1150 = vrot.slane %v1142, 4
        %v1151 = vrot.slane %v1141, 4
        %v1152 = vrot.slane %v1144, 4
        %v1157 = vsel %vm255, %v1125, %v1149
        %v1158 = vsel %vm255, %v1129, %v1150
        %v1159 = vsel %vm255, %v1126, %v1151
        %v1160 = vsel %vm255, %v1130, %v1152
        %1161 = vst [vmem:[#allocation2] sm:$0xff] %v1157
        %1162 = vst [vmem:[#allocation2 + $0x8] sm:$0xff] %v1158
        %1163 = vst [vmem:[#allocation2 + $0x10] sm:$0xff] %v1159
        %1164 = vst [vmem:[#allocation2 + $0x18] sm:$0xff] %v1160
        %1165 = vrot.lane.b32.xlu0 %v1125, 126
        %v1166 = vpop.permute.xlu0 %1165
        %1167 = vrot.lane.b32.xlu0 %v1129, 126
        %v1168 = vpop.permute.xlu0 %1167
        %1169 = vrot.lane.b32.xlu0 %v1126, 126
        %v1170 = vpop.permute.xlu0 %1169
        %1171 = vrot.lane.b32.xlu0 %v1130, 126
        %v1172 = vpop.permute.xlu0 %1171
        %v1173 = vsel %vm272, %v1170, %v1172
        %v1174 = vsel %vm272, %v1168, %v1170
        %v1175 = vsel %vm272, %v1166, %v1168
        %v1176 = vsel %vm272, %v1172, %v1166
        %1177 = vrot.lane.b32.xlu0 %v1125, 118
        %v1178 = vpop.permute.xlu0 %1177
        %1179 = vrot.lane.b32.xlu0 %v1129, 118
        %v1180 = vpop.permute.xlu0 %1179
        %1181 = vrot.lane.b32.xlu0 %v1126, 118
        %v1182 = vpop.permute.xlu0 %1181
        %1183 = vrot.lane.b32.xlu0 %v1130, 118
        %v1184 = vpop.permute.xlu0 %1183
        %v1185 = vsel %vm285, %v1182, %v1184
        %v1186 = vsel %vm285, %v1180, %v1182
        %v1187 = vsel %vm285, %v1178, %v1180
        %v1188 = vsel %vm285, %v1184, %v1178
        %v1193 = vrot.slane %v1187, 4
        %v1194 = vrot.slane %v1186, 4
        %v1195 = vrot.slane %v1185, 4
        %v1196 = vrot.slane %v1188, 4
        %v1201 = vsel %vm255, %v1175, %v1193
        %v1202 = vsel %vm255, %v1174, %v1194
        %v1203 = vsel %vm255, %v1173, %v1195
        %v1204 = vsel %vm255, %v1176, %v1196
        %1205 = vst [vmem:[#allocation2 + $0x20] sm:$0xff] %v1201
        %1206 = vst [vmem:[#allocation2 + $0x28] sm:$0xff] %v1202
        %1207 = vst [vmem:[#allocation2 + $0x30] sm:$0xff] %v1203
        %1208 = vst [vmem:[#allocation2 + $0x38] sm:$0xff] %v1204
        %1209 = vrot.lane.b32.xlu0 %v1125, 117
        %v1210 = vpop.permute.xlu0 %1209
        %1211 = vrot.lane.b32.xlu0 %v1129, 117
        %v1212 = vpop.permute.xlu0 %1211
        %1213 = vrot.lane.b32.xlu0 %v1126, 117
        %v1214 = vpop.permute.xlu0 %1213
        %1215 = vrot.lane.b32.xlu0 %v1130, 117
        %v1216 = vpop.permute.xlu0 %1215
        %v1217 = vsel %vm318, %v1214, %v1216
        %v1218 = vsel %vm318, %v1212, %v1214
        %v1219 = vsel %vm318, %v1210, %v1212
        %v1220 = vsel %vm318, %v1216, %v1210
        %1221 = vrot.lane.b32.xlu0 %v1125, 116
        %v1222 = vpop.permute.xlu0 %1221
        %1223 = vrot.lane.b32.xlu0 %v1129, 116
        %v1224 = vpop.permute.xlu0 %1223
        %1225 = vrot.lane.b32.xlu0 %v1126, 116
        %v1226 = vpop.permute.xlu0 %1225
        %1227 = vrot.lane.b32.xlu0 %v1130, 116
        %v1228 = vpop.permute.xlu0 %1227
        %v1229 = vsel %vm331, %v1226, %v1228
        %v1230 = vsel %vm331, %v1224, %v1226
        %v1231 = vsel %vm331, %v1222, %v1224
        %v1232 = vsel %vm331, %v1228, %v1222
        %v1237 = vrot.slane %v1231, 4
        %v1238 = vrot.slane %v1230, 4
        %v1239 = vrot.slane %v1229, 4
        %v1240 = vrot.slane %v1232, 4
        %v1245 = vsel %vm255, %v1219, %v1237
        %v1246 = vsel %vm255, %v1218, %v1238
        %v1247 = vsel %vm255, %v1217, %v1239
        %v1248 = vsel %vm255, %v1220, %v1240
        %1249 = vst [vmem:[#allocation2 + $0x40] sm:$0xff] %v1245
        %1250 = vst [vmem:[#allocation2 + $0x48] sm:$0xff] %v1246
        %1251 = vst [vmem:[#allocation2 + $0x50] sm:$0xff] %v1247
        %1252 = vst [vmem:[#allocation2 + $0x58] sm:$0xff] %v1248
        %1253 = vrot.lane.b32.xlu0 %v1125, 108
        %v1254 = vpop.permute.xlu0 %1253
        %1255 = vrot.lane.b32.xlu0 %v1129, 108
        %v1256 = vpop.permute.xlu0 %1255
        %1257 = vrot.lane.b32.xlu0 %v1126, 108
        %v1258 = vpop.permute.xlu0 %1257
        %1259 = vrot.lane.b32.xlu0 %v1130, 108
        %v1260 = vpop.permute.xlu0 %1259
        %v1261 = vsel %vm364, %v1258, %v1260
        %v1262 = vsel %vm364, %v1256, %v1258
        %v1263 = vsel %vm364, %v1254, %v1256
        %v1264 = vsel %vm364, %v1260, %v1254
        %1265 = vrot.lane.b32.xlu0 %v1125, 107
        %v1266 = vpop.permute.xlu0 %1265
        %1267 = vrot.lane.b32.xlu0 %v1129, 107
        %v1268 = vpop.permute.xlu0 %1267
        %1269 = vrot.lane.b32.xlu0 %v1126, 107
        %v1270 = vpop.permute.xlu0 %1269
        %1271 = vrot.lane.b32.xlu0 %v1130, 107
        %v1272 = vpop.permute.xlu0 %1271
        %v1273 = vsel %vm377, %v1270, %v1272
        %v1274 = vsel %vm377, %v1268, %v1270
        %v1275 = vsel %vm377, %v1266, %v1268
        %v1276 = vsel %vm377, %v1272, %v1266
        %v1281 = vrot.slane %v1275, 4
        %v1282 = vrot.slane %v1274, 4
        %v1283 = vrot.slane %v1273, 4
        %v1284 = vrot.slane %v1276, 4
        %v1289 = vsel %vm255, %v1263, %v1281
        %v1290 = vsel %vm255, %v1262, %v1282
        %v1291 = vsel %vm255, %v1261, %v1283
        %v1292 = vsel %vm255, %v1264, %v1284
        %1293 = vst [vmem:[#allocation2 + $0x60] sm:$0xff] %v1289
        %1294 = vst [vmem:[#allocation2 + $0x68] sm:$0xff] %v1290
        %1295 = vst [vmem:[#allocation2 + $0x70] sm:$0xff] %v1291
        %1296 = vst [vmem:[#allocation2 + $0x78] sm:$0xff] %v1292
        %1297 = vrot.lane.b32.xlu0 %v1125, 106
        %v1298 = vpop.permute.xlu0 %1297
        %1299 = vrot.lane.b32.xlu0 %v1129, 106
        %v1300 = vpop.permute.xlu0 %1299
        %1301 = vrot.lane.b32.xlu0 %v1126, 106
        %v1302 = vpop.permute.xlu0 %1301
        %1303 = vrot.lane.b32.xlu0 %v1130, 106
        %v1304 = vpop.permute.xlu0 %1303
        %v1305 = vsel %vm410, %v1302, %v1304
        %v1306 = vsel %vm410, %v1300, %v1302
        %v1307 = vsel %vm410, %v1298, %v1300
        %v1308 = vsel %vm410, %v1304, %v1298
        %v1309 = vld [vmem:[%s1124] sm:$0xff]
        %v1310 = vld [vmem:[%s1124 + $0x8] sm:$0xff]
        %v1311 = vld [vmem:[%s1124 + $0x10] sm:$0xf]
        %v1315 = vcombine.low %v1309, %v1309
        %v1316 = vcombine.low %v1310, %v1310
        %v1317 = vcombine.low %v1311, %v1311
        %1318 = vrot.lane.b32.xlu0 %v1315, 28
        %v1319 = vpop.permute.xlu0 %1318
        %1320 = vrot.lane.b32.xlu0 %v1309, 28
        %v1321 = vpop.permute.xlu0 %1320
        %1322 = vrot.lane.b32.xlu0 %v1316, 28
        %v1323 = vpop.permute.xlu0 %1322
        %1324 = vrot.lane.b32.xlu0 %v1310, 28
        %v1325 = vpop.permute.xlu0 %1324
        %1326 = vrot.lane.b32.xlu0 %v1317, 28
        %v1327 = vpop.permute.xlu0 %1326
        %v1328 = vsel %vm434, %v1319, %v1321
        %v1329 = vsel %vm434, %v1321, %v1323
        %v1330 = vsel %vm434, %v1323, %v1325
        %v1331 = vsel %vm434, %v1325, %v1327
        %v1336 = vsel %vm255, %v1307, %v1328
        %v1337 = vsel %vm255, %v1306, %v1329
        %v1338 = vsel %vm255, %v1305, %v1330
        %v1339 = vsel %vm255, %v1308, %v1331
        %1340 = vst [vmem:[#allocation2 + $0x80] sm:$0xff] %v1336
        %1341 = vst [vmem:[#allocation2 + $0x88] sm:$0xff] %v1337
        %1342 = vst [vmem:[#allocation2 + $0x90] sm:$0xff] %v1338
        %1343 = vst [vmem:[#allocation2 + $0x98] sm:$0xff] %v1339
        %v1344 = vcombine.high %v1309, %v1309
        %v1345 = vcombine.high %v1310, %v1310
        %1346 = vrot.lane.b32.xlu0 %v1344, 28
        %v1347 = vpop.permute.xlu0 %1346
        %1348 = vrot.lane.b32.xlu0 %v1345, 28
        %v1349 = vpop.permute.xlu0 %1348
        %1350 = vrot.lane.b32.xlu0 %v1311, 28
        %v1351 = vpop.permute.xlu0 %1350
        %v1352 = vsel %vm434, %v1321, %v1347
        %v1353 = vsel %vm434, %v1347, %v1325
        %v1354 = vsel %vm434, %v1325, %v1349
        %v1355 = vsel %vm434, %v1349, %v1351
        %1360 = vrot.lane.b32.xlu0 %v1352, 127
        %v1361 = vpop.permute.xlu0 %1360
        %1362 = vrot.lane.b32.xlu0 %v1353, 127
        %v1363 = vpop.permute.xlu0 %1362
        %1364 = vrot.lane.b32.xlu0 %v1354, 127
        %v1365 = vpop.permute.xlu0 %1364
        %1366 = vrot.lane.b32.xlu0 %v1355, 127
        %v1367 = vpop.permute.xlu0 %1366
        %v1368 = vsel %vm238, %v1365, %v1367
        %v1369 = vsel %vm238, %v1363, %v1365
        %v1370 = vsel %vm238, %v1361, %v1363
        %v1371 = vsel %vm238, %v1367, %v1361
        %1372 = vrot.lane.b32.xlu0 %v1352, 126
        %v1373 = vpop.permute.xlu0 %1372
        %1374 = vrot.lane.b32.xlu0 %v1353, 126
        %v1375 = vpop.permute.xlu0 %1374
        %1376 = vrot.lane.b32.xlu0 %v1354, 126
        %v1377 = vpop.permute.xlu0 %1376
        %1378 = vrot.lane.b32.xlu0 %v1355, 126
        %v1379 = vpop.permute.xlu0 %1378
        %v1380 = vsel %vm272, %v1377, %v1379
        %v1381 = vsel %vm272, %v1375, %v1377
        %v1382 = vsel %vm272, %v1373, %v1375
        %v1383 = vsel %vm272, %v1379, %v1373
        %v1388 = vrot.slane %v1382, 4
        %v1389 = vrot.slane %v1381, 4
        %v1390 = vrot.slane %v1380, 4
        %v1391 = vrot.slane %v1383, 4
        %v1396 = vsel %vm255, %v1370, %v1388
        %v1397 = vsel %vm255, %v1369, %v1389
        %v1398 = vsel %vm255, %v1368, %v1390
        %v1399 = vsel %vm255, %v1371, %v1391
        %1400 = vst [vmem:[#allocation2 + $0xa0] sm:$0xff] %v1396
        %1401 = vst [vmem:[#allocation2 + $0xa8] sm:$0xff] %v1397
        %1402 = vst [vmem:[#allocation2 + $0xb0] sm:$0xff] %v1398
        %1403 = vst [vmem:[#allocation2 + $0xb8] sm:$0xff] %v1399
        %1404 = vrot.lane.b32.xlu0 %v1352, 118
        %v1405 = vpop.permute.xlu0 %1404
        %1406 = vrot.lane.b32.xlu0 %v1353, 118
        %v1407 = vpop.permute.xlu0 %1406
        %1408 = vrot.lane.b32.xlu0 %v1354, 118
        %v1409 = vpop.permute.xlu0 %1408
        %1410 = vrot.lane.b32.xlu0 %v1355, 118
        %v1411 = vpop.permute.xlu0 %1410
        %v1412 = vsel %vm285, %v1409, %v1411
        %v1413 = vsel %vm285, %v1407, %v1409
        %v1414 = vsel %vm285, %v1405, %v1407
        %v1415 = vsel %vm285, %v1411, %v1405
        %1416 = vrot.lane.b32.xlu0 %v1352, 117
        %v1417 = vpop.permute.xlu0 %1416
        %1418 = vrot.lane.b32.xlu0 %v1353, 117
        %v1419 = vpop.permute.xlu0 %1418
        %1420 = vrot.lane.b32.xlu0 %v1354, 117
        %v1421 = vpop.permute.xlu0 %1420
        %1422 = vrot.lane.b32.xlu0 %v1355, 117
        %v1423 = vpop.permute.xlu0 %1422
        %v1424 = vsel %vm318, %v1421, %v1423
        %v1425 = vsel %vm318, %v1419, %v1421
        %v1426 = vsel %vm318, %v1417, %v1419
        %v1427 = vsel %vm318, %v1423, %v1417
        %v1432 = vrot.slane %v1426, 4
        %v1433 = vrot.slane %v1425, 4
        %v1434 = vrot.slane %v1424, 4
        %v1435 = vrot.slane %v1427, 4
        %v1440 = vsel %vm255, %v1414, %v1432
        %v1441 = vsel %vm255, %v1413, %v1433
        %v1442 = vsel %vm255, %v1412, %v1434
        %v1443 = vsel %vm255, %v1415, %v1435
        %1444 = vst [vmem:[#allocation2 + $0xc0] sm:$0xff] %v1440
        %1445 = vst [vmem:[#allocation2 + $0xc8] sm:$0xff] %v1441
        %1446 = vst [vmem:[#allocation2 + $0xd0] sm:$0xff] %v1442
        %1447 = vst [vmem:[#allocation2 + $0xd8] sm:$0xff] %v1443
        %1448 = vrot.lane.b32.xlu0 %v1352, 116
        %v1449 = vpop.permute.xlu0 %1448
        %1450 = vrot.lane.b32.xlu0 %v1353, 116
        %v1451 = vpop.permute.xlu0 %1450
        %1452 = vrot.lane.b32.xlu0 %v1354, 116
        %v1453 = vpop.permute.xlu0 %1452
        %1454 = vrot.lane.b32.xlu0 %v1355, 116
        %v1455 = vpop.permute.xlu0 %1454
        %v1456 = vsel %vm331, %v1453, %v1455
        %v1457 = vsel %vm331, %v1451, %v1453
        %v1458 = vsel %vm331, %v1449, %v1451
        %v1459 = vsel %vm331, %v1455, %v1449
        %1460 = vrot.lane.b32.xlu0 %v1352, 108
        %v1461 = vpop.permute.xlu0 %1460
        %1462 = vrot.lane.b32.xlu0 %v1353, 108
        %v1463 = vpop.permute.xlu0 %1462
        %1464 = vrot.lane.b32.xlu0 %v1354, 108
        %v1465 = vpop.permute.xlu0 %1464
        %1466 = vrot.lane.b32.xlu0 %v1355, 108
        %v1467 = vpop.permute.xlu0 %1466
        %v1468 = vsel %vm364, %v1465, %v1467
        %v1469 = vsel %vm364, %v1463, %v1465
        %v1470 = vsel %vm364, %v1461, %v1463
        %v1471 = vsel %vm364, %v1467, %v1461
        %v1476 = vrot.slane %v1470, 4
        %v1477 = vrot.slane %v1469, 4
        %v1478 = vrot.slane %v1468, 4
        %v1479 = vrot.slane %v1471, 4
        %v1484 = vsel %vm255, %v1458, %v1476
        %v1485 = vsel %vm255, %v1457, %v1477
        %v1486 = vsel %vm255, %v1456, %v1478
        %v1487 = vsel %vm255, %v1459, %v1479
        %1488 = vst [vmem:[#allocation2 + $0xe0] sm:$0xff] %v1484
        %1489 = vst [vmem:[#allocation2 + $0xe8] sm:$0xff] %v1485
        %1490 = vst [vmem:[#allocation2 + $0xf0] sm:$0xff] %v1486
        %1491 = vst [vmem:[#allocation2 + $0xf8] sm:$0xff] %v1487
        %1492 = vrot.lane.b32.xlu0 %v1352, 107
        %v1493 = vpop.permute.xlu0 %1492
        %1494 = vrot.lane.b32.xlu0 %v1353, 107
        %v1495 = vpop.permute.xlu0 %1494
        %1496 = vrot.lane.b32.xlu0 %v1354, 107
        %v1497 = vpop.permute.xlu0 %1496
        %1498 = vrot.lane.b32.xlu0 %v1355, 107
        %v1499 = vpop.permute.xlu0 %1498
        %v1500 = vsel %vm377, %v1497, %v1499
        %v1501 = vsel %vm377, %v1495, %v1497
        %v1502 = vsel %vm377, %v1493, %v1495
        %v1503 = vsel %vm377, %v1499, %v1493
        %1504 = vrot.lane.b32.xlu0 %v1352, 106
        %v1505 = vpop.permute.xlu0 %1504
        %1506 = vrot.lane.b32.xlu0 %v1353, 106
        %v1507 = vpop.permute.xlu0 %1506
        %1508 = vrot.lane.b32.xlu0 %v1354, 106
        %v1509 = vpop.permute.xlu0 %1508
        %1510 = vrot.lane.b32.xlu0 %v1355, 106
        %v1511 = vpop.permute.xlu0 %1510
        %v1512 = vsel %vm410, %v1509, %v1511
        %v1513 = vsel %vm410, %v1507, %v1509
        %v1514 = vsel %vm410, %v1505, %v1507
        %v1515 = vsel %vm410, %v1511, %v1505
        %v1520 = vrot.slane %v1514, 4
        %v1521 = vrot.slane %v1513, 4
        %v1522 = vrot.slane %v1512, 4
        %v1523 = vrot.slane %v1515, 4
        %v1528 = vsel %vm255, %v1502, %v1520
        %v1529 = vsel %vm255, %v1501, %v1521
        %v1530 = vsel %vm255, %v1500, %v1522
        %v1531 = vsel %vm255, %v1503, %v1523
        %1532 = vst [vmem:[#allocation2 + $0x100] sm:$0xff] %v1528
        %1533 = vst [vmem:[#allocation2 + $0x108] sm:$0xff] %v1529
        %1534 = vst [vmem:[#allocation2 + $0x110] sm:$0xff] %v1530
        %1535 = vst [vmem:[#allocation2 + $0x118] sm:$0xff] %v1531
        %v1536 = vld [vmem:[%s1124 + $0x4] sm:$0xff]
        %v1537 = vld [vmem:[%s1124 + $0xc] sm:$0xff]
        %v1538 = vld [vmem:[%s1124 + $0x14] sm:$0xf]
        %v1542 = vcombine.high %v1536, %v1536
        %v1543 = vcombine.high %v1537, %v1537
        %1544 = vrot.lane.b32.xlu0 %v1536, 56
        %v1545 = vpop.permute.xlu0 %1544
        %1546 = vrot.lane.b32.xlu0 %v1542, 56
        %v1547 = vpop.permute.xlu0 %1546
        %1548 = vrot.lane.b32.xlu0 %v1537, 56
        %v1549 = vpop.permute.xlu0 %1548
        %1550 = vrot.lane.b32.xlu0 %v1543, 56
        %v1551 = vpop.permute.xlu0 %1550
        %1552 = vrot.lane.b32.xlu0 %v1538, 56
        %v1553 = vpop.permute.xlu0 %1552
        %v1554 = vsel %vm661, %v1545, %v1547
        %v1555 = vsel %vm661, %v1547, %v1549
        %v1556 = vsel %vm661, %v1549, %v1551
        %v1557 = vsel %vm661, %v1551, %v1553
        %1562 = vrot.lane.b32.xlu0 %v1554, 127
        %v1563 = vpop.permute.xlu0 %1562
        %1564 = vrot.lane.b32.xlu0 %v1555, 127
        %v1565 = vpop.permute.xlu0 %1564
        %1566 = vrot.lane.b32.xlu0 %v1556, 127
        %v1567 = vpop.permute.xlu0 %1566
        %1568 = vrot.lane.b32.xlu0 %v1557, 127
        %v1569 = vpop.permute.xlu0 %1568
        %v1570 = vsel %vm238, %v1567, %v1569
        %v1571 = vsel %vm238, %v1565, %v1567
        %v1572 = vsel %vm238, %v1563, %v1565
        %v1573 = vsel %vm238, %v1569, %v1563
        %v1580 = vrot.slane %v1572, 4
        %v1581 = vrot.slane %v1571, 4
        %v1582 = vrot.slane %v1570, 4
        %v1583 = vrot.slane %v1573, 4
        %1584 = vrot.lane.b32.xlu0 %v1580, 72
        %v1585 = vpop.permute.xlu0 %1584
        %1586 = vrot.lane.b32.xlu0 %v1581, 72
        %v1587 = vpop.permute.xlu0 %1586
        %1588 = vrot.lane.b32.xlu0 %v1582, 72
        %v1589 = vpop.permute.xlu0 %1588
        %1590 = vrot.lane.b32.xlu0 %v1583, 72
        %v1591 = vpop.permute.xlu0 %1590
        %v1592 = vsel %vm700, %v1585, %v1587
        %v1593 = vsel %vm700, %v1587, %v1589
        %v1594 = vsel %vm700, %v1589, %v1591
        %v1600 = vsel %vm255, %v1536, %v1585
        %v1601 = vsel %vm255, %v1542, %v1592
        %v1602 = vsel %vm255, %v1537, %v1593
        %v1603 = vsel %vm255, %v1543, %v1594
        %v1604 = vsel %vm255, %v1538, %v1591
        %1610 = vrot.lane.b32.xlu0 %v1600, 56
        %v1611 = vpop.permute.xlu0 %1610
        %1612 = vrot.lane.b32.xlu0 %v1601, 56
        %v1613 = vpop.permute.xlu0 %1612
        %1614 = vrot.lane.b32.xlu0 %v1602, 56
        %v1615 = vpop.permute.xlu0 %1614
        %1616 = vrot.lane.b32.xlu0 %v1603, 56
        %v1617 = vpop.permute.xlu0 %1616
        %1618 = vrot.lane.b32.xlu0 %v1604, 56
        %v1619 = vpop.permute.xlu0 %1618
        %v1620 = vsel %vm661, %v1611, %v1613
        %v1621 = vsel %vm661, %v1613, %v1615
        %v1622 = vsel %vm661, %v1615, %v1617
        %v1623 = vsel %vm661, %v1617, %v1619
        %1628 = vst [vmem:[#allocation2 + $0x120] sm:$0xff] %v1620
        %1629 = vst [vmem:[#allocation2 + $0x128] sm:$0xff] %v1621
        %1630 = vst [vmem:[#allocation2 + $0x130] sm:$0xff] %v1622
        %1631 = vst [vmem:[#allocation2 + $0x138] sm:$0xff] %v1623
        %1632 = vrot.lane.b32.xlu0 %v1554, 126
        %v1633 = vpop.permute.xlu0 %1632
        %1634 = vrot.lane.b32.xlu0 %v1555, 126
        %v1635 = vpop.permute.xlu0 %1634
        %1636 = vrot.lane.b32.xlu0 %v1556, 126
        %v1637 = vpop.permute.xlu0 %1636
        %1638 = vrot.lane.b32.xlu0 %v1557, 126
        %v1639 = vpop.permute.xlu0 %1638
        %v1640 = vsel %vm272, %v1637, %v1639
        %v1641 = vsel %vm272, %v1635, %v1637
        %v1642 = vsel %vm272, %v1633, %v1635
        %v1643 = vsel %vm272, %v1639, %v1633
        %1644 = vrot.lane.b32.xlu0 %v1554, 118
        %v1645 = vpop.permute.xlu0 %1644
        %1646 = vrot.lane.b32.xlu0 %v1555, 118
        %v1647 = vpop.permute.xlu0 %1646
        %1648 = vrot.lane.b32.xlu0 %v1556, 118
        %v1649 = vpop.permute.xlu0 %1648
        %1650 = vrot.lane.b32.xlu0 %v1557, 118
        %v1651 = vpop.permute.xlu0 %1650
        %v1652 = vsel %vm285, %v1649, %v1651
        %v1653 = vsel %vm285, %v1647, %v1649
        %v1654 = vsel %vm285, %v1645, %v1647
        %v1655 = vsel %vm285, %v1651, %v1645
        %v1660 = vrot.slane %v1654, 4
        %v1661 = vrot.slane %v1653, 4
        %v1662 = vrot.slane %v1652, 4
        %v1663 = vrot.slane %v1655, 4
        %v1668 = vsel %vm255, %v1642, %v1660
        %v1669 = vsel %vm255, %v1641, %v1661
        %v1670 = vsel %vm255, %v1640, %v1662
        %v1671 = vsel %vm255, %v1643, %v1663
        %1672 = vst [vmem:[#allocation2 + $0x140] sm:$0xff] %v1668
        %1673 = vst [vmem:[#allocation2 + $0x148] sm:$0xff] %v1669
        %1674 = vst [vmem:[#allocation2 + $0x150] sm:$0xff] %v1670
        %1675 = vst [vmem:[#allocation2 + $0x158] sm:$0xff] %v1671
        %1676 = vrot.lane.b32.xlu0 %v1554, 117
        %v1677 = vpop.permute.xlu0 %1676
        %1678 = vrot.lane.b32.xlu0 %v1555, 117
        %v1679 = vpop.permute.xlu0 %1678
        %1680 = vrot.lane.b32.xlu0 %v1556, 117
        %v1681 = vpop.permute.xlu0 %1680
        %1682 = vrot.lane.b32.xlu0 %v1557, 117
        %v1683 = vpop.permute.xlu0 %1682
        %v1684 = vsel %vm318, %v1681, %v1683
        %v1685 = vsel %vm318, %v1679, %v1681
        %v1686 = vsel %vm318, %v1677, %v1679
        %v1687 = vsel %vm318, %v1683, %v1677
        %1688 = vrot.lane.b32.xlu0 %v1554, 116
        %v1689 = vpop.permute.xlu0 %1688
        %1690 = vrot.lane.b32.xlu0 %v1555, 116
        %v1691 = vpop.permute.xlu0 %1690
        %1692 = vrot.lane.b32.xlu0 %v1556, 116
        %v1693 = vpop.permute.xlu0 %1692
        %1694 = vrot.lane.b32.xlu0 %v1557, 116
        %v1695 = vpop.permute.xlu0 %1694
        %v1696 = vsel %vm331, %v1693, %v1695
        %v1697 = vsel %vm331, %v1691, %v1693
        %v1698 = vsel %vm331, %v1689, %v1691
        %v1699 = vsel %vm331, %v1695, %v1689
        %v1704 = vrot.slane %v1698, 4
        %v1705 = vrot.slane %v1697, 4
        %v1706 = vrot.slane %v1696, 4
        %v1707 = vrot.slane %v1699, 4
        %v1712 = vsel %vm255, %v1686, %v1704
        %v1713 = vsel %vm255, %v1685, %v1705
        %v1714 = vsel %vm255, %v1684, %v1706
        %v1715 = vsel %vm255, %v1687, %v1707
        %1716 = vst [vmem:[#allocation2 + $0x160] sm:$0xff] %v1712
        %1717 = vst [vmem:[#allocation2 + $0x168] sm:$0xff] %v1713
        %1718 = vst [vmem:[#allocation2 + $0x170] sm:$0xff] %v1714
        %1719 = vst [vmem:[#allocation2 + $0x178] sm:$0xff] %v1715
        %1720 = vrot.lane.b32.xlu0 %v1554, 108
        %v1721 = vpop.permute.xlu0 %1720
        %1722 = vrot.lane.b32.xlu0 %v1555, 108
        %v1723 = vpop.permute.xlu0 %1722
        %1724 = vrot.lane.b32.xlu0 %v1556, 108
        %v1725 = vpop.permute.xlu0 %1724
        %1726 = vrot.lane.b32.xlu0 %v1557, 108
        %v1727 = vpop.permute.xlu0 %1726
        %v1728 = vsel %vm364, %v1725, %v1727
        %v1729 = vsel %vm364, %v1723, %v1725
        %v1730 = vsel %vm364, %v1721, %v1723
        %v1731 = vsel %vm364, %v1727, %v1721
        %1732 = vrot.lane.b32.xlu0 %v1554, 107
        %v1733 = vpop.permute.xlu0 %1732
        %1734 = vrot.lane.b32.xlu0 %v1555, 107
        %v1735 = vpop.permute.xlu0 %1734
        %1736 = vrot.lane.b32.xlu0 %v1556, 107
        %v1737 = vpop.permute.xlu0 %1736
        %1738 = vrot.lane.b32.xlu0 %v1557, 107
        %v1739 = vpop.permute.xlu0 %1738
        %v1740 = vsel %vm377, %v1737, %v1739
        %v1741 = vsel %vm377, %v1735, %v1737
        %v1742 = vsel %vm377, %v1733, %v1735
        %v1743 = vsel %vm377, %v1739, %v1733
        %v1748 = vrot.slane %v1742, 4
        %v1749 = vrot.slane %v1741, 4
        %v1750 = vrot.slane %v1740, 4
        %v1751 = vrot.slane %v1743, 4
        %v1756 = vsel %vm255, %v1730, %v1748
        %v1757 = vsel %vm255, %v1729, %v1749
        %v1758 = vsel %vm255, %v1728, %v1750
        %v1759 = vsel %vm255, %v1731, %v1751
        %1760 = vst [vmem:[#allocation2 + $0x180] sm:$0xff] %v1756
        %1761 = vst [vmem:[#allocation2 + $0x188] sm:$0xff] %v1757
        %1762 = vst [vmem:[#allocation2 + $0x190] sm:$0xff] %v1758
        %1763 = vst [vmem:[#allocation2 + $0x198] sm:$0xff] %v1759
        %1764 = vrot.lane.b32.xlu0 %v1554, 106
        %v1765 = vpop.permute.xlu0 %1764
        %1766 = vrot.lane.b32.xlu0 %v1555, 106
        %v1767 = vpop.permute.xlu0 %1766
        %1768 = vrot.lane.b32.xlu0 %v1556, 106
        %v1769 = vpop.permute.xlu0 %1768
        %1770 = vrot.lane.b32.xlu0 %v1557, 106
        %v1771 = vpop.permute.xlu0 %1770
        %v1772 = vsel %vm410, %v1769, %v1771
        %v1773 = vsel %vm410, %v1767, %v1769
        %v1774 = vsel %vm410, %v1765, %v1767
        %v1775 = vsel %vm410, %v1771, %v1765
        %1776 = vst [vmem:[#allocation2 + $0x1a0] sm:$0xf] %v1774
        %1777 = vst [vmem:[#allocation2 + $0x1a8] sm:$0xf] %v1773
        %1778 = vst [vmem:[#allocation2 + $0x1b0] sm:$0xf] %v1772
        %1779 = vst [vmem:[#allocation2 + $0x1b8] sm:$0xf] %v1775
        %v1780 = vld [vmem:[#allocation2] sm:$0xff]
        %v1781 = vld [vmem:[#allocation2 + $0x8] sm:$0xff]
        %v1782 = vld [vmem:[#allocation2 + $0x10] sm:$0xff]
        %v1783 = vld [vmem:[#allocation2 + $0x18] sm:$0xff]
        %v1784 = vld [vmem:[#allocation2 + $0x20] sm:$0xff]
        %v1785 = vld [vmem:[#allocation2 + $0x28] sm:$0xff]
        %v1786 = vld [vmem:[#allocation2 + $0x30] sm:$0xff]
        %v1787 = vld [vmem:[#allocation2 + $0x38] sm:$0xff]
        %v1788 = vld [vmem:[#allocation2 + $0x40] sm:$0xff]
        %v1789 = vld [vmem:[#allocation2 + $0x48] sm:$0xff]
        %v1790 = vld [vmem:[#allocation2 + $0x50] sm:$0xff]
        %v1791 = vld [vmem:[#allocation2 + $0x58] sm:$0xff]
        %v1792 = vld [vmem:[#allocation2 + $0x60] sm:$0xff]
        %v1793 = vld [vmem:[#allocation2 + $0x68] sm:$0xff]
        %v1794 = vld [vmem:[#allocation2 + $0x70] sm:$0xff]
        %v1795 = vld [vmem:[#allocation2 + $0x78] sm:$0xff]
        %v1796 = vld [vmem:[#allocation2 + $0x80] sm:$0xff]
        %v1797 = vld [vmem:[#allocation2 + $0x88] sm:$0xff]
        %v1798 = vld [vmem:[#allocation2 + $0x90] sm:$0xff]
        %v1799 = vld [vmem:[#allocation2 + $0x98] sm:$0xff]
        %v1800 = vld [vmem:[#allocation2 + $0xa0] sm:$0xff]
        %v1801 = vld [vmem:[#allocation2 + $0xa8] sm:$0xff]
        %v1802 = vld [vmem:[#allocation2 + $0xb0] sm:$0xff]
        %v1803 = vld [vmem:[#allocation2 + $0xb8] sm:$0xff]
        %v1804 = vld [vmem:[#allocation2 + $0xc0] sm:$0xff]
        %v1805 = vld [vmem:[#allocation2 + $0xc8] sm:$0xff]
        %v1806 = vld [vmem:[#allocation2 + $0xd0] sm:$0xff]
        %v1807 = vld [vmem:[#allocation2 + $0xd8] sm:$0xff]
        %v1808 = vld [vmem:[#allocation2 + $0xe0] sm:$0xff]
        %v1809 = vld [vmem:[#allocation2 + $0xe8] sm:$0xff]
        %v1810 = vld [vmem:[#allocation2 + $0xf0] sm:$0xff]
        %v1811 = vld [vmem:[#allocation2 + $0xf8] sm:$0xff]
        %v1812 = vld [vmem:[#allocation2 + $0x100] sm:$0xff]
        %v1813 = vld [vmem:[#allocation2 + $0x108] sm:$0xff]
        %v1814 = vld [vmem:[#allocation2 + $0x110] sm:$0xff]
        %v1815 = vld [vmem:[#allocation2 + $0x118] sm:$0xff]
        %v1816 = vld [vmem:[#allocation2 + $0x120] sm:$0xff]
        %v1817 = vld [vmem:[#allocation2 + $0x128] sm:$0xff]
        %v1818 = vld [vmem:[#allocation2 + $0x130] sm:$0xff]
        %v1819 = vld [vmem:[#allocation2 + $0x138] sm:$0xff]
        %v1820 = vld [vmem:[#allocation2 + $0x140] sm:$0xff]
        %v1821 = vld [vmem:[#allocation2 + $0x148] sm:$0xff]
        %v1822 = vld [vmem:[#allocation2 + $0x150] sm:$0xff]
        %v1823 = vld [vmem:[#allocation2 + $0x158] sm:$0xff]
        %v1824 = vld [vmem:[#allocation2 + $0x160] sm:$0xff]
        %v1825 = vld [vmem:[#allocation2 + $0x168] sm:$0xff]
        %v1826 = vld [vmem:[#allocation2 + $0x170] sm:$0xff]
        %v1827 = vld [vmem:[#allocation2 + $0x178] sm:$0xff]
        %v1828 = vld [vmem:[#allocation2 + $0x180] sm:$0xff]
        %v1829 = vld [vmem:[#allocation2 + $0x188] sm:$0xff]
        %v1830 = vld [vmem:[#allocation2 + $0x190] sm:$0xff]
        %v1831 = vld [vmem:[#allocation2 + $0x198] sm:$0xff]
        %v1832 = vld [vmem:[#allocation2 + $0x1a0] sm:$0xff]
        %v1833 = vld [vmem:[#allocation2 + $0x1a8] sm:$0xff]
        %v1834 = vld [vmem:[#allocation2 + $0x1b0] sm:$0xff]
        %v1835 = vld [vmem:[#allocation2 + $0x1b8] sm:$0xff]
        %v1836 = vld [vmem:[#allocation2 + $0x1c0] sm:$0xff]
        %v1837 = vld [vmem:[#allocation2 + $0x1c8] sm:$0xff]
        %v1838 = vld [vmem:[#allocation2 + $0x1d0] sm:$0xff]
        %v1839 = vld [vmem:[#allocation2 + $0x1d8] sm:$0xff]
        %v1840 = vld [vmem:[#allocation2 + $0x1e0] sm:$0xff]
        %v1841 = vld [vmem:[#allocation2 + $0x1e8] sm:$0xff]
        %v1842 = vld [vmem:[#allocation2 + $0x1f0] sm:$0xff]
        %v1843 = vld [vmem:[#allocation2 + $0x1f8] sm:$0xff]
        %1844 = vmatprep.subr.mxu0 %v1841
        %1845 = vmatpush1.msra.mxu0 %v1840
        %1846 = vmatprep.subr.mxu0 %v1837
        %1847 = vmatpush1.msra.mxu0 %v1836
        %1848 = vmatprep.subr.mxu0 %v1833
        %1849 = vmatpush1.msra.mxu0 %v1832
        %1850 = vmatprep.subr.mxu0 %v1829
        %1851 = vmatpush1.msra.mxu0 %v1828
        %1852 = vmatprep.subr.mxu0 %v1825
        %1853 = vmatpush1.msra.mxu0 %v1824
        %1854 = vmatprep.subr.mxu0 %v1821
        %1855 = vmatpush1.msra.mxu0 %v1820
        %1856 = vmatprep.subr.mxu0 %v1817
        %1857 = vmatpush1.msra.mxu0 %v1816
        %1858 = vmatprep.subr.mxu0 %v1813
        %1859 = vmatpush1.msra.mxu0 %v1812
        %1860 = vmatprep.subr.mxu0 %v1809
        %1861 = vmatpush1.msra.mxu0 %v1808
        %1862 = vmatprep.subr.mxu0 %v1805
        %1863 = vmatpush1.msra.mxu0 %v1804
        %1864 = vmatprep.subr.mxu0 %v1801
        %1865 = vmatpush1.msra.mxu0 %v1800
        %1866 = vmatprep.subr.mxu0 %v1797
        %1867 = vmatpush1.msra.mxu0 %v1796
        %1868 = vmatprep.subr.mxu0 %v1793
        %1869 = vmatpush1.msra.mxu0 %v1792
        %1870 = vmatprep.subr.mxu0 %v1789
        %1871 = vmatpush1.msra.mxu0 %v1788
        %1872 = vmatprep.subr.mxu0 %v1785
        %1873 = vmatpush1.msra.mxu0 %v1784
        %1874 = vmatprep.subr.mxu0 %v1781
        %1875 = vmatpush1.msra.mxu0 %v1780
        %1876 = vmatprep.subr.mxu0 0.0
        %1877 = vmatpush2.msra.mxu0 0.0
        %1878 = vmatprep.subr.mxu0 0.0
        %1879 = vmatpush2.msra.mxu0 0.0
        %1880 = vmatprep.subr.mxu0 0.0
        %1881 = vmatpush2.msra.mxu0 0.0
        %1882 = vmatprep.subr.mxu0 0.0
        %1883 = vmatpush2.msra.mxu0 0.0
        %1884 = vmatprep.subr.mxu0 0.0
        %1885 = vmatpush2.msra.mxu0 0.0
        %1886 = vmatprep.subr.mxu0 0.0
        %1887 = vmatpush2.msra.mxu0 0.0
        %1888 = vmatprep.subr.mxu0 0.0
        %1889 = vmatpush2.msra.mxu0 0.0
        %1890 = vmatprep.subr.mxu0 0.0
        %1891 = vmatpush2.msra.mxu0 0.0
        %1892 = vmatprep.subr.mxu0 0.0
        %1893 = vmatpush2.msra.mxu0 0.0
        %1894 = vmatprep.subr.mxu0 0.0
        %1895 = vmatpush2.msra.mxu0 0.0
        %1896 = vmatprep.subr.mxu0 0.0
        %1897 = vmatpush2.msra.mxu0 0.0
        %1898 = vmatprep.subr.mxu0 0.0
        %1899 = vmatpush2.msra.mxu0 0.0
        %1900 = vmatprep.subr.mxu0 0.0
        %1901 = vmatpush2.msra.mxu0 0.0
        %1902 = vmatprep.subr.mxu0 0.0
        %1903 = vmatpush2.msra.mxu0 0.0
        %1904 = vmatprep.subr.mxu0 0.0
        %1905 = vmatpush2.msra.mxu0 0.0
        %1906 = vmatprep.subr.mxu0 0.0
        %1907 = vmatpush2.msra.mxu0 0.0
        %1908 = vmatprep.mubr.f32.mxu0 0.0
        %1909 = vmatmul.mubr.f32.gmra.mxu0 %v216
        %v1910 = vpop.f32.mrf.mxu0
        %v1911 = vadd.f32 0.0, %v1910
        %v1912 = vpop.f32.mrf.mxu0
        %v1913 = vadd.f32 0.0, %v1912
        %1914 = vmatprep.mubr.f32.mxu0 0.0
        %1915 = vmatmul.mubr.f32.gmra.mxu0 %v217
        %v1916 = vpop.f32.mrf.mxu0
        %v1917 = vadd.f32 0.0, %v1916
        %v1918 = vpop.f32.mrf.mxu0
        %v1919 = vadd.f32 0.0, %v1918
        %1920 = vmatprep.mubr.f32.mxu0 0.0
        %1921 = vmatmul.mubr.f32.gmra.mxu0 %v218
        %v1922 = vpop.f32.mrf.mxu0
        %v1923 = vpop.f32.mrf.mxu0
        %1924 = vdwg.mxu0
        %1925 = vmatprep.subr.mxu0 %v1843
        %1926 = vmatpush1.msra.mxu0 %v1842
        %1927 = vmatprep.subr.mxu0 %v1839
        %1928 = vmatpush1.msra.mxu0 %v1838
        %1929 = vmatprep.subr.mxu0 %v1835
        %1930 = vmatpush1.msra.mxu0 %v1834
        %1931 = vmatprep.subr.mxu0 %v1831
        %1932 = vmatpush1.msra.mxu0 %v1830
        %1933 = vmatprep.subr.mxu0 %v1827
        %1934 = vmatpush1.msra.mxu0 %v1826
        %1935 = vmatprep.subr.mxu0 %v1823
        %1936 = vmatpush1.msra.mxu0 %v1822
        %1937 = vmatprep.subr.mxu0 %v1819
        %1938 = vmatpush1.msra.mxu0 %v1818
        %1939 = vmatprep.subr.mxu0 %v1815
        %1940 = vmatpush1.msra.mxu0 %v1814
        %1941 = vmatprep.subr.mxu0 %v1811
        %1942 = vmatpush1.msra.mxu0 %v1810
        %1943 = vmatprep.subr.mxu0 %v1807
        %1944 = vmatpush1.msra.mxu0 %v1806
        %1945 = vmatprep.subr.mxu0 %v1803
        %1946 = vmatpush1.msra.mxu0 %v1802
        %1947 = vmatprep.subr.mxu0 %v1799
        %1948 = vmatpush1.msra.mxu0 %v1798
        %1949 = vmatprep.subr.mxu0 %v1795
        %1950 = vmatpush1.msra.mxu0 %v1794
        %1951 = vmatprep.subr.mxu0 %v1791
        %1952 = vmatpush1.msra.mxu0 %v1790
        %1953 = vmatprep.subr.mxu0 %v1787
        %1954 = vmatpush1.msra.mxu0 %v1786
        %1955 = vmatprep.subr.mxu0 %v1783
        %1956 = vmatpush1.msra.mxu0 %v1782
        %1957 = vmatprep.subr.mxu0 0.0
        %1958 = vmatpush2.msra.mxu0 0.0
        %1959 = vmatprep.subr.mxu0 0.0
        %1960 = vmatpush2.msra.mxu0 0.0
        %1961 = vmatprep.subr.mxu0 0.0
        %1962 = vmatpush2.msra.mxu0 0.0
        %1963 = vmatprep.subr.mxu0 0.0
        %1964 = vmatpush2.msra.mxu0 0.0
        %1965 = vmatprep.subr.mxu0 0.0
        %1966 = vmatpush2.msra.mxu0 0.0
        %1967 = vmatprep.subr.mxu0 0.0
        %1968 = vmatpush2.msra.mxu0 0.0
        %1969 = vmatprep.subr.mxu0 0.0
        %1970 = vmatpush2.msra.mxu0 0.0
        %1971 = vmatprep.subr.mxu0 0.0
        %1972 = vmatpush2.msra.mxu0 0.0
        %1973 = vmatprep.subr.mxu0 0.0
        %1974 = vmatpush2.msra.mxu0 0.0
        %1975 = vmatprep.subr.mxu0 0.0
        %1976 = vmatpush2.msra.mxu0 0.0
        %1977 = vmatprep.subr.mxu0 0.0
        %1978 = vmatpush2.msra.mxu0 0.0
        %1979 = vmatprep.subr.mxu0 0.0
        %1980 = vmatpush2.msra.mxu0 0.0
        %1981 = vmatprep.subr.mxu0 0.0
        %1982 = vmatpush2.msra.mxu0 0.0
        %1983 = vmatprep.subr.mxu0 0.0
        %1984 = vmatpush2.msra.mxu0 0.0
        %1985 = vmatprep.subr.mxu0 0.0
        %1986 = vmatpush2.msra.mxu0 0.0
        %1987 = vmatprep.subr.mxu0 0.0
        %1988 = vmatpush2.msra.mxu0 0.0
        %1989 = vmatprep.mubr.f32.mxu0 0.0
        %1990 = vmatmul.mubr.f32.gmra.mxu0 %v216
        %v1991 = vpop.f32.mrf.mxu0
        %v1992 = vadd.f32 0.0, %v1991
        %v1993 = vpop.f32.mrf.mxu0
        %v1994 = vadd.f32 0.0, %v1993
        %1995 = vmatprep.mubr.f32.mxu0 0.0
        %1996 = vmatmul.mubr.f32.gmra.mxu0 %v217
        %v1997 = vpop.f32.mrf.mxu0
        %v1998 = vadd.f32 0.0, %v1997
        %v1999 = vpop.f32.mrf.mxu0
        %v2000 = vadd.f32 0.0, %v1999
        %2001 = vmatprep.mubr.f32.mxu0 0.0
        %2002 = vmatmul.mubr.f32.gmra.mxu0 %v218
        %v2003 = vpop.f32.mrf.mxu0
        %v2004 = vpop.f32.mrf.mxu0
        %2005 = vdwg.mxu0
        %v2006 = vadd.f32 %v1911, %v1114
        %v2007 = vadd.f32 %v1913, %v1114
        %v2008 = vadd.f32 %v1992, %v1114
        %v2009 = vadd.f32 %v1994, %v1114
        %s2010 = scalar_lea.vmem %s203, 32 [#allocation8]
        %2011 = vst [vmem:[%s2010] sm:$0xff] %v2006
        %2012 = vst [vmem:[%s2010 + $0x8] sm:$0xff] %v2007
        %2013 = vst [vmem:[%s2010 + $0x10] sm:$0xff] %v2008
        %2014 = vst [vmem:[%s2010 + $0x18] sm:$0xff] %v2009
        %v2015 = vld [vmem:[%s203] sm:$0xff]
        %v2016 = vld [vmem:[%s203 + $0x8] sm:$0xff]
        %v2017 = vld [vmem:[%s203 + $0x10] sm:$0xff]
        %v2018 = vld [vmem:[%s203 + $0x18] sm:$0xff]
        %v2019 = vadd.f32 %v2015, %v1917
        %v2020 = vadd.f32 %v2016, %v1919
        %v2021 = vadd.f32 %v2017, %v1998
        %v2022 = vadd.f32 %v2018, %v2000
        %2023 = vst [vmem:[%s203] sm:$0xff] %v2019
        %2024 = vst [vmem:[%s203 + $0x8] sm:$0xff] %v2020
        %2025 = vst [vmem:[%s203 + $0x10] sm:$0xff] %v2021
        %2026 = vst [vmem:[%s203 + $0x18] sm:$0xff] %v2022
        %s2027 = scalar_lea.vmem %s177, 48 [#allocation3]
        %v2028 = vld [vmem:[%s2027] sm:$0xff]
        %v2029 = vld [vmem:[%s2027 + $0x8] sm:$0xff]
        %v2032 = vcombine.high %v2028, %v2028
        %v2033 = vcombine.high %v2029, %v2029
        %2036 = vrot.lane.b32.xlu0 %v2028, 127
        %v2037 = vpop.permute.xlu0 %2036
        %2038 = vrot.lane.b32.xlu0 %v2032, 127
        %v2039 = vpop.permute.xlu0 %2038
        %2040 = vrot.lane.b32.xlu0 %v2029, 127
        %v2041 = vpop.permute.xlu0 %2040
        %2042 = vrot.lane.b32.xlu0 %v2033, 127
        %v2043 = vpop.permute.xlu0 %2042
        %v2044 = vsel %vm238, %v2041, %v2043
        %v2045 = vsel %vm238, %v2039, %v2041
        %v2046 = vsel %vm238, %v2037, %v2039
        %v2047 = vsel %vm238, %v2043, %v2037
        %v2052 = vrot.slane %v2046, 4
        %v2053 = vrot.slane %v2045, 4
        %v2054 = vrot.slane %v2044, 4
        %v2055 = vrot.slane %v2047, 4
        %v2060 = vsel %vm255, %v2028, %v2052
        %v2061 = vsel %vm255, %v2032, %v2053
        %v2062 = vsel %vm255, %v2029, %v2054
        %v2063 = vsel %vm255, %v2033, %v2055
        %2064 = vst [vmem:[#allocation2] sm:$0xff] %v2060
        %2065 = vst [vmem:[#allocation2 + $0x8] sm:$0xff] %v2061
        %2066 = vst [vmem:[#allocation2 + $0x10] sm:$0xff] %v2062
        %2067 = vst [vmem:[#allocation2 + $0x18] sm:$0xff] %v2063
        %2068 = vrot.lane.b32.xlu0 %v2028, 126
        %v2069 = vpop.permute.xlu0 %2068
        %2070 = vrot.lane.b32.xlu0 %v2032, 126
        %v2071 = vpop.permute.xlu0 %2070
        %2072 = vrot.lane.b32.xlu0 %v2029, 126
        %v2073 = vpop.permute.xlu0 %2072
        %2074 = vrot.lane.b32.xlu0 %v2033, 126
        %v2075 = vpop.permute.xlu0 %2074
        %v2076 = vsel %vm272, %v2073, %v2075
        %v2077 = vsel %vm272, %v2071, %v2073
        %v2078 = vsel %vm272, %v2069, %v2071
        %v2079 = vsel %vm272, %v2075, %v2069
        %2080 = vrot.lane.b32.xlu0 %v2028, 118
        %v2081 = vpop.permute.xlu0 %2080
        %2082 = vrot.lane.b32.xlu0 %v2032, 118
        %v2083 = vpop.permute.xlu0 %2082
        %2084 = vrot.lane.b32.xlu0 %v2029, 118
        %v2085 = vpop.permute.xlu0 %2084
        %2086 = vrot.lane.b32.xlu0 %v2033, 118
        %v2087 = vpop.permute.xlu0 %2086
        %v2088 = vsel %vm285, %v2085, %v2087
        %v2089 = vsel %vm285, %v2083, %v2085
        %v2090 = vsel %vm285, %v2081, %v2083
        %v2091 = vsel %vm285, %v2087, %v2081
        %v2096 = vrot.slane %v2090, 4
        %v2097 = vrot.slane %v2089, 4
        %v2098 = vrot.slane %v2088, 4
        %v2099 = vrot.slane %v2091, 4
        %v2104 = vsel %vm255, %v2078, %v2096
        %v2105 = vsel %vm255, %v2077, %v2097
        %v2106 = vsel %vm255, %v2076, %v2098
        %v2107 = vsel %vm255, %v2079, %v2099
        %2108 = vst [vmem:[#allocation2 + $0x20] sm:$0xff] %v2104
        %2109 = vst [vmem:[#allocation2 + $0x28] sm:$0xff] %v2105
        %2110 = vst [vmem:[#allocation2 + $0x30] sm:$0xff] %v2106
        %2111 = vst [vmem:[#allocation2 + $0x38] sm:$0xff] %v2107
        %2112 = vrot.lane.b32.xlu0 %v2028, 117
        %v2113 = vpop.permute.xlu0 %2112
        %2114 = vrot.lane.b32.xlu0 %v2032, 117
        %v2115 = vpop.permute.xlu0 %2114
        %2116 = vrot.lane.b32.xlu0 %v2029, 117
        %v2117 = vpop.permute.xlu0 %2116
        %2118 = vrot.lane.b32.xlu0 %v2033, 117
        %v2119 = vpop.permute.xlu0 %2118
        %v2120 = vsel %vm318, %v2117, %v2119
        %v2121 = vsel %vm318, %v2115, %v2117
        %v2122 = vsel %vm318, %v2113, %v2115
        %v2123 = vsel %vm318, %v2119, %v2113
        %2124 = vrot.lane.b32.xlu0 %v2028, 116
        %v2125 = vpop.permute.xlu0 %2124
        %2126 = vrot.lane.b32.xlu0 %v2032, 116
        %v2127 = vpop.permute.xlu0 %2126
        %2128 = vrot.lane.b32.xlu0 %v2029, 116
        %v2129 = vpop.permute.xlu0 %2128
        %2130 = vrot.lane.b32.xlu0 %v2033, 116
        %v2131 = vpop.permute.xlu0 %2130
        %v2132 = vsel %vm331, %v2129, %v2131
        %v2133 = vsel %vm331, %v2127, %v2129
        %v2134 = vsel %vm331, %v2125, %v2127
        %v2135 = vsel %vm331, %v2131, %v2125
        %v2140 = vrot.slane %v2134, 4
        %v2141 = vrot.slane %v2133, 4
        %v2142 = vrot.slane %v2132, 4
        %v2143 = vrot.slane %v2135, 4
        %v2148 = vsel %vm255, %v2122, %v2140
        %v2149 = vsel %vm255, %v2121, %v2141
        %v2150 = vsel %vm255, %v2120, %v2142
        %v2151 = vsel %vm255, %v2123, %v2143
        %2152 = vst [vmem:[#allocation2 + $0x40] sm:$0xff] %v2148
        %2153 = vst [vmem:[#allocation2 + $0x48] sm:$0xff] %v2149
        %2154 = vst [vmem:[#allocation2 + $0x50] sm:$0xff] %v2150
        %2155 = vst [vmem:[#allocation2 + $0x58] sm:$0xff] %v2151
        %2156 = vrot.lane.b32.xlu0 %v2028, 108
        %v2157 = vpop.permute.xlu0 %2156
        %2158 = vrot.lane.b32.xlu0 %v2032, 108
        %v2159 = vpop.permute.xlu0 %2158
        %2160 = vrot.lane.b32.xlu0 %v2029, 108
        %v2161 = vpop.permute.xlu0 %2160
        %2162 = vrot.lane.b32.xlu0 %v2033, 108
        %v2163 = vpop.permute.xlu0 %2162
        %v2164 = vsel %vm364, %v2161, %v2163
        %v2165 = vsel %vm364, %v2159, %v2161
        %v2166 = vsel %vm364, %v2157, %v2159
        %v2167 = vsel %vm364, %v2163, %v2157
        %2168 = vrot.lane.b32.xlu0 %v2028, 107
        %v2169 = vpop.permute.xlu0 %2168
        %2170 = vrot.lane.b32.xlu0 %v2032, 107
        %v2171 = vpop.permute.xlu0 %2170
        %2172 = vrot.lane.b32.xlu0 %v2029, 107
        %v2173 = vpop.permute.xlu0 %2172
        %2174 = vrot.lane.b32.xlu0 %v2033, 107
        %v2175 = vpop.permute.xlu0 %2174
        %v2176 = vsel %vm377, %v2173, %v2175
        %v2177 = vsel %vm377, %v2171, %v2173
        %v2178 = vsel %vm377, %v2169, %v2171
        %v2179 = vsel %vm377, %v2175, %v2169
        %v2184 = vrot.slane %v2178, 4
        %v2185 = vrot.slane %v2177, 4
        %v2186 = vrot.slane %v2176, 4
        %v2187 = vrot.slane %v2179, 4
        %v2192 = vsel %vm255, %v2166, %v2184
        %v2193 = vsel %vm255, %v2165, %v2185
        %v2194 = vsel %vm255, %v2164, %v2186
        %v2195 = vsel %vm255, %v2167, %v2187
        %2196 = vst [vmem:[#allocation2 + $0x60] sm:$0xff] %v2192
        %2197 = vst [vmem:[#allocation2 + $0x68] sm:$0xff] %v2193
        %2198 = vst [vmem:[#allocation2 + $0x70] sm:$0xff] %v2194
        %2199 = vst [vmem:[#allocation2 + $0x78] sm:$0xff] %v2195
        %2200 = vrot.lane.b32.xlu0 %v2028, 106
        %v2201 = vpop.permute.xlu0 %2200
        %2202 = vrot.lane.b32.xlu0 %v2032, 106
        %v2203 = vpop.permute.xlu0 %2202
        %2204 = vrot.lane.b32.xlu0 %v2029, 106
        %v2205 = vpop.permute.xlu0 %2204
        %2206 = vrot.lane.b32.xlu0 %v2033, 106
        %v2207 = vpop.permute.xlu0 %2206
        %v2208 = vsel %vm410, %v2205, %v2207
        %v2209 = vsel %vm410, %v2203, %v2205
        %v2210 = vsel %vm410, %v2201, %v2203
        %v2211 = vsel %vm410, %v2207, %v2201
        %v2212 = vld [vmem:[%s2027] sm:$0xff]
        %v2213 = vld [vmem:[%s2027 + $0x8] sm:$0xff]
        %v2214 = vld [vmem:[%s2027 + $0x10] sm:$0xf]
        %v2218 = vcombine.low %v2212, %v2212
        %v2219 = vcombine.low %v2213, %v2213
        %v2220 = vcombine.low %v2214, %v2214
        %2221 = vrot.lane.b32.xlu0 %v2218, 28
        %v2222 = vpop.permute.xlu0 %2221
        %2223 = vrot.lane.b32.xlu0 %v2212, 28
        %v2224 = vpop.permute.xlu0 %2223
        %2225 = vrot.lane.b32.xlu0 %v2219, 28
        %v2226 = vpop.permute.xlu0 %2225
        %2227 = vrot.lane.b32.xlu0 %v2213, 28
        %v2228 = vpop.permute.xlu0 %2227
        %2229 = vrot.lane.b32.xlu0 %v2220, 28
        %v2230 = vpop.permute.xlu0 %2229
        %v2231 = vsel %vm434, %v2222, %v2224
        %v2232 = vsel %vm434, %v2224, %v2226
        %v2233 = vsel %vm434, %v2226, %v2228
        %v2234 = vsel %vm434, %v2228, %v2230
        %v2239 = vsel %vm255, %v2210, %v2231
        %v2240 = vsel %vm255, %v2209, %v2232
        %v2241 = vsel %vm255, %v2208, %v2233
        %v2242 = vsel %vm255, %v2211, %v2234
        %2243 = vst [vmem:[#allocation2 + $0x80] sm:$0xff] %v2239
        %2244 = vst [vmem:[#allocation2 + $0x88] sm:$0xff] %v2240
        %2245 = vst [vmem:[#allocation2 + $0x90] sm:$0xff] %v2241
        %2246 = vst [vmem:[#allocation2 + $0x98] sm:$0xff] %v2242
        %v2247 = vcombine.high %v2212, %v2212
        %v2248 = vcombine.high %v2213, %v2213
        %2249 = vrot.lane.b32.xlu0 %v2247, 28
        %v2250 = vpop.permute.xlu0 %2249
        %2251 = vrot.lane.b32.xlu0 %v2248, 28
        %v2252 = vpop.permute.xlu0 %2251
        %2253 = vrot.lane.b32.xlu0 %v2214, 28
        %v2254 = vpop.permute.xlu0 %2253
        %v2255 = vsel %vm434, %v2224, %v2250
        %v2256 = vsel %vm434, %v2250, %v2228
        %v2257 = vsel %vm434, %v2228, %v2252
        %v2258 = vsel %vm434, %v2252, %v2254
        %2263 = vrot.lane.b32.xlu0 %v2255, 127
        %v2264 = vpop.permute.xlu0 %2263
        %2265 = vrot.lane.b32.xlu0 %v2256, 127
        %v2266 = vpop.permute.xlu0 %2265
        %2267 = vrot.lane.b32.xlu0 %v2257, 127
        %v2268 = vpop.permute.xlu0 %2267
        %2269 = vrot.lane.b32.xlu0 %v2258, 127
        %v2270 = vpop.permute.xlu0 %2269
        %v2271 = vsel %vm238, %v2268, %v2270
        %v2272 = vsel %vm238, %v2266, %v2268
        %v2273 = vsel %vm238, %v2264, %v2266
        %v2274 = vsel %vm238, %v2270, %v2264
        %2275 = vrot.lane.b32.xlu0 %v2255, 126
        %v2276 = vpop.permute.xlu0 %2275
        %2277 = vrot.lane.b32.xlu0 %v2256, 126
        %v2278 = vpop.permute.xlu0 %2277
        %2279 = vrot.lane.b32.xlu0 %v2257, 126
        %v2280 = vpop.permute.xlu0 %2279
        %2281 = vrot.lane.b32.xlu0 %v2258, 126
        %v2282 = vpop.permute.xlu0 %2281
        %v2283 = vsel %vm272, %v2280, %v2282
        %v2284 = vsel %vm272, %v2278, %v2280
        %v2285 = vsel %vm272, %v2276, %v2278
        %v2286 = vsel %vm272, %v2282, %v2276
        %v2291 = vrot.slane %v2285, 4
        %v2292 = vrot.slane %v2284, 4
        %v2293 = vrot.slane %v2283, 4
        %v2294 = vrot.slane %v2286, 4
        %v2299 = vsel %vm255, %v2273, %v2291
        %v2300 = vsel %vm255, %v2272, %v2292
        %v2301 = vsel %vm255, %v2271, %v2293
        %v2302 = vsel %vm255, %v2274, %v2294
        %2303 = vst [vmem:[#allocation2 + $0xa0] sm:$0xff] %v2299
        %2304 = vst [vmem:[#allocation2 + $0xa8] sm:$0xff] %v2300
        %2305 = vst [vmem:[#allocation2 + $0xb0] sm:$0xff] %v2301
        %2306 = vst [vmem:[#allocation2 + $0xb8] sm:$0xff] %v2302
        %2307 = vrot.lane.b32.xlu0 %v2255, 118
        %v2308 = vpop.permute.xlu0 %2307
        %2309 = vrot.lane.b32.xlu0 %v2256, 118
        %v2310 = vpop.permute.xlu0 %2309
        %2311 = vrot.lane.b32.xlu0 %v2257, 118
        %v2312 = vpop.permute.xlu0 %2311
        %2313 = vrot.lane.b32.xlu0 %v2258, 118
        %v2314 = vpop.permute.xlu0 %2313
        %v2315 = vsel %vm285, %v2312, %v2314
        %v2316 = vsel %vm285, %v2310, %v2312
        %v2317 = vsel %vm285, %v2308, %v2310
        %v2318 = vsel %vm285, %v2314, %v2308
        %2319 = vrot.lane.b32.xlu0 %v2255, 117
        %v2320 = vpop.permute.xlu0 %2319
        %2321 = vrot.lane.b32.xlu0 %v2256, 117
        %v2322 = vpop.permute.xlu0 %2321
        %2323 = vrot.lane.b32.xlu0 %v2257, 117
        %v2324 = vpop.permute.xlu0 %2323
        %2325 = vrot.lane.b32.xlu0 %v2258, 117
        %v2326 = vpop.permute.xlu0 %2325
        %v2327 = vsel %vm318, %v2324, %v2326
        %v2328 = vsel %vm318, %v2322, %v2324
        %v2329 = vsel %vm318, %v2320, %v2322
        %v2330 = vsel %vm318, %v2326, %v2320
        %v2335 = vrot.slane %v2329, 4
        %v2336 = vrot.slane %v2328, 4
        %v2337 = vrot.slane %v2327, 4
        %v2338 = vrot.slane %v2330, 4
        %v2343 = vsel %vm255, %v2317, %v2335
        %v2344 = vsel %vm255, %v2316, %v2336
        %v2345 = vsel %vm255, %v2315, %v2337
        %v2346 = vsel %vm255, %v2318, %v2338
        %2347 = vst [vmem:[#allocation2 + $0xc0] sm:$0xff] %v2343
        %2348 = vst [vmem:[#allocation2 + $0xc8] sm:$0xff] %v2344
        %2349 = vst [vmem:[#allocation2 + $0xd0] sm:$0xff] %v2345
        %2350 = vst [vmem:[#allocation2 + $0xd8] sm:$0xff] %v2346
        %2351 = vrot.lane.b32.xlu0 %v2255, 116
        %v2352 = vpop.permute.xlu0 %2351
        %2353 = vrot.lane.b32.xlu0 %v2256, 116
        %v2354 = vpop.permute.xlu0 %2353
        %2355 = vrot.lane.b32.xlu0 %v2257, 116
        %v2356 = vpop.permute.xlu0 %2355
        %2357 = vrot.lane.b32.xlu0 %v2258, 116
        %v2358 = vpop.permute.xlu0 %2357
        %v2359 = vsel %vm331, %v2356, %v2358
        %v2360 = vsel %vm331, %v2354, %v2356
        %v2361 = vsel %vm331, %v2352, %v2354
        %v2362 = vsel %vm331, %v2358, %v2352
        %2363 = vrot.lane.b32.xlu0 %v2255, 108
        %v2364 = vpop.permute.xlu0 %2363
        %2365 = vrot.lane.b32.xlu0 %v2256, 108
        %v2366 = vpop.permute.xlu0 %2365
        %2367 = vrot.lane.b32.xlu0 %v2257, 108
        %v2368 = vpop.permute.xlu0 %2367
        %2369 = vrot.lane.b32.xlu0 %v2258, 108
        %v2370 = vpop.permute.xlu0 %2369
        %v2371 = vsel %vm364, %v2368, %v2370
        %v2372 = vsel %vm364, %v2366, %v2368
        %v2373 = vsel %vm364, %v2364, %v2366
        %v2374 = vsel %vm364, %v2370, %v2364
        %v2379 = vrot.slane %v2373, 4
        %v2380 = vrot.slane %v2372, 4
        %v2381 = vrot.slane %v2371, 4
        %v2382 = vrot.slane %v2374, 4
        %v2387 = vsel %vm255, %v2361, %v2379
        %v2388 = vsel %vm255, %v2360, %v2380
        %v2389 = vsel %vm255, %v2359, %v2381
        %v2390 = vsel %vm255, %v2362, %v2382
        %2391 = vst [vmem:[#allocation2 + $0xe0] sm:$0xff] %v2387
        %2392 = vst [vmem:[#allocation2 + $0xe8] sm:$0xff] %v2388
        %2393 = vst [vmem:[#allocation2 + $0xf0] sm:$0xff] %v2389
        %2394 = vst [vmem:[#allocation2 + $0xf8] sm:$0xff] %v2390
        %2395 = vrot.lane.b32.xlu0 %v2255, 107
        %v2396 = vpop.permute.xlu0 %2395
        %2397 = vrot.lane.b32.xlu0 %v2256, 107
        %v2398 = vpop.permute.xlu0 %2397
        %2399 = vrot.lane.b32.xlu0 %v2257, 107
        %v2400 = vpop.permute.xlu0 %2399
        %2401 = vrot.lane.b32.xlu0 %v2258, 107
        %v2402 = vpop.permute.xlu0 %2401
        %v2403 = vsel %vm377, %v2400, %v2402
        %v2404 = vsel %vm377, %v2398, %v2400
        %v2405 = vsel %vm377, %v2396, %v2398
        %v2406 = vsel %vm377, %v2402, %v2396
        %2407 = vrot.lane.b32.xlu0 %v2255, 106
        %v2408 = vpop.permute.xlu0 %2407
        %2409 = vrot.lane.b32.xlu0 %v2256, 106
        %v2410 = vpop.permute.xlu0 %2409
        %2411 = vrot.lane.b32.xlu0 %v2257, 106
        %v2412 = vpop.permute.xlu0 %2411
        %2413 = vrot.lane.b32.xlu0 %v2258, 106
        %v2414 = vpop.permute.xlu0 %2413
        %v2415 = vsel %vm410, %v2412, %v2414
        %v2416 = vsel %vm410, %v2410, %v2412
        %v2417 = vsel %vm410, %v2408, %v2410
        %v2418 = vsel %vm410, %v2414, %v2408
        %v2423 = vrot.slane %v2417, 4
        %v2424 = vrot.slane %v2416, 4
        %v2425 = vrot.slane %v2415, 4
        %v2426 = vrot.slane %v2418, 4
        %v2431 = vsel %vm255, %v2405, %v2423
        %v2432 = vsel %vm255, %v2404, %v2424
        %v2433 = vsel %vm255, %v2403, %v2425
        %v2434 = vsel %vm255, %v2406, %v2426
        %2435 = vst [vmem:[#allocation2 + $0x100] sm:$0xff] %v2431
        %2436 = vst [vmem:[#allocation2 + $0x108] sm:$0xff] %v2432
        %2437 = vst [vmem:[#allocation2 + $0x110] sm:$0xff] %v2433
        %2438 = vst [vmem:[#allocation2 + $0x118] sm:$0xff] %v2434
        %v2439 = vld [vmem:[%s2027 + $0x4] sm:$0xff]
        %v2440 = vld [vmem:[%s2027 + $0xc] sm:$0xff]
        %v2441 = vld [vmem:[%s2027 + $0x14] sm:$0xf]
        %v2445 = vcombine.high %v2439, %v2439
        %v2446 = vcombine.high %v2440, %v2440
        %2447 = vrot.lane.b32.xlu0 %v2439, 56
        %v2448 = vpop.permute.xlu0 %2447
        %2449 = vrot.lane.b32.xlu0 %v2445, 56
        %v2450 = vpop.permute.xlu0 %2449
        %2451 = vrot.lane.b32.xlu0 %v2440, 56
        %v2452 = vpop.permute.xlu0 %2451
        %2453 = vrot.lane.b32.xlu0 %v2446, 56
        %v2454 = vpop.permute.xlu0 %2453
        %2455 = vrot.lane.b32.xlu0 %v2441, 56
        %v2456 = vpop.permute.xlu0 %2455
        %v2457 = vsel %vm661, %v2448, %v2450
        %v2458 = vsel %vm661, %v2450, %v2452
        %v2459 = vsel %vm661, %v2452, %v2454
        %v2460 = vsel %vm661, %v2454, %v2456
        %2465 = vrot.lane.b32.xlu0 %v2457, 127
        %v2466 = vpop.permute.xlu0 %2465
        %2467 = vrot.lane.b32.xlu0 %v2458, 127
        %v2468 = vpop.permute.xlu0 %2467
        %2469 = vrot.lane.b32.xlu0 %v2459, 127
        %v2470 = vpop.permute.xlu0 %2469
        %2471 = vrot.lane.b32.xlu0 %v2460, 127
        %v2472 = vpop.permute.xlu0 %2471
        %v2473 = vsel %vm238, %v2470, %v2472
        %v2474 = vsel %vm238, %v2468, %v2470
        %v2475 = vsel %vm238, %v2466, %v2468
        %v2476 = vsel %vm238, %v2472, %v2466
        %v2483 = vrot.slane %v2475, 4
        %v2484 = vrot.slane %v2474, 4
        %v2485 = vrot.slane %v2473, 4
        %v2486 = vrot.slane %v2476, 4
        %2487 = vrot.lane.b32.xlu0 %v2483, 72
        %v2488 = vpop.permute.xlu0 %2487
        %2489 = vrot.lane.b32.xlu0 %v2484, 72
        %v2490 = vpop.permute.xlu0 %2489
        %2491 = vrot.lane.b32.xlu0 %v2485, 72
        %v2492 = vpop.permute.xlu0 %2491
        %2493 = vrot.lane.b32.xlu0 %v2486, 72
        %v2494 = vpop.permute.xlu0 %2493
        %v2495 = vsel %vm700, %v2488, %v2490
        %v2496 = vsel %vm700, %v2490, %v2492
        %v2497 = vsel %vm700, %v2492, %v2494
        %v2503 = vsel %vm255, %v2439, %v2488
        %v2504 = vsel %vm255, %v2445, %v2495
        %v2505 = vsel %vm255, %v2440, %v2496
        %v2506 = vsel %vm255, %v2446, %v2497
        %v2507 = vsel %vm255, %v2441, %v2494
        %2513 = vrot.lane.b32.xlu0 %v2503, 56
        %v2514 = vpop.permute.xlu0 %2513
        %2515 = vrot.lane.b32.xlu0 %v2504, 56
        %v2516 = vpop.permute.xlu0 %2515
        %2517 = vrot.lane.b32.xlu0 %v2505, 56
        %v2518 = vpop.permute.xlu0 %2517
        %2519 = vrot.lane.b32.xlu0 %v2506, 56
        %v2520 = vpop.permute.xlu0 %2519
        %2521 = vrot.lane.b32.xlu0 %v2507, 56
        %v2522 = vpop.permute.xlu0 %2521
        %v2523 = vsel %vm661, %v2514, %v2516
        %v2524 = vsel %vm661, %v2516, %v2518
        %v2525 = vsel %vm661, %v2518, %v2520
        %v2526 = vsel %vm661, %v2520, %v2522
        %2531 = vst [vmem:[#allocation2 + $0x120] sm:$0xff] %v2523
        %2532 = vst [vmem:[#allocation2 + $0x128] sm:$0xff] %v2524
        %2533 = vst [vmem:[#allocation2 + $0x130] sm:$0xff] %v2525
        %2534 = vst [vmem:[#allocation2 + $0x138] sm:$0xff] %v2526
        %2535 = vrot.lane.b32.xlu0 %v2457, 126
        %v2536 = vpop.permute.xlu0 %2535
        %2537 = vrot.lane.b32.xlu0 %v2458, 126
        %v2538 = vpop.permute.xlu0 %2537
        %2539 = vrot.lane.b32.xlu0 %v2459, 126
        %v2540 = vpop.permute.xlu0 %2539
        %2541 = vrot.lane.b32.xlu0 %v2460, 126
        %v2542 = vpop.permute.xlu0 %2541
        %v2543 = vsel %vm272, %v2540, %v2542
        %v2544 = vsel %vm272, %v2538, %v2540
        %v2545 = vsel %vm272, %v2536, %v2538
        %v2546 = vsel %vm272, %v2542, %v2536
        %2547 = vrot.lane.b32.xlu0 %v2457, 118
        %v2548 = vpop.permute.xlu0 %2547
        %2549 = vrot.lane.b32.xlu0 %v2458, 118
        %v2550 = vpop.permute.xlu0 %2549
        %2551 = vrot.lane.b32.xlu0 %v2459, 118
        %v2552 = vpop.permute.xlu0 %2551
        %2553 = vrot.lane.b32.xlu0 %v2460, 118
        %v2554 = vpop.permute.xlu0 %2553
        %v2555 = vsel %vm285, %v2552, %v2554
        %v2556 = vsel %vm285, %v2550, %v2552
        %v2557 = vsel %vm285, %v2548, %v2550
        %v2558 = vsel %vm285, %v2554, %v2548
        %v2563 = vrot.slane %v2557, 4
        %v2564 = vrot.slane %v2556, 4
        %v2565 = vrot.slane %v2555, 4
        %v2566 = vrot.slane %v2558, 4
        %v2571 = vsel %vm255, %v2545, %v2563
        %v2572 = vsel %vm255, %v2544, %v2564
        %v2573 = vsel %vm255, %v2543, %v2565
        %v2574 = vsel %vm255, %v2546, %v2566
        %2575 = vst [vmem:[#allocation2 + $0x140] sm:$0xff] %v2571
        %2576 = vst [vmem:[#allocation2 + $0x148] sm:$0xff] %v2572
        %2577 = vst [vmem:[#allocation2 + $0x150] sm:$0xff] %v2573
        %2578 = vst [vmem:[#allocation2 + $0x158] sm:$0xff] %v2574
        %2579 = vrot.lane.b32.xlu0 %v2457, 117
        %v2580 = vpop.permute.xlu0 %2579
        %2581 = vrot.lane.b32.xlu0 %v2458, 117
        %v2582 = vpop.permute.xlu0 %2581
        %2583 = vrot.lane.b32.xlu0 %v2459, 117
        %v2584 = vpop.permute.xlu0 %2583
        %2585 = vrot.lane.b32.xlu0 %v2460, 117
        %v2586 = vpop.permute.xlu0 %2585
        %v2587 = vsel %vm318, %v2584, %v2586
        %v2588 = vsel %vm318, %v2582, %v2584
        %v2589 = vsel %vm318, %v2580, %v2582
        %v2590 = vsel %vm318, %v2586, %v2580
        %2591 = vrot.lane.b32.xlu0 %v2457, 116
        %v2592 = vpop.permute.xlu0 %2591
        %2593 = vrot.lane.b32.xlu0 %v2458, 116
        %v2594 = vpop.permute.xlu0 %2593
        %2595 = vrot.lane.b32.xlu0 %v2459, 116
        %v2596 = vpop.permute.xlu0 %2595
        %2597 = vrot.lane.b32.xlu0 %v2460, 116
        %v2598 = vpop.permute.xlu0 %2597
        %v2599 = vsel %vm331, %v2596, %v2598
        %v2600 = vsel %vm331, %v2594, %v2596
        %v2601 = vsel %vm331, %v2592, %v2594
        %v2602 = vsel %vm331, %v2598, %v2592
        %v2607 = vrot.slane %v2601, 4
        %v2608 = vrot.slane %v2600, 4
        %v2609 = vrot.slane %v2599, 4
        %v2610 = vrot.slane %v2602, 4
        %v2615 = vsel %vm255, %v2589, %v2607
        %v2616 = vsel %vm255, %v2588, %v2608
        %v2617 = vsel %vm255, %v2587, %v2609
        %v2618 = vsel %vm255, %v2590, %v2610
        %2619 = vst [vmem:[#allocation2 + $0x160] sm:$0xff] %v2615
        %2620 = vst [vmem:[#allocation2 + $0x168] sm:$0xff] %v2616
        %2621 = vst [vmem:[#allocation2 + $0x170] sm:$0xff] %v2617
        %2622 = vst [vmem:[#allocation2 + $0x178] sm:$0xff] %v2618
        %2623 = vrot.lane.b32.xlu0 %v2457, 108
        %v2624 = vpop.permute.xlu0 %2623
        %2625 = vrot.lane.b32.xlu0 %v2458, 108
        %v2626 = vpop.permute.xlu0 %2625
        %2627 = vrot.lane.b32.xlu0 %v2459, 108
        %v2628 = vpop.permute.xlu0 %2627
        %2629 = vrot.lane.b32.xlu0 %v2460, 108
        %v2630 = vpop.permute.xlu0 %2629
        %v2631 = vsel %vm364, %v2628, %v2630
        %v2632 = vsel %vm364, %v2626, %v2628
        %v2633 = vsel %vm364, %v2624, %v2626
        %v2634 = vsel %vm364, %v2630, %v2624
        %2635 = vrot.lane.b32.xlu0 %v2457, 107
        %v2636 = vpop.permute.xlu0 %2635
        %2637 = vrot.lane.b32.xlu0 %v2458, 107
        %v2638 = vpop.permute.xlu0 %2637
        %2639 = vrot.lane.b32.xlu0 %v2459, 107
        %v2640 = vpop.permute.xlu0 %2639
        %2641 = vrot.lane.b32.xlu0 %v2460, 107
        %v2642 = vpop.permute.xlu0 %2641
        %v2643 = vsel %vm377, %v2640, %v2642
        %v2644 = vsel %vm377, %v2638, %v2640
        %v2645 = vsel %vm377, %v2636, %v2638
        %v2646 = vsel %vm377, %v2642, %v2636
        %v2651 = vrot.slane %v2645, 4
        %v2652 = vrot.slane %v2644, 4
        %v2653 = vrot.slane %v2643, 4
        %v2654 = vrot.slane %v2646, 4
        %v2659 = vsel %vm255, %v2633, %v2651
        %v2660 = vsel %vm255, %v2632, %v2652
        %v2661 = vsel %vm255, %v2631, %v2653
        %v2662 = vsel %vm255, %v2634, %v2654
        %2663 = vst [vmem:[#allocation2 + $0x180] sm:$0xff] %v2659
        %2664 = vst [vmem:[#allocation2 + $0x188] sm:$0xff] %v2660
        %2665 = vst [vmem:[#allocation2 + $0x190] sm:$0xff] %v2661
        %2666 = vst [vmem:[#allocation2 + $0x198] sm:$0xff] %v2662
        %2667 = vrot.lane.b32.xlu0 %v2457, 106
        %v2668 = vpop.permute.xlu0 %2667
        %2669 = vrot.lane.b32.xlu0 %v2458, 106
        %v2670 = vpop.permute.xlu0 %2669
        %2671 = vrot.lane.b32.xlu0 %v2459, 106
        %v2672 = vpop.permute.xlu0 %2671
        %2673 = vrot.lane.b32.xlu0 %v2460, 106
        %v2674 = vpop.permute.xlu0 %2673
        %v2675 = vsel %vm410, %v2672, %v2674
        %v2676 = vsel %vm410, %v2670, %v2672
        %v2677 = vsel %vm410, %v2668, %v2670
        %v2678 = vsel %vm410, %v2674, %v2668
        %2679 = vst [vmem:[#allocation2 + $0x1a0] sm:$0xf] %v2677
        %2680 = vst [vmem:[#allocation2 + $0x1a8] sm:$0xf] %v2676
        %2681 = vst [vmem:[#allocation2 + $0x1b0] sm:$0xf] %v2675
        %2682 = vst [vmem:[#allocation2 + $0x1b8] sm:$0xf] %v2678
        %v2683 = vld [vmem:[#allocation2] sm:$0xff]
        %v2684 = vld [vmem:[#allocation2 + $0x8] sm:$0xff]
        %v2685 = vld [vmem:[#allocation2 + $0x10] sm:$0xff]
        %v2686 = vld [vmem:[#allocation2 + $0x18] sm:$0xff]
        %v2687 = vld [vmem:[#allocation2 + $0x20] sm:$0xff]
        %v2688 = vld [vmem:[#allocation2 + $0x28] sm:$0xff]
        %v2689 = vld [vmem:[#allocation2 + $0x30] sm:$0xff]
        %v2690 = vld [vmem:[#allocation2 + $0x38] sm:$0xff]
        %v2691 = vld [vmem:[#allocation2 + $0x40] sm:$0xff]
        %v2692 = vld [vmem:[#allocation2 + $0x48] sm:$0xff]
        %v2693 = vld [vmem:[#allocation2 + $0x50] sm:$0xff]
        %v2694 = vld [vmem:[#allocation2 + $0x58] sm:$0xff]
        %v2695 = vld [vmem:[#allocation2 + $0x60] sm:$0xff]
        %v2696 = vld [vmem:[#allocation2 + $0x68] sm:$0xff]
        %v2697 = vld [vmem:[#allocation2 + $0x70] sm:$0xff]
        %v2698 = vld [vmem:[#allocation2 + $0x78] sm:$0xff]
        %v2699 = vld [vmem:[#allocation2 + $0x80] sm:$0xff]
        %v2700 = vld [vmem:[#allocation2 + $0x88] sm:$0xff]
        %v2701 = vld [vmem:[#allocation2 + $0x90] sm:$0xff]
        %v2702 = vld [vmem:[#allocation2 + $0x98] sm:$0xff]
        %v2703 = vld [vmem:[#allocation2 + $0xa0] sm:$0xff]
        %v2704 = vld [vmem:[#allocation2 + $0xa8] sm:$0xff]
        %v2705 = vld [vmem:[#allocation2 + $0xb0] sm:$0xff]
        %v2706 = vld [vmem:[#allocation2 + $0xb8] sm:$0xff]
        %v2707 = vld [vmem:[#allocation2 + $0xc0] sm:$0xff]
        %v2708 = vld [vmem:[#allocation2 + $0xc8] sm:$0xff]
        %v2709 = vld [vmem:[#allocation2 + $0xd0] sm:$0xff]
        %v2710 = vld [vmem:[#allocation2 + $0xd8] sm:$0xff]
        %v2711 = vld [vmem:[#allocation2 + $0xe0] sm:$0xff]
        %v2712 = vld [vmem:[#allocation2 + $0xe8] sm:$0xff]
        %v2713 = vld [vmem:[#allocation2 + $0xf0] sm:$0xff]
        %v2714 = vld [vmem:[#allocation2 + $0xf8] sm:$0xff]
        %v2715 = vld [vmem:[#allocation2 + $0x100] sm:$0xff]
        %v2716 = vld [vmem:[#allocation2 + $0x108] sm:$0xff]
        %v2717 = vld [vmem:[#allocation2 + $0x110] sm:$0xff]
        %v2718 = vld [vmem:[#allocation2 + $0x118] sm:$0xff]
        %v2719 = vld [vmem:[#allocation2 + $0x120] sm:$0xff]
        %v2720 = vld [vmem:[#allocation2 + $0x128] sm:$0xff]
        %v2721 = vld [vmem:[#allocation2 + $0x130] sm:$0xff]
        %v2722 = vld [vmem:[#allocation2 + $0x138] sm:$0xff]
        %v2723 = vld [vmem:[#allocation2 + $0x140] sm:$0xff]
        %v2724 = vld [vmem:[#allocation2 + $0x148] sm:$0xff]
        %v2725 = vld [vmem:[#allocation2 + $0x150] sm:$0xff]
        %v2726 = vld [vmem:[#allocation2 + $0x158] sm:$0xff]
        %v2727 = vld [vmem:[#allocation2 + $0x160] sm:$0xff]
        %v2728 = vld [vmem:[#allocation2 + $0x168] sm:$0xff]
        %v2729 = vld [vmem:[#allocation2 + $0x170] sm:$0xff]
        %v2730 = vld [vmem:[#allocation2 + $0x178] sm:$0xff]
        %v2731 = vld [vmem:[#allocation2 + $0x180] sm:$0xff]
        %v2732 = vld [vmem:[#allocation2 + $0x188] sm:$0xff]
        %v2733 = vld [vmem:[#allocation2 + $0x190] sm:$0xff]
        %v2734 = vld [vmem:[#allocation2 + $0x198] sm:$0xff]
        %v2735 = vld [vmem:[#allocation2 + $0x1a0] sm:$0xff]
        %v2736 = vld [vmem:[#allocation2 + $0x1a8] sm:$0xff]
        %v2737 = vld [vmem:[#allocation2 + $0x1b0] sm:$0xff]
        %v2738 = vld [vmem:[#allocation2 + $0x1b8] sm:$0xff]
        %v2739 = vld [vmem:[#allocation2 + $0x1c0] sm:$0xff]
        %v2740 = vld [vmem:[#allocation2 + $0x1c8] sm:$0xff]
        %v2741 = vld [vmem:[#allocation2 + $0x1d0] sm:$0xff]
        %v2742 = vld [vmem:[#allocation2 + $0x1d8] sm:$0xff]
        %v2743 = vld [vmem:[#allocation2 + $0x1e0] sm:$0xff]
        %v2744 = vld [vmem:[#allocation2 + $0x1e8] sm:$0xff]
        %v2745 = vld [vmem:[#allocation2 + $0x1f0] sm:$0xff]
        %v2746 = vld [vmem:[#allocation2 + $0x1f8] sm:$0xff]
        %2747 = vmatprep.subr.mxu0 %v2744
        %2748 = vmatpush1.msra.mxu0 %v2743
        %2749 = vmatprep.subr.mxu0 %v2740
        %2750 = vmatpush1.msra.mxu0 %v2739
        %2751 = vmatprep.subr.mxu0 %v2736
        %2752 = vmatpush1.msra.mxu0 %v2735
        %2753 = vmatprep.subr.mxu0 %v2732
        %2754 = vmatpush1.msra.mxu0 %v2731
        %2755 = vmatprep.subr.mxu0 %v2728
        %2756 = vmatpush1.msra.mxu0 %v2727
        %2757 = vmatprep.subr.mxu0 %v2724
        %2758 = vmatpush1.msra.mxu0 %v2723
        %2759 = vmatprep.subr.mxu0 %v2720
        %2760 = vmatpush1.msra.mxu0 %v2719
        %2761 = vmatprep.subr.mxu0 %v2716
        %2762 = vmatpush1.msra.mxu0 %v2715
        %2763 = vmatprep.subr.mxu0 %v2712
        %2764 = vmatpush1.msra.mxu0 %v2711
        %2765 = vmatprep.subr.mxu0 %v2708
        %2766 = vmatpush1.msra.mxu0 %v2707
        %2767 = vmatprep.subr.mxu0 %v2704
        %2768 = vmatpush1.msra.mxu0 %v2703
        %2769 = vmatprep.subr.mxu0 %v2700
        %2770 = vmatpush1.msra.mxu0 %v2699
        %2771 = vmatprep.subr.mxu0 %v2696
        %2772 = vmatpush1.msra.mxu0 %v2695
        %2773 = vmatprep.subr.mxu0 %v2692
        %2774 = vmatpush1.msra.mxu0 %v2691
        %2775 = vmatprep.subr.mxu0 %v2688
        %2776 = vmatpush1.msra.mxu0 %v2687
        %2777 = vmatprep.subr.mxu0 %v2684
        %2778 = vmatpush1.msra.mxu0 %v2683
        %2779 = vmatprep.subr.mxu0 0.0
        %2780 = vmatpush2.msra.mxu0 0.0
        %2781 = vmatprep.subr.mxu0 0.0
        %2782 = vmatpush2.msra.mxu0 0.0
        %2783 = vmatprep.subr.mxu0 0.0
        %2784 = vmatpush2.msra.mxu0 0.0
        %2785 = vmatprep.subr.mxu0 0.0
        %2786 = vmatpush2.msra.mxu0 0.0
        %2787 = vmatprep.subr.mxu0 0.0
        %2788 = vmatpush2.msra.mxu0 0.0
        %2789 = vmatprep.subr.mxu0 0.0
        %2790 = vmatpush2.msra.mxu0 0.0
        %2791 = vmatprep.subr.mxu0 0.0
        %2792 = vmatpush2.msra.mxu0 0.0
        %2793 = vmatprep.subr.mxu0 0.0
        %2794 = vmatpush2.msra.mxu0 0.0
        %2795 = vmatprep.subr.mxu0 0.0
        %2796 = vmatpush2.msra.mxu0 0.0
        %2797 = vmatprep.subr.mxu0 0.0
        %2798 = vmatpush2.msra.mxu0 0.0
        %2799 = vmatprep.subr.mxu0 0.0
        %2800 = vmatpush2.msra.mxu0 0.0
        %2801 = vmatprep.subr.mxu0 0.0
        %2802 = vmatpush2.msra.mxu0 0.0
        %2803 = vmatprep.subr.mxu0 0.0
        %2804 = vmatpush2.msra.mxu0 0.0
        %2805 = vmatprep.subr.mxu0 0.0
        %2806 = vmatpush2.msra.mxu0 0.0
        %2807 = vmatprep.subr.mxu0 0.0
        %2808 = vmatpush2.msra.mxu0 0.0
        %2809 = vmatprep.subr.mxu0 0.0
        %2810 = vmatpush2.msra.mxu0 0.0
        %2811 = vmatprep.mubr.f32.mxu0 0.0
        %2812 = vmatmul.mubr.f32.gmra.mxu0 %v216
        %v2813 = vpop.f32.mrf.mxu0
        %v2814 = vadd.f32 0.0, %v2813
        %v2815 = vpop.f32.mrf.mxu0
        %v2816 = vadd.f32 0.0, %v2815
        %2817 = vmatprep.mubr.f32.mxu0 0.0
        %2818 = vmatmul.mubr.f32.gmra.mxu0 %v217
        %v2819 = vpop.f32.mrf.mxu0
        %v2820 = vadd.f32 0.0, %v2819
        %v2821 = vpop.f32.mrf.mxu0
        %v2822 = vadd.f32 0.0, %v2821
        %2823 = vmatprep.mubr.f32.mxu0 0.0
        %2824 = vmatmul.mubr.f32.gmra.mxu0 %v218
        %v2825 = vpop.f32.mrf.mxu0
        %v2826 = vadd.f32 0.0, %v2825
        %v2827 = vpop.f32.mrf.mxu0
        %v2828 = vadd.f32 0.0, %v2827
        %2829 = vdwg.mxu0
        %2830 = vmatprep.subr.mxu0 %v2746
        %2831 = vmatpush1.msra.mxu0 %v2745
        %2832 = vmatprep.subr.mxu0 %v2742
        %2833 = vmatpush1.msra.mxu0 %v2741
        %2834 = vmatprep.subr.mxu0 %v2738
        %2835 = vmatpush1.msra.mxu0 %v2737
        %2836 = vmatprep.subr.mxu0 %v2734
        %2837 = vmatpush1.msra.mxu0 %v2733
        %2838 = vmatprep.subr.mxu0 %v2730
        %2839 = vmatpush1.msra.mxu0 %v2729
        %2840 = vmatprep.subr.mxu0 %v2726
        %2841 = vmatpush1.msra.mxu0 %v2725
        %2842 = vmatprep.subr.mxu0 %v2722
        %2843 = vmatpush1.msra.mxu0 %v2721
        %2844 = vmatprep.subr.mxu0 %v2718
        %2845 = vmatpush1.msra.mxu0 %v2717
        %2846 = vmatprep.subr.mxu0 %v2714
        %2847 = vmatpush1.msra.mxu0 %v2713
        %2848 = vmatprep.subr.mxu0 %v2710
        %2849 = vmatpush1.msra.mxu0 %v2709
        %2850 = vmatprep.subr.mxu0 %v2706
        %2851 = vmatpush1.msra.mxu0 %v2705
        %2852 = vmatprep.subr.mxu0 %v2702
        %2853 = vmatpush1.msra.mxu0 %v2701
        %2854 = vmatprep.subr.mxu0 %v2698
        %2855 = vmatpush1.msra.mxu0 %v2697
        %2856 = vmatprep.subr.mxu0 %v2694
        %2857 = vmatpush1.msra.mxu0 %v2693
        %2858 = vmatprep.subr.mxu0 %v2690
        %2859 = vmatpush1.msra.mxu0 %v2689
        %2860 = vmatprep.subr.mxu0 %v2686
        %2861 = vmatpush1.msra.mxu0 %v2685
        %2862 = vmatprep.subr.mxu0 0.0
        %2863 = vmatpush2.msra.mxu0 0.0
        %2864 = vmatprep.subr.mxu0 0.0
        %2865 = vmatpush2.msra.mxu0 0.0
        %2866 = vmatprep.subr.mxu0 0.0
        %2867 = vmatpush2.msra.mxu0 0.0
        %2868 = vmatprep.subr.mxu0 0.0
        %2869 = vmatpush2.msra.mxu0 0.0
        %2870 = vmatprep.subr.mxu0 0.0
        %2871 = vmatpush2.msra.mxu0 0.0
        %2872 = vmatprep.subr.mxu0 0.0
        %2873 = vmatpush2.msra.mxu0 0.0
        %2874 = vmatprep.subr.mxu0 0.0
        %2875 = vmatpush2.msra.mxu0 0.0
        %2876 = vmatprep.subr.mxu0 0.0
        %2877 = vmatpush2.msra.mxu0 0.0
        %2878 = vmatprep.subr.mxu0 0.0
        %2879 = vmatpush2.msra.mxu0 0.0
        %2880 = vmatprep.subr.mxu0 0.0
        %2881 = vmatpush2.msra.mxu0 0.0
        %2882 = vmatprep.subr.mxu0 0.0
        %2883 = vmatpush2.msra.mxu0 0.0
        %2884 = vmatprep.subr.mxu0 0.0
        %2885 = vmatpush2.msra.mxu0 0.0
        %2886 = vmatprep.subr.mxu0 0.0
        %2887 = vmatpush2.msra.mxu0 0.0
        %2888 = vmatprep.subr.mxu0 0.0
        %2889 = vmatpush2.msra.mxu0 0.0
        %2890 = vmatprep.subr.mxu0 0.0
        %2891 = vmatpush2.msra.mxu0 0.0
        %2892 = vmatprep.subr.mxu0 0.0
        %2893 = vmatpush2.msra.mxu0 0.0
        %2894 = vmatprep.mubr.f32.mxu0 0.0
        %2895 = vmatmul.mubr.f32.gmra.mxu0 %v216
        %v2896 = vpop.f32.mrf.mxu0
        %v2897 = vadd.f32 0.0, %v2896
        %v2898 = vpop.f32.mrf.mxu0
        %v2899 = vadd.f32 0.0, %v2898
        %2900 = vmatprep.mubr.f32.mxu0 0.0
        %2901 = vmatmul.mubr.f32.gmra.mxu0 %v217
        %v2902 = vpop.f32.mrf.mxu0
        %v2903 = vadd.f32 0.0, %v2902
        %v2904 = vpop.f32.mrf.mxu0
        %v2905 = vadd.f32 0.0, %v2904
        %2906 = vmatprep.mubr.f32.mxu0 0.0
        %2907 = vmatmul.mubr.f32.gmra.mxu0 %v218
        %v2908 = vpop.f32.mrf.mxu0
        %v2909 = vadd.f32 0.0, %v2908
        %v2910 = vpop.f32.mrf.mxu0
        %v2911 = vadd.f32 0.0, %v2910
        %2912 = vdwg.mxu0
        %v2913 = vadd.f32 %v2814, %v1114
        %v2914 = vadd.f32 %v2816, %v1114
        %v2915 = vadd.f32 %v2897, %v1114
        %v2916 = vadd.f32 %v2899, %v1114
        %s2917 = scalar_lea.vmem %s203, 64 [#allocation8]
        %2918 = vst [vmem:[%s2917] sm:$0xff] %v2913
        %2919 = vst [vmem:[%s2917 + $0x8] sm:$0xff] %v2914
        %2920 = vst [vmem:[%s2917 + $0x10] sm:$0xff] %v2915
        %2921 = vst [vmem:[%s2917 + $0x18] sm:$0xff] %v2916
        %v2922 = vld [vmem:[%s2010] sm:$0xff]
        %v2923 = vld [vmem:[%s2010 + $0x8] sm:$0xff]
        %v2924 = vld [vmem:[%s2010 + $0x10] sm:$0xff]
        %v2925 = vld [vmem:[%s2010 + $0x18] sm:$0xff]
        %v2926 = vadd.f32 %v2922, %v2820
        %v2927 = vadd.f32 %v2923, %v2822
        %v2928 = vadd.f32 %v2924, %v2903
        %v2929 = vadd.f32 %v2925, %v2905
        %2930 = vst [vmem:[%s2010] sm:$0xff] %v2926
        %2931 = vst [vmem:[%s2010 + $0x8] sm:$0xff] %v2927
        %2932 = vst [vmem:[%s2010 + $0x10] sm:$0xff] %v2928
        %2933 = vst [vmem:[%s2010 + $0x18] sm:$0xff] %v2929
        %v2934 = vld [vmem:[%s203] sm:$0xff]
        %v2935 = vld [vmem:[%s203 + $0x8] sm:$0xff]
        %v2936 = vld [vmem:[%s203 + $0x10] sm:$0xff]
        %v2937 = vld [vmem:[%s203 + $0x18] sm:$0xff]
        %v2938 = vadd.f32 %v2934, %v2826
        %v2939 = vadd.f32 %v2935, %v2828
        %v2940 = vadd.f32 %v2936, %v2909
        %v2941 = vadd.f32 %v2937, %v2911
        %2942 = vst [vmem:[%s203] sm:$0xff] %v2938
        %2943 = vst [vmem:[%s203 + $0x8] sm:$0xff] %v2939
        %2944 = vst [vmem:[%s203 + $0x10] sm:$0xff] %v2940
        %2945 = vst [vmem:[%s203 + $0x18] sm:$0xff] %v2941
        %s2946 = scalar_lea.vmem %s177, 72 [#allocation3]
        %v2947 = vld [vmem:[%s2946] sm:$0xff]
        %v2948 = vld [vmem:[%s2946 + $0x8] sm:$0xff]
        %v2951 = vcombine.high %v2947, %v2947
        %v2952 = vcombine.high %v2948, %v2948
        %2955 = vrot.lane.b32.xlu0 %v2947, 127
        %v2956 = vpop.permute.xlu0 %2955
        %2957 = vrot.lane.b32.xlu0 %v2951, 127
        %v2958 = vpop.permute.xlu0 %2957
        %2959 = vrot.lane.b32.xlu0 %v2948, 127
        %v2960 = vpop.permute.xlu0 %2959
        %2961 = vrot.lane.b32.xlu0 %v2952, 127
        %v2962 = vpop.permute.xlu0 %2961
        %v2963 = vsel %vm238, %v2960, %v2962
        %v2964 = vsel %vm238, %v2958, %v2960
        %v2965 = vsel %vm238, %v2956, %v2958
        %v2966 = vsel %vm238, %v2962, %v2956
        %v2971 = vrot.slane %v2965, 4
        %v2972 = vrot.slane %v2964, 4
        %v2973 = vrot.slane %v2963, 4
        %v2974 = vrot.slane %v2966, 4
        %v2979 = vsel %vm255, %v2947, %v2971
        %v2980 = vsel %vm255, %v2951, %v2972
        %v2981 = vsel %vm255, %v2948, %v2973
        %v2982 = vsel %vm255, %v2952, %v2974
        %2983 = vst [vmem:[#allocation2] sm:$0xff] %v2979
        %2984 = vst [vmem:[#allocation2 + $0x8] sm:$0xff] %v2980
        %2985 = vst [vmem:[#allocation2 + $0x10] sm:$0xff] %v2981
        %2986 = vst [vmem:[#allocation2 + $0x18] sm:$0xff] %v2982
        %2987 = vrot.lane.b32.xlu0 %v2947, 126
        %v2988 = vpop.permute.xlu0 %2987
        %2989 = vrot.lane.b32.xlu0 %v2951, 126
        %v2990 = vpop.permute.xlu0 %2989
        %2991 = vrot.lane.b32.xlu0 %v2948, 126
        %v2992 = vpop.permute.xlu0 %2991
        %2993 = vrot.lane.b32.xlu0 %v2952, 126
        %v2994 = vpop.permute.xlu0 %2993
        %v2995 = vsel %vm272, %v2992, %v2994
        %v2996 = vsel %vm272, %v2990, %v2992
        %v2997 = vsel %vm272, %v2988, %v2990
        %v2998 = vsel %vm272, %v2994, %v2988
        %2999 = vrot.lane.b32.xlu0 %v2947, 118
        %v3000 = vpop.permute.xlu0 %2999
        %3001 = vrot.lane.b32.xlu0 %v2951, 118
        %v3002 = vpop.permute.xlu0 %3001
        %3003 = vrot.lane.b32.xlu0 %v2948, 118
        %v3004 = vpop.permute.xlu0 %3003
        %3005 = vrot.lane.b32.xlu0 %v2952, 118
        %v3006 = vpop.permute.xlu0 %3005
        %v3007 = vsel %vm285, %v3004, %v3006
        %v3008 = vsel %vm285, %v3002, %v3004
        %v3009 = vsel %vm285, %v3000, %v3002
        %v3010 = vsel %vm285, %v3006, %v3000
        %v3015 = vrot.slane %v3009, 4
        %v3016 = vrot.slane %v3008, 4
        %v3017 = vrot.slane %v3007, 4
        %v3018 = vrot.slane %v3010, 4
        %v3023 = vsel %vm255, %v2997, %v3015
        %v3024 = vsel %vm255, %v2996, %v3016
        %v3025 = vsel %vm255, %v2995, %v3017
        %v3026 = vsel %vm255, %v2998, %v3018
        %3027 = vst [vmem:[#allocation2 + $0x20] sm:$0xff] %v3023
        %3028 = vst [vmem:[#allocation2 + $0x28] sm:$0xff] %v3024
        %3029 = vst [vmem:[#allocation2 + $0x30] sm:$0xff] %v3025
        %3030 = vst [vmem:[#allocation2 + $0x38] sm:$0xff] %v3026
        %3031 = vrot.lane.b32.xlu0 %v2947, 117
        %v3032 = vpop.permute.xlu0 %3031
        %3033 = vrot.lane.b32.xlu0 %v2951, 117
        %v3034 = vpop.permute.xlu0 %3033
        %3035 = vrot.lane.b32.xlu0 %v2948, 117
        %v3036 = vpop.permute.xlu0 %3035
        %3037 = vrot.lane.b32.xlu0 %v2952, 117
        %v3038 = vpop.permute.xlu0 %3037
        %v3039 = vsel %vm318, %v3036, %v3038
        %v3040 = vsel %vm318, %v3034, %v3036
        %v3041 = vsel %vm318, %v3032, %v3034
        %v3042 = vsel %vm318, %v3038, %v3032
        %3043 = vrot.lane.b32.xlu0 %v2947, 116
        %v3044 = vpop.permute.xlu0 %3043
        %3045 = vrot.lane.b32.xlu0 %v2951, 116
        %v3046 = vpop.permute.xlu0 %3045
        %3047 = vrot.lane.b32.xlu0 %v2948, 116
        %v3048 = vpop.permute.xlu0 %3047
        %3049 = vrot.lane.b32.xlu0 %v2952, 116
        %v3050 = vpop.permute.xlu0 %3049
        %v3051 = vsel %vm331, %v3048, %v3050
        %v3052 = vsel %vm331, %v3046, %v3048
        %v3053 = vsel %vm331, %v3044, %v3046
        %v3054 = vsel %vm331, %v3050, %v3044
        %v3059 = vrot.slane %v3053, 4
        %v3060 = vrot.slane %v3052, 4
        %v3061 = vrot.slane %v3051, 4
        %v3062 = vrot.slane %v3054, 4
        %v3067 = vsel %vm255, %v3041, %v3059
        %v3068 = vsel %vm255, %v3040, %v3060
        %v3069 = vsel %vm255, %v3039, %v3061
        %v3070 = vsel %vm255, %v3042, %v3062
        %3071 = vst [vmem:[#allocation2 + $0x40] sm:$0xff] %v3067
        %3072 = vst [vmem:[#allocation2 + $0x48] sm:$0xff] %v3068
        %3073 = vst [vmem:[#allocation2 + $0x50] sm:$0xff] %v3069
        %3074 = vst [vmem:[#allocation2 + $0x58] sm:$0xff] %v3070
        %3075 = vrot.lane.b32.xlu0 %v2947, 108
        %v3076 = vpop.permute.xlu0 %3075
        %3077 = vrot.lane.b32.xlu0 %v2951, 108
        %v3078 = vpop.permute.xlu0 %3077
        %3079 = vrot.lane.b32.xlu0 %v2948, 108
        %v3080 = vpop.permute.xlu0 %3079
        %3081 = vrot.lane.b32.xlu0 %v2952, 108
        %v3082 = vpop.permute.xlu0 %3081
        %v3083 = vsel %vm364, %v3080, %v3082
        %v3084 = vsel %vm364, %v3078, %v3080
        %v3085 = vsel %vm364, %v3076, %v3078
        %v3086 = vsel %vm364, %v3082, %v3076
        %3087 = vrot.lane.b32.xlu0 %v2947, 107
        %v3088 = vpop.permute.xlu0 %3087
        %3089 = vrot.lane.b32.xlu0 %v2951, 107
        %v3090 = vpop.permute.xlu0 %3089
        %3091 = vrot.lane.b32.xlu0 %v2948, 107
        %v3092 = vpop.permute.xlu0 %3091
        %3093 = vrot.lane.b32.xlu0 %v2952, 107
        %v3094 = vpop.permute.xlu0 %3093
        %v3095 = vsel %vm377, %v3092, %v3094
        %v3096 = vsel %vm377, %v3090, %v3092
        %v3097 = vsel %vm377, %v3088, %v3090
        %v3098 = vsel %vm377, %v3094, %v3088
        %v3103 = vrot.slane %v3097, 4
        %v3104 = vrot.slane %v3096, 4
        %v3105 = vrot.slane %v3095, 4
        %v3106 = vrot.slane %v3098, 4
        %v3111 = vsel %vm255, %v3085, %v3103
        %v3112 = vsel %vm255, %v3084, %v3104
        %v3113 = vsel %vm255, %v3083, %v3105
        %v3114 = vsel %vm255, %v3086, %v3106
        %3115 = vst [vmem:[#allocation2 + $0x60] sm:$0xff] %v3111
        %3116 = vst [vmem:[#allocation2 + $0x68] sm:$0xff] %v3112
        %3117 = vst [vmem:[#allocation2 + $0x70] sm:$0xff] %v3113
        %3118 = vst [vmem:[#allocation2 + $0x78] sm:$0xff] %v3114
        %3119 = vrot.lane.b32.xlu0 %v2947, 106
        %v3120 = vpop.permute.xlu0 %3119
        %3121 = vrot.lane.b32.xlu0 %v2951, 106
        %v3122 = vpop.permute.xlu0 %3121
        %3123 = vrot.lane.b32.xlu0 %v2948, 106
        %v3124 = vpop.permute.xlu0 %3123
        %3125 = vrot.lane.b32.xlu0 %v2952, 106
        %v3126 = vpop.permute.xlu0 %3125
        %v3127 = vsel %vm410, %v3124, %v3126
        %v3128 = vsel %vm410, %v3122, %v3124
        %v3129 = vsel %vm410, %v3120, %v3122
        %v3130 = vsel %vm410, %v3126, %v3120
        %v3131 = vld [vmem:[%s2946] sm:$0xff]
        %v3132 = vld [vmem:[%s2946 + $0x8] sm:$0xff]
        %v3133 = vld [vmem:[%s2946 + $0x10] sm:$0xf]
        %v3137 = vcombine.low %v3131, %v3131
        %v3138 = vcombine.low %v3132, %v3132
        %v3139 = vcombine.low %v3133, %v3133
        %3140 = vrot.lane.b32.xlu0 %v3137, 28
        %v3141 = vpop.permute.xlu0 %3140
        %3142 = vrot.lane.b32.xlu0 %v3131, 28
        %v3143 = vpop.permute.xlu0 %3142
        %3144 = vrot.lane.b32.xlu0 %v3138, 28
        %v3145 = vpop.permute.xlu0 %3144
        %3146 = vrot.lane.b32.xlu0 %v3132, 28
        %v3147 = vpop.permute.xlu0 %3146
        %3148 = vrot.lane.b32.xlu0 %v3139, 28
        %v3149 = vpop.permute.xlu0 %3148
        %v3150 = vsel %vm434, %v3141, %v3143
        %v3151 = vsel %vm434, %v3143, %v3145
        %v3152 = vsel %vm434, %v3145, %v3147
        %v3153 = vsel %vm434, %v3147, %v3149
        %v3158 = vsel %vm255, %v3129, %v3150
        %v3159 = vsel %vm255, %v3128, %v3151
        %v3160 = vsel %vm255, %v3127, %v3152
        %v3161 = vsel %vm255, %v3130, %v3153
        %3162 = vst [vmem:[#allocation2 + $0x80] sm:$0xff] %v3158
        %3163 = vst [vmem:[#allocation2 + $0x88] sm:$0xff] %v3159
        %3164 = vst [vmem:[#allocation2 + $0x90] sm:$0xff] %v3160
        %3165 = vst [vmem:[#allocation2 + $0x98] sm:$0xff] %v3161
        %v3166 = vcombine.high %v3131, %v3131
        %v3167 = vcombine.high %v3132, %v3132
        %3168 = vrot.lane.b32.xlu0 %v3166, 28
        %v3169 = vpop.permute.xlu0 %3168
        %3170 = vrot.lane.b32.xlu0 %v3167, 28
        %v3171 = vpop.permute.xlu0 %3170
        %3172 = vrot.lane.b32.xlu0 %v3133, 28
        %v3173 = vpop.permute.xlu0 %3172
        %v3174 = vsel %vm434, %v3143, %v3169
        %v3175 = vsel %vm434, %v3169, %v3147
        %v3176 = vsel %vm434, %v3147, %v3171
        %v3177 = vsel %vm434, %v3171, %v3173
        %3182 = vrot.lane.b32.xlu0 %v3174, 127
        %v3183 = vpop.permute.xlu0 %3182
        %3184 = vrot.lane.b32.xlu0 %v3175, 127
        %v3185 = vpop.permute.xlu0 %3184
        %3186 = vrot.lane.b32.xlu0 %v3176, 127
        %v3187 = vpop.permute.xlu0 %3186
        %3188 = vrot.lane.b32.xlu0 %v3177, 127
        %v3189 = vpop.permute.xlu0 %3188
        %v3190 = vsel %vm238, %v3187, %v3189
        %v3191 = vsel %vm238, %v3185, %v3187
        %v3192 = vsel %vm238, %v3183, %v3185
        %v3193 = vsel %vm238, %v3189, %v3183
        %3194 = vrot.lane.b32.xlu0 %v3174, 126
        %v3195 = vpop.permute.xlu0 %3194
        %3196 = vrot.lane.b32.xlu0 %v3175, 126
        %v3197 = vpop.permute.xlu0 %3196
        %3198 = vrot.lane.b32.xlu0 %v3176, 126
        %v3199 = vpop.permute.xlu0 %3198
        %3200 = vrot.lane.b32.xlu0 %v3177, 126
        %v3201 = vpop.permute.xlu0 %3200
        %v3202 = vsel %vm272, %v3199, %v3201
        %v3203 = vsel %vm272, %v3197, %v3199
        %v3204 = vsel %vm272, %v3195, %v3197
        %v3205 = vsel %vm272, %v3201, %v3195
        %v3210 = vrot.slane %v3204, 4
        %v3211 = vrot.slane %v3203, 4
        %v3212 = vrot.slane %v3202, 4
        %v3213 = vrot.slane %v3205, 4
        %v3218 = vsel %vm255, %v3192, %v3210
        %v3219 = vsel %vm255, %v3191, %v3211
        %v3220 = vsel %vm255, %v3190, %v3212
        %v3221 = vsel %vm255, %v3193, %v3213
        %3222 = vst [vmem:[#allocation2 + $0xa0] sm:$0xff] %v3218
        %3223 = vst [vmem:[#allocation2 + $0xa8] sm:$0xff] %v3219
        %3224 = vst [vmem:[#allocation2 + $0xb0] sm:$0xff] %v3220
        %3225 = vst [vmem:[#allocation2 + $0xb8] sm:$0xff] %v3221
        %3226 = vrot.lane.b32.xlu0 %v3174, 118
        %v3227 = vpop.permute.xlu0 %3226
        %3228 = vrot.lane.b32.xlu0 %v3175, 118
        %v3229 = vpop.permute.xlu0 %3228
        %3230 = vrot.lane.b32.xlu0 %v3176, 118
        %v3231 = vpop.permute.xlu0 %3230
        %3232 = vrot.lane.b32.xlu0 %v3177, 118
        %v3233 = vpop.permute.xlu0 %3232
        %v3234 = vsel %vm285, %v3231, %v3233
        %v3235 = vsel %vm285, %v3229, %v3231
        %v3236 = vsel %vm285, %v3227, %v3229
        %v3237 = vsel %vm285, %v3233, %v3227
        %3238 = vrot.lane.b32.xlu0 %v3174, 117
        %v3239 = vpop.permute.xlu0 %3238
        %3240 = vrot.lane.b32.xlu0 %v3175, 117
        %v3241 = vpop.permute.xlu0 %3240
        %3242 = vrot.lane.b32.xlu0 %v3176, 117
        %v3243 = vpop.permute.xlu0 %3242
        %3244 = vrot.lane.b32.xlu0 %v3177, 117
        %v3245 = vpop.permute.xlu0 %3244
        %v3246 = vsel %vm318, %v3243, %v3245
        %v3247 = vsel %vm318, %v3241, %v3243
        %v3248 = vsel %vm318, %v3239, %v3241
        %v3249 = vsel %vm318, %v3245, %v3239
        %v3254 = vrot.slane %v3248, 4
        %v3255 = vrot.slane %v3247, 4
        %v3256 = vrot.slane %v3246, 4
        %v3257 = vrot.slane %v3249, 4
        %v3262 = vsel %vm255, %v3236, %v3254
        %v3263 = vsel %vm255, %v3235, %v3255
        %v3264 = vsel %vm255, %v3234, %v3256
        %v3265 = vsel %vm255, %v3237, %v3257
        %3266 = vst [vmem:[#allocation2 + $0xc0] sm:$0xff] %v3262
        %3267 = vst [vmem:[#allocation2 + $0xc8] sm:$0xff] %v3263
        %3268 = vst [vmem:[#allocation2 + $0xd0] sm:$0xff] %v3264
        %3269 = vst [vmem:[#allocation2 + $0xd8] sm:$0xff] %v3265
        %3270 = vrot.lane.b32.xlu0 %v3174, 116
        %v3271 = vpop.permute.xlu0 %3270
        %3272 = vrot.lane.b32.xlu0 %v3175, 116
        %v3273 = vpop.permute.xlu0 %3272
        %3274 = vrot.lane.b32.xlu0 %v3176, 116
        %v3275 = vpop.permute.xlu0 %3274
        %3276 = vrot.lane.b32.xlu0 %v3177, 116
        %v3277 = vpop.permute.xlu0 %3276
        %v3278 = vsel %vm331, %v3275, %v3277
        %v3279 = vsel %vm331, %v3273, %v3275
        %v3280 = vsel %vm331, %v3271, %v3273
        %v3281 = vsel %vm331, %v3277, %v3271
        %3282 = vrot.lane.b32.xlu0 %v3174, 108
        %v3283 = vpop.permute.xlu0 %3282
        %3284 = vrot.lane.b32.xlu0 %v3175, 108
        %v3285 = vpop.permute.xlu0 %3284
        %3286 = vrot.lane.b32.xlu0 %v3176, 108
        %v3287 = vpop.permute.xlu0 %3286
        %3288 = vrot.lane.b32.xlu0 %v3177, 108
        %v3289 = vpop.permute.xlu0 %3288
        %v3290 = vsel %vm364, %v3287, %v3289
        %v3291 = vsel %vm364, %v3285, %v3287
        %v3292 = vsel %vm364, %v3283, %v3285
        %v3293 = vsel %vm364, %v3289, %v3283
        %v3298 = vrot.slane %v3292, 4
        %v3299 = vrot.slane %v3291, 4
        %v3300 = vrot.slane %v3290, 4
        %v3301 = vrot.slane %v3293, 4
        %v3306 = vsel %vm255, %v3280, %v3298
        %v3307 = vsel %vm255, %v3279, %v3299
        %v3308 = vsel %vm255, %v3278, %v3300
        %v3309 = vsel %vm255, %v3281, %v3301
        %3310 = vst [vmem:[#allocation2 + $0xe0] sm:$0xff] %v3306
        %3311 = vst [vmem:[#allocation2 + $0xe8] sm:$0xff] %v3307
        %3312 = vst [vmem:[#allocation2 + $0xf0] sm:$0xff] %v3308
        %3313 = vst [vmem:[#allocation2 + $0xf8] sm:$0xff] %v3309
        %3314 = vrot.lane.b32.xlu0 %v3174, 107
        %v3315 = vpop.permute.xlu0 %3314
        %3316 = vrot.lane.b32.xlu0 %v3175, 107
        %v3317 = vpop.permute.xlu0 %3316
        %3318 = vrot.lane.b32.xlu0 %v3176, 107
        %v3319 = vpop.permute.xlu0 %3318
        %3320 = vrot.lane.b32.xlu0 %v3177, 107
        %v3321 = vpop.permute.xlu0 %3320
        %v3322 = vsel %vm377, %v3319, %v3321
        %v3323 = vsel %vm377, %v3317, %v3319
        %v3324 = vsel %vm377, %v3315, %v3317
        %v3325 = vsel %vm377, %v3321, %v3315
        %3326 = vrot.lane.b32.xlu0 %v3174, 106
        %v3327 = vpop.permute.xlu0 %3326
        %3328 = vrot.lane.b32.xlu0 %v3175, 106
        %v3329 = vpop.permute.xlu0 %3328
        %3330 = vrot.lane.b32.xlu0 %v3176, 106
        %v3331 = vpop.permute.xlu0 %3330
        %3332 = vrot.lane.b32.xlu0 %v3177, 106
        %v3333 = vpop.permute.xlu0 %3332
        %v3334 = vsel %vm410, %v3331, %v3333
        %v3335 = vsel %vm410, %v3329, %v3331
        %v3336 = vsel %vm410, %v3327, %v3329
        %v3337 = vsel %vm410, %v3333, %v3327
        %v3342 = vrot.slane %v3336, 4
        %v3343 = vrot.slane %v3335, 4
        %v3344 = vrot.slane %v3334, 4
        %v3345 = vrot.slane %v3337, 4
        %v3350 = vsel %vm255, %v3324, %v3342
        %v3351 = vsel %vm255, %v3323, %v3343
        %v3352 = vsel %vm255, %v3322, %v3344
        %v3353 = vsel %vm255, %v3325, %v3345
        %3354 = vst [vmem:[#allocation2 + $0x100] sm:$0xff] %v3350
        %3355 = vst [vmem:[#allocation2 + $0x108] sm:$0xff] %v3351
        %3356 = vst [vmem:[#allocation2 + $0x110] sm:$0xff] %v3352
        %3357 = vst [vmem:[#allocation2 + $0x118] sm:$0xff] %v3353
        %v3358 = vld [vmem:[%s2946 + $0x4] sm:$0xff]
        %v3359 = vld [vmem:[%s2946 + $0xc] sm:$0xff]
        %v3360 = vld [vmem:[%s2946 + $0x14] sm:$0xf]
        %v3364 = vcombine.high %v3358, %v3358
        %v3365 = vcombine.high %v3359, %v3359
        %3366 = vrot.lane.b32.xlu0 %v3358, 56
        %v3367 = vpop.permute.xlu0 %3366
        %3368 = vrot.lane.b32.xlu0 %v3364, 56
        %v3369 = vpop.permute.xlu0 %3368
        %3370 = vrot.lane.b32.xlu0 %v3359, 56
        %v3371 = vpop.permute.xlu0 %3370
        %3372 = vrot.lane.b32.xlu0 %v3365, 56
        %v3373 = vpop.permute.xlu0 %3372
        %3374 = vrot.lane.b32.xlu0 %v3360, 56
        %v3375 = vpop.permute.xlu0 %3374
        %v3376 = vsel %vm661, %v3367, %v3369
        %v3377 = vsel %vm661, %v3369, %v3371
        %v3378 = vsel %vm661, %v3371, %v3373
        %v3379 = vsel %vm661, %v3373, %v3375
        %3384 = vrot.lane.b32.xlu0 %v3376, 127
        %v3385 = vpop.permute.xlu0 %3384
        %3386 = vrot.lane.b32.xlu0 %v3377, 127
        %v3387 = vpop.permute.xlu0 %3386
        %3388 = vrot.lane.b32.xlu0 %v3378, 127
        %v3389 = vpop.permute.xlu0 %3388
        %3390 = vrot.lane.b32.xlu0 %v3379, 127
        %v3391 = vpop.permute.xlu0 %3390
        %v3392 = vsel %vm238, %v3389, %v3391
        %v3393 = vsel %vm238, %v3387, %v3389
        %v3394 = vsel %vm238, %v3385, %v3387
        %v3395 = vsel %vm238, %v3391, %v3385
        %v3402 = vrot.slane %v3394, 4
        %v3403 = vrot.slane %v3393, 4
        %v3404 = vrot.slane %v3392, 4
        %v3405 = vrot.slane %v3395, 4
        %3406 = vrot.lane.b32.xlu0 %v3402, 72
        %v3407 = vpop.permute.xlu0 %3406
        %3408 = vrot.lane.b32.xlu0 %v3403, 72
        %v3409 = vpop.permute.xlu0 %3408
        %3410 = vrot.lane.b32.xlu0 %v3404, 72
        %v3411 = vpop.permute.xlu0 %3410
        %3412 = vrot.lane.b32.xlu0 %v3405, 72
        %v3413 = vpop.permute.xlu0 %3412
        %v3414 = vsel %vm700, %v3407, %v3409
        %v3415 = vsel %vm700, %v3409, %v3411
        %v3416 = vsel %vm700, %v3411, %v3413
        %v3422 = vsel %vm255, %v3358, %v3407
        %v3423 = vsel %vm255, %v3364, %v3414
        %v3424 = vsel %vm255, %v3359, %v3415
        %v3425 = vsel %vm255, %v3365, %v3416
        %v3426 = vsel %vm255, %v3360, %v3413
        %3432 = vrot.lane.b32.xlu0 %v3422, 56
        %v3433 = vpop.permute.xlu0 %3432
        %3434 = vrot.lane.b32.xlu0 %v3423, 56
        %v3435 = vpop.permute.xlu0 %3434
        %3436 = vrot.lane.b32.xlu0 %v3424, 56
        %v3437 = vpop.permute.xlu0 %3436
        %3438 = vrot.lane.b32.xlu0 %v3425, 56
        %v3439 = vpop.permute.xlu0 %3438
        %3440 = vrot.lane.b32.xlu0 %v3426, 56
        %v3441 = vpop.permute.xlu0 %3440
        %v3442 = vsel %vm661, %v3433, %v3435
        %v3443 = vsel %vm661, %v3435, %v3437
        %v3444 = vsel %vm661, %v3437, %v3439
        %v3445 = vsel %vm661, %v3439, %v3441
        %3450 = vst [vmem:[#allocation2 + $0x120] sm:$0xff] %v3442
        %3451 = vst [vmem:[#allocation2 + $0x128] sm:$0xff] %v3443
        %3452 = vst [vmem:[#allocation2 + $0x130] sm:$0xff] %v3444
        %3453 = vst [vmem:[#allocation2 + $0x138] sm:$0xff] %v3445
        %3454 = vrot.lane.b32.xlu0 %v3376, 126
        %v3455 = vpop.permute.xlu0 %3454
        %3456 = vrot.lane.b32.xlu0 %v3377, 126
        %v3457 = vpop.permute.xlu0 %3456
        %3458 = vrot.lane.b32.xlu0 %v3378, 126
        %v3459 = vpop.permute.xlu0 %3458
        %3460 = vrot.lane.b32.xlu0 %v3379, 126
        %v3461 = vpop.permute.xlu0 %3460
        %v3462 = vsel %vm272, %v3459, %v3461
        %v3463 = vsel %vm272, %v3457, %v3459
        %v3464 = vsel %vm272, %v3455, %v3457
        %v3465 = vsel %vm272, %v3461, %v3455
        %3466 = vrot.lane.b32.xlu0 %v3376, 118
        %v3467 = vpop.permute.xlu0 %3466
        %3468 = vrot.lane.b32.xlu0 %v3377, 118
        %v3469 = vpop.permute.xlu0 %3468
        %3470 = vrot.lane.b32.xlu0 %v3378, 118
        %v3471 = vpop.permute.xlu0 %3470
        %3472 = vrot.lane.b32.xlu0 %v3379, 118
        %v3473 = vpop.permute.xlu0 %3472
        %v3474 = vsel %vm285, %v3471, %v3473
        %v3475 = vsel %vm285, %v3469, %v3471
        %v3476 = vsel %vm285, %v3467, %v3469
        %v3477 = vsel %vm285, %v3473, %v3467
        %v3482 = vrot.slane %v3476, 4
        %v3483 = vrot.slane %v3475, 4
        %v3484 = vrot.slane %v3474, 4
        %v3485 = vrot.slane %v3477, 4
        %v3490 = vsel %vm255, %v3464, %v3482
        %v3491 = vsel %vm255, %v3463, %v3483
        %v3492 = vsel %vm255, %v3462, %v3484
        %v3493 = vsel %vm255, %v3465, %v3485
        %3494 = vst [vmem:[#allocation2 + $0x140] sm:$0xff] %v3490
        %3495 = vst [vmem:[#allocation2 + $0x148] sm:$0xff] %v3491
        %3496 = vst [vmem:[#allocation2 + $0x150] sm:$0xff] %v3492
        %3497 = vst [vmem:[#allocation2 + $0x158] sm:$0xff] %v3493
        %3498 = vrot.lane.b32.xlu0 %v3376, 117
        %v3499 = vpop.permute.xlu0 %3498
        %3500 = vrot.lane.b32.xlu0 %v3377, 117
        %v3501 = vpop.permute.xlu0 %3500
        %3502 = vrot.lane.b32.xlu0 %v3378, 117
        %v3503 = vpop.permute.xlu0 %3502
        %3504 = vrot.lane.b32.xlu0 %v3379, 117
        %v3505 = vpop.permute.xlu0 %3504
        %v3506 = vsel %vm318, %v3503, %v3505
        %v3507 = vsel %vm318, %v3501, %v3503
        %v3508 = vsel %vm318, %v3499, %v3501
        %v3509 = vsel %vm318, %v3505, %v3499
        %3510 = vrot.lane.b32.xlu0 %v3376, 116
        %v3511 = vpop.permute.xlu0 %3510
        %3512 = vrot.lane.b32.xlu0 %v3377, 116
        %v3513 = vpop.permute.xlu0 %3512
        %3514 = vrot.lane.b32.xlu0 %v3378, 116
        %v3515 = vpop.permute.xlu0 %3514
        %3516 = vrot.lane.b32.xlu0 %v3379, 116
        %v3517 = vpop.permute.xlu0 %3516
        %v3518 = vsel %vm331, %v3515, %v3517
        %v3519 = vsel %vm331, %v3513, %v3515
        %v3520 = vsel %vm331, %v3511, %v3513
        %v3521 = vsel %vm331, %v3517, %v3511
        %v3526 = vrot.slane %v3520, 4
        %v3527 = vrot.slane %v3519, 4
        %v3528 = vrot.slane %v3518, 4
        %v3529 = vrot.slane %v3521, 4
        %v3534 = vsel %vm255, %v3508, %v3526
        %v3535 = vsel %vm255, %v3507, %v3527
        %v3536 = vsel %vm255, %v3506, %v3528
        %v3537 = vsel %vm255, %v3509, %v3529
        %3538 = vst [vmem:[#allocation2 + $0x160] sm:$0xff] %v3534
        %3539 = vst [vmem:[#allocation2 + $0x168] sm:$0xff] %v3535
        %3540 = vst [vmem:[#allocation2 + $0x170] sm:$0xff] %v3536
        %3541 = vst [vmem:[#allocation2 + $0x178] sm:$0xff] %v3537
        %3542 = vrot.lane.b32.xlu0 %v3376, 108
        %v3543 = vpop.permute.xlu0 %3542
        %3544 = vrot.lane.b32.xlu0 %v3377, 108
        %v3545 = vpop.permute.xlu0 %3544
        %3546 = vrot.lane.b32.xlu0 %v3378, 108
        %v3547 = vpop.permute.xlu0 %3546
        %3548 = vrot.lane.b32.xlu0 %v3379, 108
        %v3549 = vpop.permute.xlu0 %3548
        %v3550 = vsel %vm364, %v3547, %v3549
        %v3551 = vsel %vm364, %v3545, %v3547
        %v3552 = vsel %vm364, %v3543, %v3545
        %v3553 = vsel %vm364, %v3549, %v3543
        %3554 = vrot.lane.b32.xlu0 %v3376, 107
        %v3555 = vpop.permute.xlu0 %3554
        %3556 = vrot.lane.b32.xlu0 %v3377, 107
        %v3557 = vpop.permute.xlu0 %3556
        %3558 = vrot.lane.b32.xlu0 %v3378, 107
        %v3559 = vpop.permute.xlu0 %3558
        %3560 = vrot.lane.b32.xlu0 %v3379, 107
        %v3561 = vpop.permute.xlu0 %3560
        %v3562 = vsel %vm377, %v3559, %v3561
        %v3563 = vsel %vm377, %v3557, %v3559
        %v3564 = vsel %vm377, %v3555, %v3557
        %v3565 = vsel %vm377, %v3561, %v3555
        %v3570 = vrot.slane %v3564, 4
        %v3571 = vrot.slane %v3563, 4
        %v3572 = vrot.slane %v3562, 4
        %v3573 = vrot.slane %v3565, 4
        %v3578 = vsel %vm255, %v3552, %v3570
        %v3579 = vsel %vm255, %v3551, %v3571
        %v3580 = vsel %vm255, %v3550, %v3572
        %v3581 = vsel %vm255, %v3553, %v3573
        %3582 = vst [vmem:[#allocation2 + $0x180] sm:$0xff] %v3578
        %3583 = vst [vmem:[#allocation2 + $0x188] sm:$0xff] %v3579
        %3584 = vst [vmem:[#allocation2 + $0x190] sm:$0xff] %v3580
        %3585 = vst [vmem:[#allocation2 + $0x198] sm:$0xff] %v3581
        %3586 = vrot.lane.b32.xlu0 %v3376, 106
        %v3587 = vpop.permute.xlu0 %3586
        %3588 = vrot.lane.b32.xlu0 %v3377, 106
        %v3589 = vpop.permute.xlu0 %3588
        %3590 = vrot.lane.b32.xlu0 %v3378, 106
        %v3591 = vpop.permute.xlu0 %3590
        %3592 = vrot.lane.b32.xlu0 %v3379, 106
        %v3593 = vpop.permute.xlu0 %3592
        %v3594 = vsel %vm410, %v3591, %v3593
        %v3595 = vsel %vm410, %v3589, %v3591
        %v3596 = vsel %vm410, %v3587, %v3589
        %v3597 = vsel %vm410, %v3593, %v3587
        %3598 = vst [vmem:[#allocation2 + $0x1a0] sm:$0xf] %v3596
        %3599 = vst [vmem:[#allocation2 + $0x1a8] sm:$0xf] %v3595
        %3600 = vst [vmem:[#allocation2 + $0x1b0] sm:$0xf] %v3594
        %3601 = vst [vmem:[#allocation2 + $0x1b8] sm:$0xf] %v3597
        %v3602 = vld [vmem:[#allocation2] sm:$0xff]
        %v3603 = vld [vmem:[#allocation2 + $0x8] sm:$0xff]
        %v3604 = vld [vmem:[#allocation2 + $0x10] sm:$0xff]
        %v3605 = vld [vmem:[#allocation2 + $0x18] sm:$0xff]
        %v3606 = vld [vmem:[#allocation2 + $0x20] sm:$0xff]
        %v3607 = vld [vmem:[#allocation2 + $0x28] sm:$0xff]
        %v3608 = vld [vmem:[#allocation2 + $0x30] sm:$0xff]
        %v3609 = vld [vmem:[#allocation2 + $0x38] sm:$0xff]
        %v3610 = vld [vmem:[#allocation2 + $0x40] sm:$0xff]
        %v3611 = vld [vmem:[#allocation2 + $0x48] sm:$0xff]
        %v3612 = vld [vmem:[#allocation2 + $0x50] sm:$0xff]
        %v3613 = vld [vmem:[#allocation2 + $0x58] sm:$0xff]
        %v3614 = vld [vmem:[#allocation2 + $0x60] sm:$0xff]
        %v3615 = vld [vmem:[#allocation2 + $0x68] sm:$0xff]
        %v3616 = vld [vmem:[#allocation2 + $0x70] sm:$0xff]
        %v3617 = vld [vmem:[#allocation2 + $0x78] sm:$0xff]
        %v3618 = vld [vmem:[#allocation2 + $0x80] sm:$0xff]
        %v3619 = vld [vmem:[#allocation2 + $0x88] sm:$0xff]
        %v3620 = vld [vmem:[#allocation2 + $0x90] sm:$0xff]
        %v3621 = vld [vmem:[#allocation2 + $0x98] sm:$0xff]
        %v3622 = vld [vmem:[#allocation2 + $0xa0] sm:$0xff]
        %v3623 = vld [vmem:[#allocation2 + $0xa8] sm:$0xff]
        %v3624 = vld [vmem:[#allocation2 + $0xb0] sm:$0xff]
        %v3625 = vld [vmem:[#allocation2 + $0xb8] sm:$0xff]
        %v3626 = vld [vmem:[#allocation2 + $0xc0] sm:$0xff]
        %v3627 = vld [vmem:[#allocation2 + $0xc8] sm:$0xff]
        %v3628 = vld [vmem:[#allocation2 + $0xd0] sm:$0xff]
        %v3629 = vld [vmem:[#allocation2 + $0xd8] sm:$0xff]
        %v3630 = vld [vmem:[#allocation2 + $0xe0] sm:$0xff]
        %v3631 = vld [vmem:[#allocation2 + $0xe8] sm:$0xff]
        %v3632 = vld [vmem:[#allocation2 + $0xf0] sm:$0xff]
        %v3633 = vld [vmem:[#allocation2 + $0xf8] sm:$0xff]
        %v3634 = vld [vmem:[#allocation2 + $0x100] sm:$0xff]
        %v3635 = vld [vmem:[#allocation2 + $0x108] sm:$0xff]
        %v3636 = vld [vmem:[#allocation2 + $0x110] sm:$0xff]
        %v3637 = vld [vmem:[#allocation2 + $0x118] sm:$0xff]
        %v3638 = vld [vmem:[#allocation2 + $0x120] sm:$0xff]
        %v3639 = vld [vmem:[#allocation2 + $0x128] sm:$0xff]
        %v3640 = vld [vmem:[#allocation2 + $0x130] sm:$0xff]
        %v3641 = vld [vmem:[#allocation2 + $0x138] sm:$0xff]
        %v3642 = vld [vmem:[#allocation2 + $0x140] sm:$0xff]
        %v3643 = vld [vmem:[#allocation2 + $0x148] sm:$0xff]
        %v3644 = vld [vmem:[#allocation2 + $0x150] sm:$0xff]
        %v3645 = vld [vmem:[#allocation2 + $0x158] sm:$0xff]
        %v3646 = vld [vmem:[#allocation2 + $0x160] sm:$0xff]
        %v3647 = vld [vmem:[#allocation2 + $0x168] sm:$0xff]
        %v3648 = vld [vmem:[#allocation2 + $0x170] sm:$0xff]
        %v3649 = vld [vmem:[#allocation2 + $0x178] sm:$0xff]
        %v3650 = vld [vmem:[#allocation2 + $0x180] sm:$0xff]
        %v3651 = vld [vmem:[#allocation2 + $0x188] sm:$0xff]
        %v3652 = vld [vmem:[#allocation2 + $0x190] sm:$0xff]
        %v3653 = vld [vmem:[#allocation2 + $0x198] sm:$0xff]
        %v3654 = vld [vmem:[#allocation2 + $0x1a0] sm:$0xff]
        %v3655 = vld [vmem:[#allocation2 + $0x1a8] sm:$0xff]
        %v3656 = vld [vmem:[#allocation2 + $0x1b0] sm:$0xff]
        %v3657 = vld [vmem:[#allocation2 + $0x1b8] sm:$0xff]
        %v3658 = vld [vmem:[#allocation2 + $0x1c0] sm:$0xff]
        %v3659 = vld [vmem:[#allocation2 + $0x1c8] sm:$0xff]
        %v3660 = vld [vmem:[#allocation2 + $0x1d0] sm:$0xff]
        %v3661 = vld [vmem:[#allocation2 + $0x1d8] sm:$0xff]
        %v3662 = vld [vmem:[#allocation2 + $0x1e0] sm:$0xff]
        %v3663 = vld [vmem:[#allocation2 + $0x1e8] sm:$0xff]
        %v3664 = vld [vmem:[#allocation2 + $0x1f0] sm:$0xff]
        %v3665 = vld [vmem:[#allocation2 + $0x1f8] sm:$0xff]
        %3666 = vmatprep.subr.mxu0 %v3663
        %3667 = vmatpush1.msra.mxu0 %v3662
        %3668 = vmatprep.subr.mxu0 %v3659
        %3669 = vmatpush1.msra.mxu0 %v3658
        %3670 = vmatprep.subr.mxu0 %v3655
        %3671 = vmatpush1.msra.mxu0 %v3654
        %3672 = vmatprep.subr.mxu0 %v3651
        %3673 = vmatpush1.msra.mxu0 %v3650
        %3674 = vmatprep.subr.mxu0 %v3647
        %3675 = vmatpush1.msra.mxu0 %v3646
        %3676 = vmatprep.subr.mxu0 %v3643
        %3677 = vmatpush1.msra.mxu0 %v3642
        %3678 = vmatprep.subr.mxu0 %v3639
        %3679 = vmatpush1.msra.mxu0 %v3638
        %3680 = vmatprep.subr.mxu0 %v3635
        %3681 = vmatpush1.msra.mxu0 %v3634
        %3682 = vmatprep.subr.mxu0 %v3631
        %3683 = vmatpush1.msra.mxu0 %v3630
        %3684 = vmatprep.subr.mxu0 %v3627
        %3685 = vmatpush1.msra.mxu0 %v3626
        %3686 = vmatprep.subr.mxu0 %v3623
        %3687 = vmatpush1.msra.mxu0 %v3622
        %3688 = vmatprep.subr.mxu0 %v3619
        %3689 = vmatpush1.msra.mxu0 %v3618
        %3690 = vmatprep.subr.mxu0 %v3615
        %3691 = vmatpush1.msra.mxu0 %v3614
        %3692 = vmatprep.subr.mxu0 %v3611
        %3693 = vmatpush1.msra.mxu0 %v3610
        %3694 = vmatprep.subr.mxu0 %v3607
        %3695 = vmatpush1.msra.mxu0 %v3606
        %3696 = vmatprep.subr.mxu0 %v3603
        %3697 = vmatpush1.msra.mxu0 %v3602
        %3698 = vmatprep.subr.mxu0 0.0
        %3699 = vmatpush2.msra.mxu0 0.0
        %3700 = vmatprep.subr.mxu0 0.0
        %3701 = vmatpush2.msra.mxu0 0.0
        %3702 = vmatprep.subr.mxu0 0.0
        %3703 = vmatpush2.msra.mxu0 0.0
        %3704 = vmatprep.subr.mxu0 0.0
        %3705 = vmatpush2.msra.mxu0 0.0
        %3706 = vmatprep.subr.mxu0 0.0
        %3707 = vmatpush2.msra.mxu0 0.0
        %3708 = vmatprep.subr.mxu0 0.0
        %3709 = vmatpush2.msra.mxu0 0.0
        %3710 = vmatprep.subr.mxu0 0.0
        %3711 = vmatpush2.msra.mxu0 0.0
        %3712 = vmatprep.subr.mxu0 0.0
        %3713 = vmatpush2.msra.mxu0 0.0
        %3714 = vmatprep.subr.mxu0 0.0
        %3715 = vmatpush2.msra.mxu0 0.0
        %3716 = vmatprep.subr.mxu0 0.0
        %3717 = vmatpush2.msra.mxu0 0.0
        %3718 = vmatprep.subr.mxu0 0.0
        %3719 = vmatpush2.msra.mxu0 0.0
        %3720 = vmatprep.subr.mxu0 0.0
        %3721 = vmatpush2.msra.mxu0 0.0
        %3722 = vmatprep.subr.mxu0 0.0
        %3723 = vmatpush2.msra.mxu0 0.0
        %3724 = vmatprep.subr.mxu0 0.0
        %3725 = vmatpush2.msra.mxu0 0.0
        %3726 = vmatprep.subr.mxu0 0.0
        %3727 = vmatpush2.msra.mxu0 0.0
        %3728 = vmatprep.subr.mxu0 0.0
        %3729 = vmatpush2.msra.mxu0 0.0
        %3730 = vmatprep.mubr.f32.mxu0 0.0
        %3731 = vmatmul.mubr.f32.gmra.mxu0 %v216
        %v3732 = vpop.f32.mrf.mxu0
        %v3733 = vpop.f32.mrf.mxu0
        %3734 = vmatprep.mubr.f32.mxu0 0.0
        %3735 = vmatmul.mubr.f32.gmra.mxu0 %v217
        %v3736 = vpop.f32.mrf.mxu0
        %v3737 = vadd.f32 0.0, %v3736
        %v3738 = vpop.f32.mrf.mxu0
        %v3739 = vadd.f32 0.0, %v3738
        %3740 = vmatprep.mubr.f32.mxu0 0.0
        %3741 = vmatmul.mubr.f32.gmra.mxu0 %v218
        %v3742 = vpop.f32.mrf.mxu0
        %v3743 = vadd.f32 0.0, %v3742
        %v3744 = vpop.f32.mrf.mxu0
        %v3745 = vadd.f32 0.0, %v3744
        %3746 = vdwg.mxu0
        %3747 = vmatprep.subr.mxu0 %v3665
        %3748 = vmatpush1.msra.mxu0 %v3664
        %3749 = vmatprep.subr.mxu0 %v3661
        %3750 = vmatpush1.msra.mxu0 %v3660
        %3751 = vmatprep.subr.mxu0 %v3657
        %3752 = vmatpush1.msra.mxu0 %v3656
        %3753 = vmatprep.subr.mxu0 %v3653
        %3754 = vmatpush1.msra.mxu0 %v3652
        %3755 = vmatprep.subr.mxu0 %v3649
        %3756 = vmatpush1.msra.mxu0 %v3648
        %3757 = vmatprep.subr.mxu0 %v3645
        %3758 = vmatpush1.msra.mxu0 %v3644
        %3759 = vmatprep.subr.mxu0 %v3641
        %3760 = vmatpush1.msra.mxu0 %v3640
        %3761 = vmatprep.subr.mxu0 %v3637
        %3762 = vmatpush1.msra.mxu0 %v3636
        %3763 = vmatprep.subr.mxu0 %v3633
        %3764 = vmatpush1.msra.mxu0 %v3632
        %3765 = vmatprep.subr.mxu0 %v3629
        %3766 = vmatpush1.msra.mxu0 %v3628
        %3767 = vmatprep.subr.mxu0 %v3625
        %3768 = vmatpush1.msra.mxu0 %v3624
        %3769 = vmatprep.subr.mxu0 %v3621
        %3770 = vmatpush1.msra.mxu0 %v3620
        %3771 = vmatprep.subr.mxu0 %v3617
        %3772 = vmatpush1.msra.mxu0 %v3616
        %3773 = vmatprep.subr.mxu0 %v3613
        %3774 = vmatpush1.msra.mxu0 %v3612
        %3775 = vmatprep.subr.mxu0 %v3609
        %3776 = vmatpush1.msra.mxu0 %v3608
        %3777 = vmatprep.subr.mxu0 %v3605
        %3778 = vmatpush1.msra.mxu0 %v3604
        %3779 = vmatprep.subr.mxu0 0.0
        %3780 = vmatpush2.msra.mxu0 0.0
        %3781 = vmatprep.subr.mxu0 0.0
        %3782 = vmatpush2.msra.mxu0 0.0
        %3783 = vmatprep.subr.mxu0 0.0
        %3784 = vmatpush2.msra.mxu0 0.0
        %3785 = vmatprep.subr.mxu0 0.0
        %3786 = vmatpush2.msra.mxu0 0.0
        %3787 = vmatprep.subr.mxu0 0.0
        %3788 = vmatpush2.msra.mxu0 0.0
        %3789 = vmatprep.subr.mxu0 0.0
        %3790 = vmatpush2.msra.mxu0 0.0
        %3791 = vmatprep.subr.mxu0 0.0
        %3792 = vmatpush2.msra.mxu0 0.0
        %3793 = vmatprep.subr.mxu0 0.0
        %3794 = vmatpush2.msra.mxu0 0.0
        %3795 = vmatprep.subr.mxu0 0.0
        %3796 = vmatpush2.msra.mxu0 0.0
        %3797 = vmatprep.subr.mxu0 0.0
        %3798 = vmatpush2.msra.mxu0 0.0
        %3799 = vmatprep.subr.mxu0 0.0
        %3800 = vmatpush2.msra.mxu0 0.0
        %3801 = vmatprep.subr.mxu0 0.0
        %3802 = vmatpush2.msra.mxu0 0.0
        %3803 = vmatprep.subr.mxu0 0.0
        %3804 = vmatpush2.msra.mxu0 0.0
        %3805 = vmatprep.subr.mxu0 0.0
        %3806 = vmatpush2.msra.mxu0 0.0
        %3807 = vmatprep.subr.mxu0 0.0
        %3808 = vmatpush2.msra.mxu0 0.0
        %3809 = vmatprep.subr.mxu0 0.0
        %3810 = vmatpush2.msra.mxu0 0.0
        %3811 = vmatprep.mubr.f32.mxu0 0.0
        %3812 = vmatmul.mubr.f32.gmra.mxu0 %v216
        %v3813 = vpop.f32.mrf.mxu0
        %v3814 = vpop.f32.mrf.mxu0
        %3815 = vmatprep.mubr.f32.mxu0 0.0
        %3816 = vmatmul.mubr.f32.gmra.mxu0 %v217
        %v3817 = vpop.f32.mrf.mxu0
        %v3818 = vadd.f32 0.0, %v3817
        %v3819 = vpop.f32.mrf.mxu0
        %v3820 = vadd.f32 0.0, %v3819
        %3821 = vmatprep.mubr.f32.mxu0 0.0
        %3822 = vmatmul.mubr.f32.gmra.mxu0 %v218
        %v3823 = vpop.f32.mrf.mxu0
        %v3824 = vadd.f32 0.0, %v3823
        %v3825 = vpop.f32.mrf.mxu0
        %v3826 = vadd.f32 0.0, %v3825
        %3827 = vdwg.mxu0
        %v3828 = vld [vmem:[%s2917] sm:$0xff]
        %v3829 = vld [vmem:[%s2917 + $0x8] sm:$0xff]
        %v3830 = vld [vmem:[%s2917 + $0x10] sm:$0xff]
        %v3831 = vld [vmem:[%s2917 + $0x18] sm:$0xff]
        %v3832 = vadd.f32 %v3828, %v3737
        %v3833 = vadd.f32 %v3829, %v3739
        %v3834 = vadd.f32 %v3830, %v3818
        %v3835 = vadd.f32 %v3831, %v3820
        %3836 = vst [vmem:[%s2917] sm:$0xff] %v3832
        %3837 = vst [vmem:[%s2917 + $0x8] sm:$0xff] %v3833
        %3838 = vst [vmem:[%s2917 + $0x10] sm:$0xff] %v3834
        %3839 = vst [vmem:[%s2917 + $0x18] sm:$0xff] %v3835
        %v3840 = vld [vmem:[%s2010] sm:$0xff]
        %v3841 = vld [vmem:[%s2010 + $0x8] sm:$0xff]
        %v3842 = vld [vmem:[%s2010 + $0x10] sm:$0xff]
        %v3843 = vld [vmem:[%s2010 + $0x18] sm:$0xff]
        %v3844 = vadd.f32 %v3840, %v3743
        %v3845 = vadd.f32 %v3841, %v3745
        %v3846 = vadd.f32 %v3842, %v3824
        %v3847 = vadd.f32 %v3843, %v3826
        %3848 = vst [vmem:[%s2010] sm:$0xff] %v3844
        %3849 = vst [vmem:[%s2010 + $0x8] sm:$0xff] %v3845
        %3850 = vst [vmem:[%s2010 + $0x10] sm:$0xff] %v3846
        %3851 = vst [vmem:[%s2010 + $0x18] sm:$0xff] %v3847
        %s3852 = scalar_lea.vmem %s177, 96 [#allocation3]
        %v3853 = vld [vmem:[%s3852] sm:$0xff]
        %v3854 = vld [vmem:[%s3852 + $0x8] sm:$0xff]
        %v3857 = vcombine.high %v3853, %v3853
        %v3858 = vcombine.high %v3854, %v3854
        %3861 = vrot.lane.b32.xlu0 %v3853, 127
        %v3862 = vpop.permute.xlu0 %3861
        %3863 = vrot.lane.b32.xlu0 %v3857, 127
        %v3864 = vpop.permute.xlu0 %3863
        %3865 = vrot.lane.b32.xlu0 %v3854, 127
        %v3866 = vpop.permute.xlu0 %3865
        %3867 = vrot.lane.b32.xlu0 %v3858, 127
        %v3868 = vpop.permute.xlu0 %3867
        %v3869 = vsel %vm238, %v3866, %v3868
        %v3870 = vsel %vm238, %v3864, %v3866
        %v3871 = vsel %vm238, %v3862, %v3864
        %v3872 = vsel %vm238, %v3868, %v3862
        %v3877 = vrot.slane %v3871, 4
        %v3878 = vrot.slane %v3870, 4
        %v3879 = vrot.slane %v3869, 4
        %v3880 = vrot.slane %v3872, 4
        %v3885 = vsel %vm255, %v3853, %v3877
        %v3886 = vsel %vm255, %v3857, %v3878
        %v3887 = vsel %vm255, %v3854, %v3879
        %v3888 = vsel %vm255, %v3858, %v3880
        %3889 = vst [vmem:[#allocation2] sm:$0xff] %v3885
        %3890 = vst [vmem:[#allocation2 + $0x8] sm:$0xff] %v3886
        %3891 = vst [vmem:[#allocation2 + $0x10] sm:$0xff] %v3887
        %3892 = vst [vmem:[#allocation2 + $0x18] sm:$0xff] %v3888
        %3893 = vrot.lane.b32.xlu0 %v3853, 126
        %v3894 = vpop.permute.xlu0 %3893
        %3895 = vrot.lane.b32.xlu0 %v3857, 126
        %v3896 = vpop.permute.xlu0 %3895
        %3897 = vrot.lane.b32.xlu0 %v3854, 126
        %v3898 = vpop.permute.xlu0 %3897
        %3899 = vrot.lane.b32.xlu0 %v3858, 126
        %v3900 = vpop.permute.xlu0 %3899
        %v3901 = vsel %vm272, %v3898, %v3900
        %v3902 = vsel %vm272, %v3896, %v3898
        %v3903 = vsel %vm272, %v3894, %v3896
        %v3904 = vsel %vm272, %v3900, %v3894
        %3905 = vrot.lane.b32.xlu0 %v3853, 118
        %v3906 = vpop.permute.xlu0 %3905
        %3907 = vrot.lane.b32.xlu0 %v3857, 118
        %v3908 = vpop.permute.xlu0 %3907
        %3909 = vrot.lane.b32.xlu0 %v3854, 118
        %v3910 = vpop.permute.xlu0 %3909
        %3911 = vrot.lane.b32.xlu0 %v3858, 118
        %v3912 = vpop.permute.xlu0 %3911
        %v3913 = vsel %vm285, %v3910, %v3912
        %v3914 = vsel %vm285, %v3908, %v3910
        %v3915 = vsel %vm285, %v3906, %v3908
        %v3916 = vsel %vm285, %v3912, %v3906
        %v3921 = vrot.slane %v3915, 4
        %v3922 = vrot.slane %v3914, 4
        %v3923 = vrot.slane %v3913, 4
        %v3924 = vrot.slane %v3916, 4
        %v3929 = vsel %vm255, %v3903, %v3921
        %v3930 = vsel %vm255, %v3902, %v3922
        %v3931 = vsel %vm255, %v3901, %v3923
        %v3932 = vsel %vm255, %v3904, %v3924
        %3933 = vst [vmem:[#allocation2 + $0x20] sm:$0xff] %v3929
        %3934 = vst [vmem:[#allocation2 + $0x28] sm:$0xff] %v3930
        %3935 = vst [vmem:[#allocation2 + $0x30] sm:$0xff] %v3931
        %3936 = vst [vmem:[#allocation2 + $0x38] sm:$0xff] %v3932
        %3937 = vrot.lane.b32.xlu0 %v3853, 117
        %v3938 = vpop.permute.xlu0 %3937
        %3939 = vrot.lane.b32.xlu0 %v3857, 117
        %v3940 = vpop.permute.xlu0 %3939
        %3941 = vrot.lane.b32.xlu0 %v3854, 117
        %v3942 = vpop.permute.xlu0 %3941
        %3943 = vrot.lane.b32.xlu0 %v3858, 117
        %v3944 = vpop.permute.xlu0 %3943
        %v3945 = vsel %vm318, %v3942, %v3944
        %v3946 = vsel %vm318, %v3940, %v3942
        %v3947 = vsel %vm318, %v3938, %v3940
        %v3948 = vsel %vm318, %v3944, %v3938
        %3949 = vrot.lane.b32.xlu0 %v3853, 116
        %v3950 = vpop.permute.xlu0 %3949
        %3951 = vrot.lane.b32.xlu0 %v3857, 116
        %v3952 = vpop.permute.xlu0 %3951
        %3953 = vrot.lane.b32.xlu0 %v3854, 116
        %v3954 = vpop.permute.xlu0 %3953
        %3955 = vrot.lane.b32.xlu0 %v3858, 116
        %v3956 = vpop.permute.xlu0 %3955
        %v3957 = vsel %vm331, %v3954, %v3956
        %v3958 = vsel %vm331, %v3952, %v3954
        %v3959 = vsel %vm331, %v3950, %v3952
        %v3960 = vsel %vm331, %v3956, %v3950
        %v3965 = vrot.slane %v3959, 4
        %v3966 = vrot.slane %v3958, 4
        %v3967 = vrot.slane %v3957, 4
        %v3968 = vrot.slane %v3960, 4
        %v3973 = vsel %vm255, %v3947, %v3965
        %v3974 = vsel %vm255, %v3946, %v3966
        %v3975 = vsel %vm255, %v3945, %v3967
        %v3976 = vsel %vm255, %v3948, %v3968
        %3977 = vst [vmem:[#allocation2 + $0x40] sm:$0xff] %v3973
        %3978 = vst [vmem:[#allocation2 + $0x48] sm:$0xff] %v3974
        %3979 = vst [vmem:[#allocation2 + $0x50] sm:$0xff] %v3975
        %3980 = vst [vmem:[#allocation2 + $0x58] sm:$0xff] %v3976
        %3981 = vrot.lane.b32.xlu0 %v3853, 108
        %v3982 = vpop.permute.xlu0 %3981
        %3983 = vrot.lane.b32.xlu0 %v3857, 108
        %v3984 = vpop.permute.xlu0 %3983
        %3985 = vrot.lane.b32.xlu0 %v3854, 108
        %v3986 = vpop.permute.xlu0 %3985
        %3987 = vrot.lane.b32.xlu0 %v3858, 108
        %v3988 = vpop.permute.xlu0 %3987
        %v3989 = vsel %vm364, %v3986, %v3988
        %v3990 = vsel %vm364, %v3984, %v3986
        %v3991 = vsel %vm364, %v3982, %v3984
        %v3992 = vsel %vm364, %v3988, %v3982
        %3993 = vrot.lane.b32.xlu0 %v3853, 107
        %v3994 = vpop.permute.xlu0 %3993
        %3995 = vrot.lane.b32.xlu0 %v3857, 107
        %v3996 = vpop.permute.xlu0 %3995
        %3997 = vrot.lane.b32.xlu0 %v3854, 107
        %v3998 = vpop.permute.xlu0 %3997
        %3999 = vrot.lane.b32.xlu0 %v3858, 107
        %v4000 = vpop.permute.xlu0 %3999
        %v4001 = vsel %vm377, %v3998, %v4000
        %v4002 = vsel %vm377, %v3996, %v3998
        %v4003 = vsel %vm377, %v3994, %v3996
        %v4004 = vsel %vm377, %v4000, %v3994
        %v4009 = vrot.slane %v4003, 4
        %v4010 = vrot.slane %v4002, 4
        %v4011 = vrot.slane %v4001, 4
        %v4012 = vrot.slane %v4004, 4
        %v4017 = vsel %vm255, %v3991, %v4009
        %v4018 = vsel %vm255, %v3990, %v4010
        %v4019 = vsel %vm255, %v3989, %v4011
        %v4020 = vsel %vm255, %v3992, %v4012
        %4021 = vst [vmem:[#allocation2 + $0x60] sm:$0xff] %v4017
        %4022 = vst [vmem:[#allocation2 + $0x68] sm:$0xff] %v4018
        %4023 = vst [vmem:[#allocation2 + $0x70] sm:$0xff] %v4019
        %4024 = vst [vmem:[#allocation2 + $0x78] sm:$0xff] %v4020
        %4025 = vrot.lane.b32.xlu0 %v3853, 106
        %v4026 = vpop.permute.xlu0 %4025
        %4027 = vrot.lane.b32.xlu0 %v3857, 106
        %v4028 = vpop.permute.xlu0 %4027
        %4029 = vrot.lane.b32.xlu0 %v3854, 106
        %v4030 = vpop.permute.xlu0 %4029
        %4031 = vrot.lane.b32.xlu0 %v3858, 106
        %v4032 = vpop.permute.xlu0 %4031
        %v4033 = vsel %vm410, %v4030, %v4032
        %v4034 = vsel %vm410, %v4028, %v4030
        %v4035 = vsel %vm410, %v4026, %v4028
        %v4036 = vsel %vm410, %v4032, %v4026
        %v4037 = vld [vmem:[%s3852] sm:$0xff]
        %v4038 = vld [vmem:[%s3852 + $0x8] sm:$0xff]
        %v4039 = vld [vmem:[%s3852 + $0x10] sm:$0xf]
        %v4043 = vcombine.low %v4037, %v4037
        %v4044 = vcombine.low %v4038, %v4038
        %v4045 = vcombine.low %v4039, %v4039
        %4046 = vrot.lane.b32.xlu0 %v4043, 28
        %v4047 = vpop.permute.xlu0 %4046
        %4048 = vrot.lane.b32.xlu0 %v4037, 28
        %v4049 = vpop.permute.xlu0 %4048
        %4050 = vrot.lane.b32.xlu0 %v4044, 28
        %v4051 = vpop.permute.xlu0 %4050
        %4052 = vrot.lane.b32.xlu0 %v4038, 28
        %v4053 = vpop.permute.xlu0 %4052
        %4054 = vrot.lane.b32.xlu0 %v4045, 28
        %v4055 = vpop.permute.xlu0 %4054
        %v4056 = vsel %vm434, %v4047, %v4049
        %v4057 = vsel %vm434, %v4049, %v4051
        %v4058 = vsel %vm434, %v4051, %v4053
        %v4059 = vsel %vm434, %v4053, %v4055
        %v4064 = vsel %vm255, %v4035, %v4056
        %v4065 = vsel %vm255, %v4034, %v4057
        %v4066 = vsel %vm255, %v4033, %v4058
        %v4067 = vsel %vm255, %v4036, %v4059
        %4068 = vst [vmem:[#allocation2 + $0x80] sm:$0xff] %v4064
        %4069 = vst [vmem:[#allocation2 + $0x88] sm:$0xff] %v4065
        %4070 = vst [vmem:[#allocation2 + $0x90] sm:$0xff] %v4066
        %4071 = vst [vmem:[#allocation2 + $0x98] sm:$0xff] %v4067
        %v4072 = vcombine.high %v4037, %v4037
        %v4073 = vcombine.high %v4038, %v4038
        %4074 = vrot.lane.b32.xlu0 %v4072, 28
        %v4075 = vpop.permute.xlu0 %4074
        %4076 = vrot.lane.b32.xlu0 %v4073, 28
        %v4077 = vpop.permute.xlu0 %4076
        %4078 = vrot.lane.b32.xlu0 %v4039, 28
        %v4079 = vpop.permute.xlu0 %4078
        %v4080 = vsel %vm434, %v4049, %v4075
        %v4081 = vsel %vm434, %v4075, %v4053
        %v4082 = vsel %vm434, %v4053, %v4077
        %v4083 = vsel %vm434, %v4077, %v4079
        %4088 = vrot.lane.b32.xlu0 %v4080, 127
        %v4089 = vpop.permute.xlu0 %4088
        %4090 = vrot.lane.b32.xlu0 %v4081, 127
        %v4091 = vpop.permute.xlu0 %4090
        %4092 = vrot.lane.b32.xlu0 %v4082, 127
        %v4093 = vpop.permute.xlu0 %4092
        %4094 = vrot.lane.b32.xlu0 %v4083, 127
        %v4095 = vpop.permute.xlu0 %4094
        %v4096 = vsel %vm238, %v4093, %v4095
        %v4097 = vsel %vm238, %v4091, %v4093
        %v4098 = vsel %vm238, %v4089, %v4091
        %v4099 = vsel %vm238, %v4095, %v4089
        %4100 = vrot.lane.b32.xlu0 %v4080, 126
        %v4101 = vpop.permute.xlu0 %4100
        %4102 = vrot.lane.b32.xlu0 %v4081, 126
        %v4103 = vpop.permute.xlu0 %4102
        %4104 = vrot.lane.b32.xlu0 %v4082, 126
        %v4105 = vpop.permute.xlu0 %4104
        %4106 = vrot.lane.b32.xlu0 %v4083, 126
        %v4107 = vpop.permute.xlu0 %4106
        %v4108 = vsel %vm272, %v4105, %v4107
        %v4109 = vsel %vm272, %v4103, %v4105
        %v4110 = vsel %vm272, %v4101, %v4103
        %v4111 = vsel %vm272, %v4107, %v4101
        %v4116 = vrot.slane %v4110, 4
        %v4117 = vrot.slane %v4109, 4
        %v4118 = vrot.slane %v4108, 4
        %v4119 = vrot.slane %v4111, 4
        %v4124 = vsel %vm255, %v4098, %v4116
        %v4125 = vsel %vm255, %v4097, %v4117
        %v4126 = vsel %vm255, %v4096, %v4118
        %v4127 = vsel %vm255, %v4099, %v4119
        %4128 = vst [vmem:[#allocation2 + $0xa0] sm:$0xff] %v4124
        %4129 = vst [vmem:[#allocation2 + $0xa8] sm:$0xff] %v4125
        %4130 = vst [vmem:[#allocation2 + $0xb0] sm:$0xff] %v4126
        %4131 = vst [vmem:[#allocation2 + $0xb8] sm:$0xff] %v4127
        %4132 = vrot.lane.b32.xlu0 %v4080, 118
        %v4133 = vpop.permute.xlu0 %4132
        %4134 = vrot.lane.b32.xlu0 %v4081, 118
        %v4135 = vpop.permute.xlu0 %4134
        %4136 = vrot.lane.b32.xlu0 %v4082, 118
        %v4137 = vpop.permute.xlu0 %4136
        %4138 = vrot.lane.b32.xlu0 %v4083, 118
        %v4139 = vpop.permute.xlu0 %4138
        %v4140 = vsel %vm285, %v4137, %v4139
        %v4141 = vsel %vm285, %v4135, %v4137
        %v4142 = vsel %vm285, %v4133, %v4135
        %v4143 = vsel %vm285, %v4139, %v4133
        %4144 = vrot.lane.b32.xlu0 %v4080, 117
        %v4145 = vpop.permute.xlu0 %4144
        %4146 = vrot.lane.b32.xlu0 %v4081, 117
        %v4147 = vpop.permute.xlu0 %4146
        %4148 = vrot.lane.b32.xlu0 %v4082, 117
        %v4149 = vpop.permute.xlu0 %4148
        %4150 = vrot.lane.b32.xlu0 %v4083, 117
        %v4151 = vpop.permute.xlu0 %4150
        %v4152 = vsel %vm318, %v4149, %v4151
        %v4153 = vsel %vm318, %v4147, %v4149
        %v4154 = vsel %vm318, %v4145, %v4147
        %v4155 = vsel %vm318, %v4151, %v4145
        %v4160 = vrot.slane %v4154, 4
        %v4161 = vrot.slane %v4153, 4
        %v4162 = vrot.slane %v4152, 4
        %v4163 = vrot.slane %v4155, 4
        %v4168 = vsel %vm255, %v4142, %v4160
        %v4169 = vsel %vm255, %v4141, %v4161
        %v4170 = vsel %vm255, %v4140, %v4162
        %v4171 = vsel %vm255, %v4143, %v4163
        %4172 = vst [vmem:[#allocation2 + $0xc0] sm:$0xff] %v4168
        %4173 = vst [vmem:[#allocation2 + $0xc8] sm:$0xff] %v4169
        %4174 = vst [vmem:[#allocation2 + $0xd0] sm:$0xff] %v4170
        %4175 = vst [vmem:[#allocation2 + $0xd8] sm:$0xff] %v4171
        %4176 = vrot.lane.b32.xlu0 %v4080, 116
        %v4177 = vpop.permute.xlu0 %4176
        %4178 = vrot.lane.b32.xlu0 %v4081, 116
        %v4179 = vpop.permute.xlu0 %4178
        %4180 = vrot.lane.b32.xlu0 %v4082, 116
        %v4181 = vpop.permute.xlu0 %4180
        %4182 = vrot.lane.b32.xlu0 %v4083, 116
        %v4183 = vpop.permute.xlu0 %4182
        %v4184 = vsel %vm331, %v4181, %v4183
        %v4185 = vsel %vm331, %v4179, %v4181
        %v4186 = vsel %vm331, %v4177, %v4179
        %v4187 = vsel %vm331, %v4183, %v4177
        %4188 = vrot.lane.b32.xlu0 %v4080, 108
        %v4189 = vpop.permute.xlu0 %4188
        %4190 = vrot.lane.b32.xlu0 %v4081, 108
        %v4191 = vpop.permute.xlu0 %4190
        %4192 = vrot.lane.b32.xlu0 %v4082, 108
        %v4193 = vpop.permute.xlu0 %4192
        %4194 = vrot.lane.b32.xlu0 %v4083, 108
        %v4195 = vpop.permute.xlu0 %4194
        %v4196 = vsel %vm364, %v4193, %v4195
        %v4197 = vsel %vm364, %v4191, %v4193
        %v4198 = vsel %vm364, %v4189, %v4191
        %v4199 = vsel %vm364, %v4195, %v4189
        %v4204 = vrot.slane %v4198, 4
        %v4205 = vrot.slane %v4197, 4
        %v4206 = vrot.slane %v4196, 4
        %v4207 = vrot.slane %v4199, 4
        %v4212 = vsel %vm255, %v4186, %v4204
        %v4213 = vsel %vm255, %v4185, %v4205
        %v4214 = vsel %vm255, %v4184, %v4206
        %v4215 = vsel %vm255, %v4187, %v4207
        %4216 = vst [vmem:[#allocation2 + $0xe0] sm:$0xff] %v4212
        %4217 = vst [vmem:[#allocation2 + $0xe8] sm:$0xff] %v4213
        %4218 = vst [vmem:[#allocation2 + $0xf0] sm:$0xff] %v4214
        %4219 = vst [vmem:[#allocation2 + $0xf8] sm:$0xff] %v4215
        %4220 = vrot.lane.b32.xlu0 %v4080, 107
        %v4221 = vpop.permute.xlu0 %4220
        %4222 = vrot.lane.b32.xlu0 %v4081, 107
        %v4223 = vpop.permute.xlu0 %4222
        %4224 = vrot.lane.b32.xlu0 %v4082, 107
        %v4225 = vpop.permute.xlu0 %4224
        %4226 = vrot.lane.b32.xlu0 %v4083, 107
        %v4227 = vpop.permute.xlu0 %4226
        %v4228 = vsel %vm377, %v4225, %v4227
        %v4229 = vsel %vm377, %v4223, %v4225
        %v4230 = vsel %vm377, %v4221, %v4223
        %v4231 = vsel %vm377, %v4227, %v4221
        %4232 = vrot.lane.b32.xlu0 %v4080, 106
        %v4233 = vpop.permute.xlu0 %4232
        %4234 = vrot.lane.b32.xlu0 %v4081, 106
        %v4235 = vpop.permute.xlu0 %4234
        %4236 = vrot.lane.b32.xlu0 %v4082, 106
        %v4237 = vpop.permute.xlu0 %4236
        %4238 = vrot.lane.b32.xlu0 %v4083, 106
        %v4239 = vpop.permute.xlu0 %4238
        %v4240 = vsel %vm410, %v4237, %v4239
        %v4241 = vsel %vm410, %v4235, %v4237
        %v4242 = vsel %vm410, %v4233, %v4235
        %v4243 = vsel %vm410, %v4239, %v4233
        %v4248 = vrot.slane %v4242, 4
        %v4249 = vrot.slane %v4241, 4
        %v4250 = vrot.slane %v4240, 4
        %v4251 = vrot.slane %v4243, 4
        %v4256 = vsel %vm255, %v4230, %v4248
        %v4257 = vsel %vm255, %v4229, %v4249
        %v4258 = vsel %vm255, %v4228, %v4250
        %v4259 = vsel %vm255, %v4231, %v4251
        %4260 = vst [vmem:[#allocation2 + $0x100] sm:$0xff] %v4256
        %4261 = vst [vmem:[#allocation2 + $0x108] sm:$0xff] %v4257
        %4262 = vst [vmem:[#allocation2 + $0x110] sm:$0xff] %v4258
        %4263 = vst [vmem:[#allocation2 + $0x118] sm:$0xff] %v4259
        %v4264 = vld [vmem:[%s3852 + $0x4] sm:$0xff]
        %v4265 = vld [vmem:[%s3852 + $0xc] sm:$0xff]
        %v4266 = vld [vmem:[%s3852 + $0x14] sm:$0xf]
        %v4270 = vcombine.high %v4264, %v4264
        %v4271 = vcombine.high %v4265, %v4265
        %4272 = vrot.lane.b32.xlu0 %v4264, 56
        %v4273 = vpop.permute.xlu0 %4272
        %4274 = vrot.lane.b32.xlu0 %v4270, 56
        %v4275 = vpop.permute.xlu0 %4274
        %4276 = vrot.lane.b32.xlu0 %v4265, 56
        %v4277 = vpop.permute.xlu0 %4276
        %4278 = vrot.lane.b32.xlu0 %v4271, 56
        %v4279 = vpop.permute.xlu0 %4278
        %4280 = vrot.lane.b32.xlu0 %v4266, 56
        %v4281 = vpop.permute.xlu0 %4280
        %v4282 = vsel %vm661, %v4273, %v4275
        %v4283 = vsel %vm661, %v4275, %v4277
        %v4284 = vsel %vm661, %v4277, %v4279
        %v4285 = vsel %vm661, %v4279, %v4281
        %4290 = vrot.lane.b32.xlu0 %v4282, 127
        %v4291 = vpop.permute.xlu0 %4290
        %4292 = vrot.lane.b32.xlu0 %v4283, 127
        %v4293 = vpop.permute.xlu0 %4292
        %4294 = vrot.lane.b32.xlu0 %v4284, 127
        %v4295 = vpop.permute.xlu0 %4294
        %4296 = vrot.lane.b32.xlu0 %v4285, 127
        %v4297 = vpop.permute.xlu0 %4296
        %v4298 = vsel %vm238, %v4295, %v4297
        %v4299 = vsel %vm238, %v4293, %v4295
        %v4300 = vsel %vm238, %v4291, %v4293
        %v4301 = vsel %vm238, %v4297, %v4291
        %v4308 = vrot.slane %v4300, 4
        %v4309 = vrot.slane %v4299, 4
        %v4310 = vrot.slane %v4298, 4
        %v4311 = vrot.slane %v4301, 4
        %4312 = vrot.lane.b32.xlu0 %v4308, 72
        %v4313 = vpop.permute.xlu0 %4312
        %4314 = vrot.lane.b32.xlu0 %v4309, 72
        %v4315 = vpop.permute.xlu0 %4314
        %4316 = vrot.lane.b32.xlu0 %v4310, 72
        %v4317 = vpop.permute.xlu0 %4316
        %4318 = vrot.lane.b32.xlu0 %v4311, 72
        %v4319 = vpop.permute.xlu0 %4318
        %v4320 = vsel %vm700, %v4313, %v4315
        %v4321 = vsel %vm700, %v4315, %v4317
        %v4322 = vsel %vm700, %v4317, %v4319
        %v4328 = vsel %vm255, %v4264, %v4313
        %v4329 = vsel %vm255, %v4270, %v4320
        %v4330 = vsel %vm255, %v4265, %v4321
        %v4331 = vsel %vm255, %v4271, %v4322
        %v4332 = vsel %vm255, %v4266, %v4319
        %4338 = vrot.lane.b32.xlu0 %v4328, 56
        %v4339 = vpop.permute.xlu0 %4338
        %4340 = vrot.lane.b32.xlu0 %v4329, 56
        %v4341 = vpop.permute.xlu0 %4340
        %4342 = vrot.lane.b32.xlu0 %v4330, 56
        %v4343 = vpop.permute.xlu0 %4342
        %4344 = vrot.lane.b32.xlu0 %v4331, 56
        %v4345 = vpop.permute.xlu0 %4344
        %4346 = vrot.lane.b32.xlu0 %v4332, 56
        %v4347 = vpop.permute.xlu0 %4346
        %v4348 = vsel %vm661, %v4339, %v4341
        %v4349 = vsel %vm661, %v4341, %v4343
        %v4350 = vsel %vm661, %v4343, %v4345
        %v4351 = vsel %vm661, %v4345, %v4347
        %4356 = vst [vmem:[#allocation2 + $0x120] sm:$0xff] %v4348
        %4357 = vst [vmem:[#allocation2 + $0x128] sm:$0xff] %v4349
        %4358 = vst [vmem:[#allocation2 + $0x130] sm:$0xff] %v4350
        %4359 = vst [vmem:[#allocation2 + $0x138] sm:$0xff] %v4351
        %4360 = vrot.lane.b32.xlu0 %v4282, 126
        %v4361 = vpop.permute.xlu0 %4360
        %4362 = vrot.lane.b32.xlu0 %v4283, 126
        %v4363 = vpop.permute.xlu0 %4362
        %4364 = vrot.lane.b32.xlu0 %v4284, 126
        %v4365 = vpop.permute.xlu0 %4364
        %4366 = vrot.lane.b32.xlu0 %v4285, 126
        %v4367 = vpop.permute.xlu0 %4366
        %v4368 = vsel %vm272, %v4365, %v4367
        %v4369 = vsel %vm272, %v4363, %v4365
        %v4370 = vsel %vm272, %v4361, %v4363
        %v4371 = vsel %vm272, %v4367, %v4361
        %4372 = vrot.lane.b32.xlu0 %v4282, 118
        %v4373 = vpop.permute.xlu0 %4372
        %4374 = vrot.lane.b32.xlu0 %v4283, 118
        %v4375 = vpop.permute.xlu0 %4374
        %4376 = vrot.lane.b32.xlu0 %v4284, 118
        %v4377 = vpop.permute.xlu0 %4376
        %4378 = vrot.lane.b32.xlu0 %v4285, 118
        %v4379 = vpop.permute.xlu0 %4378
        %v4380 = vsel %vm285, %v4377, %v4379
        %v4381 = vsel %vm285, %v4375, %v4377
        %v4382 = vsel %vm285, %v4373, %v4375
        %v4383 = vsel %vm285, %v4379, %v4373
        %v4388 = vrot.slane %v4382, 4
        %v4389 = vrot.slane %v4381, 4
        %v4390 = vrot.slane %v4380, 4
        %v4391 = vrot.slane %v4383, 4
        %v4396 = vsel %vm255, %v4370, %v4388
        %v4397 = vsel %vm255, %v4369, %v4389
        %v4398 = vsel %vm255, %v4368, %v4390
        %v4399 = vsel %vm255, %v4371, %v4391
        %4400 = vst [vmem:[#allocation2 + $0x140] sm:$0xff] %v4396
        %4401 = vst [vmem:[#allocation2 + $0x148] sm:$0xff] %v4397
        %4402 = vst [vmem:[#allocation2 + $0x150] sm:$0xff] %v4398
        %4403 = vst [vmem:[#allocation2 + $0x158] sm:$0xff] %v4399
        %4404 = vrot.lane.b32.xlu0 %v4282, 117
        %v4405 = vpop.permute.xlu0 %4404
        %4406 = vrot.lane.b32.xlu0 %v4283, 117
        %v4407 = vpop.permute.xlu0 %4406
        %4408 = vrot.lane.b32.xlu0 %v4284, 117
        %v4409 = vpop.permute.xlu0 %4408
        %4410 = vrot.lane.b32.xlu0 %v4285, 117
        %v4411 = vpop.permute.xlu0 %4410
        %v4412 = vsel %vm318, %v4409, %v4411
        %v4413 = vsel %vm318, %v4407, %v4409
        %v4414 = vsel %vm318, %v4405, %v4407
        %v4415 = vsel %vm318, %v4411, %v4405
        %4416 = vrot.lane.b32.xlu0 %v4282, 116
        %v4417 = vpop.permute.xlu0 %4416
        %4418 = vrot.lane.b32.xlu0 %v4283, 116
        %v4419 = vpop.permute.xlu0 %4418
        %4420 = vrot.lane.b32.xlu0 %v4284, 116
        %v4421 = vpop.permute.xlu0 %4420
        %4422 = vrot.lane.b32.xlu0 %v4285, 116
        %v4423 = vpop.permute.xlu0 %4422
        %v4424 = vsel %vm331, %v4421, %v4423
        %v4425 = vsel %vm331, %v4419, %v4421
        %v4426 = vsel %vm331, %v4417, %v4419
        %v4427 = vsel %vm331, %v4423, %v4417
        %v4432 = vrot.slane %v4426, 4
        %v4433 = vrot.slane %v4425, 4
        %v4434 = vrot.slane %v4424, 4
        %v4435 = vrot.slane %v4427, 4
        %v4440 = vsel %vm255, %v4414, %v4432
        %v4441 = vsel %vm255, %v4413, %v4433
        %v4442 = vsel %vm255, %v4412, %v4434
        %v4443 = vsel %vm255, %v4415, %v4435
        %4444 = vst [vmem:[#allocation2 + $0x160] sm:$0xff] %v4440
        %4445 = vst [vmem:[#allocation2 + $0x168] sm:$0xff] %v4441
        %4446 = vst [vmem:[#allocation2 + $0x170] sm:$0xff] %v4442
        %4447 = vst [vmem:[#allocation2 + $0x178] sm:$0xff] %v4443
        %4448 = vrot.lane.b32.xlu0 %v4282, 108
        %v4449 = vpop.permute.xlu0 %4448
        %4450 = vrot.lane.b32.xlu0 %v4283, 108
        %v4451 = vpop.permute.xlu0 %4450
        %4452 = vrot.lane.b32.xlu0 %v4284, 108
        %v4453 = vpop.permute.xlu0 %4452
        %4454 = vrot.lane.b32.xlu0 %v4285, 108
        %v4455 = vpop.permute.xlu0 %4454
        %v4456 = vsel %vm364, %v4453, %v4455
        %v4457 = vsel %vm364, %v4451, %v4453
        %v4458 = vsel %vm364, %v4449, %v4451
        %v4459 = vsel %vm364, %v4455, %v4449
        %4460 = vrot.lane.b32.xlu0 %v4282, 107
        %v4461 = vpop.permute.xlu0 %4460
        %4462 = vrot.lane.b32.xlu0 %v4283, 107
        %v4463 = vpop.permute.xlu0 %4462
        %4464 = vrot.lane.b32.xlu0 %v4284, 107
        %v4465 = vpop.permute.xlu0 %4464
        %4466 = vrot.lane.b32.xlu0 %v4285, 107
        %v4467 = vpop.permute.xlu0 %4466
        %v4468 = vsel %vm377, %v4465, %v4467
        %v4469 = vsel %vm377, %v4463, %v4465
        %v4470 = vsel %vm377, %v4461, %v4463
        %v4471 = vsel %vm377, %v4467, %v4461
        %v4476 = vrot.slane %v4470, 4
        %v4477 = vrot.slane %v4469, 4
        %v4478 = vrot.slane %v4468, 4
        %v4479 = vrot.slane %v4471, 4
        %v4484 = vsel %vm255, %v4458, %v4476
        %v4485 = vsel %vm255, %v4457, %v4477
        %v4486 = vsel %vm255, %v4456, %v4478
        %v4487 = vsel %vm255, %v4459, %v4479
        %4488 = vst [vmem:[#allocation2 + $0x180] sm:$0xff] %v4484
        %4489 = vst [vmem:[#allocation2 + $0x188] sm:$0xff] %v4485
        %4490 = vst [vmem:[#allocation2 + $0x190] sm:$0xff] %v4486
        %4491 = vst [vmem:[#allocation2 + $0x198] sm:$0xff] %v4487
        %4492 = vrot.lane.b32.xlu0 %v4282, 106
        %v4493 = vpop.permute.xlu0 %4492
        %4494 = vrot.lane.b32.xlu0 %v4283, 106
        %v4495 = vpop.permute.xlu0 %4494
        %4496 = vrot.lane.b32.xlu0 %v4284, 106
        %v4497 = vpop.permute.xlu0 %4496
        %4498 = vrot.lane.b32.xlu0 %v4285, 106
        %v4499 = vpop.permute.xlu0 %4498
        %v4500 = vsel %vm410, %v4497, %v4499
        %v4501 = vsel %vm410, %v4495, %v4497
        %v4502 = vsel %vm410, %v4493, %v4495
        %v4503 = vsel %vm410, %v4499, %v4493
        %4504 = vst [vmem:[#allocation2 + $0x1a0] sm:$0xf] %v4502
        %4505 = vst [vmem:[#allocation2 + $0x1a8] sm:$0xf] %v4501
        %4506 = vst [vmem:[#allocation2 + $0x1b0] sm:$0xf] %v4500
        %4507 = vst [vmem:[#allocation2 + $0x1b8] sm:$0xf] %v4503
        %v4508 = vld [vmem:[#allocation2] sm:$0xff]
        %v4509 = vld [vmem:[#allocation2 + $0x8] sm:$0xff]
        %v4510 = vld [vmem:[#allocation2 + $0x10] sm:$0xff]
        %v4511 = vld [vmem:[#allocation2 + $0x18] sm:$0xff]
        %v4512 = vld [vmem:[#allocation2 + $0x20] sm:$0xff]
        %v4513 = vld [vmem:[#allocation2 + $0x28] sm:$0xff]
        %v4514 = vld [vmem:[#allocation2 + $0x30] sm:$0xff]
        %v4515 = vld [vmem:[#allocation2 + $0x38] sm:$0xff]
        %v4516 = vld [vmem:[#allocation2 + $0x40] sm:$0xff]
        %v4517 = vld [vmem:[#allocation2 + $0x48] sm:$0xff]
        %v4518 = vld [vmem:[#allocation2 + $0x50] sm:$0xff]
        %v4519 = vld [vmem:[#allocation2 + $0x58] sm:$0xff]
        %v4520 = vld [vmem:[#allocation2 + $0x60] sm:$0xff]
        %v4521 = vld [vmem:[#allocation2 + $0x68] sm:$0xff]
        %v4522 = vld [vmem:[#allocation2 + $0x70] sm:$0xff]
        %v4523 = vld [vmem:[#allocation2 + $0x78] sm:$0xff]
        %v4524 = vld [vmem:[#allocation2 + $0x80] sm:$0xff]
        %v4525 = vld [vmem:[#allocation2 + $0x88] sm:$0xff]
        %v4526 = vld [vmem:[#allocation2 + $0x90] sm:$0xff]
        %v4527 = vld [vmem:[#allocation2 + $0x98] sm:$0xff]
        %v4528 = vld [vmem:[#allocation2 + $0xa0] sm:$0xff]
        %v4529 = vld [vmem:[#allocation2 + $0xa8] sm:$0xff]
        %v4530 = vld [vmem:[#allocation2 + $0xb0] sm:$0xff]
        %v4531 = vld [vmem:[#allocation2 + $0xb8] sm:$0xff]
        %v4532 = vld [vmem:[#allocation2 + $0xc0] sm:$0xff]
        %v4533 = vld [vmem:[#allocation2 + $0xc8] sm:$0xff]
        %v4534 = vld [vmem:[#allocation2 + $0xd0] sm:$0xff]
        %v4535 = vld [vmem:[#allocation2 + $0xd8] sm:$0xff]
        %v4536 = vld [vmem:[#allocation2 + $0xe0] sm:$0xff]
        %v4537 = vld [vmem:[#allocation2 + $0xe8] sm:$0xff]
        %v4538 = vld [vmem:[#allocation2 + $0xf0] sm:$0xff]
        %v4539 = vld [vmem:[#allocation2 + $0xf8] sm:$0xff]
        %v4540 = vld [vmem:[#allocation2 + $0x100] sm:$0xff]
        %v4541 = vld [vmem:[#allocation2 + $0x108] sm:$0xff]
        %v4542 = vld [vmem:[#allocation2 + $0x110] sm:$0xff]
        %v4543 = vld [vmem:[#allocation2 + $0x118] sm:$0xff]
        %v4544 = vld [vmem:[#allocation2 + $0x120] sm:$0xff]
        %v4545 = vld [vmem:[#allocation2 + $0x128] sm:$0xff]
        %v4546 = vld [vmem:[#allocation2 + $0x130] sm:$0xff]
        %v4547 = vld [vmem:[#allocation2 + $0x138] sm:$0xff]
        %v4548 = vld [vmem:[#allocation2 + $0x140] sm:$0xff]
        %v4549 = vld [vmem:[#allocation2 + $0x148] sm:$0xff]
        %v4550 = vld [vmem:[#allocation2 + $0x150] sm:$0xff]
        %v4551 = vld [vmem:[#allocation2 + $0x158] sm:$0xff]
        %v4552 = vld [vmem:[#allocation2 + $0x160] sm:$0xff]
        %v4553 = vld [vmem:[#allocation2 + $0x168] sm:$0xff]
        %v4554 = vld [vmem:[#allocation2 + $0x170] sm:$0xff]
        %v4555 = vld [vmem:[#allocation2 + $0x178] sm:$0xff]
        %v4556 = vld [vmem:[#allocation2 + $0x180] sm:$0xff]
        %v4557 = vld [vmem:[#allocation2 + $0x188] sm:$0xff]
        %v4558 = vld [vmem:[#allocation2 + $0x190] sm:$0xff]
        %v4559 = vld [vmem:[#allocation2 + $0x198] sm:$0xff]
        %v4560 = vld [vmem:[#allocation2 + $0x1a0] sm:$0xff]
        %v4561 = vld [vmem:[#allocation2 + $0x1a8] sm:$0xff]
        %v4562 = vld [vmem:[#allocation2 + $0x1b0] sm:$0xff]
        %v4563 = vld [vmem:[#allocation2 + $0x1b8] sm:$0xff]
        %v4564 = vld [vmem:[#allocation2 + $0x1c0] sm:$0xff]
        %v4565 = vld [vmem:[#allocation2 + $0x1c8] sm:$0xff]
        %v4566 = vld [vmem:[#allocation2 + $0x1d0] sm:$0xff]
        %v4567 = vld [vmem:[#allocation2 + $0x1d8] sm:$0xff]
        %v4568 = vld [vmem:[#allocation2 + $0x1e0] sm:$0xff]
        %v4569 = vld [vmem:[#allocation2 + $0x1e8] sm:$0xff]
        %v4570 = vld [vmem:[#allocation2 + $0x1f0] sm:$0xff]
        %v4571 = vld [vmem:[#allocation2 + $0x1f8] sm:$0xff]
        %4572 = vmatprep.subr.mxu0 %v4569
        %4573 = vmatpush1.msra.mxu0 %v4568
        %4574 = vmatprep.subr.mxu0 %v4565
        %4575 = vmatpush1.msra.mxu0 %v4564
        %4576 = vmatprep.subr.mxu0 %v4561
        %4577 = vmatpush1.msra.mxu0 %v4560
        %4578 = vmatprep.subr.mxu0 %v4557
        %4579 = vmatpush1.msra.mxu0 %v4556
        %4580 = vmatprep.subr.mxu0 %v4553
        %4581 = vmatpush1.msra.mxu0 %v4552
        %4582 = vmatprep.subr.mxu0 %v4549
        %4583 = vmatpush1.msra.mxu0 %v4548
        %4584 = vmatprep.subr.mxu0 %v4545
        %4585 = vmatpush1.msra.mxu0 %v4544
        %4586 = vmatprep.subr.mxu0 %v4541
        %4587 = vmatpush1.msra.mxu0 %v4540
        %4588 = vmatprep.subr.mxu0 %v4537
        %4589 = vmatpush1.msra.mxu0 %v4536
        %4590 = vmatprep.subr.mxu0 %v4533
        %4591 = vmatpush1.msra.mxu0 %v4532
        %4592 = vmatprep.subr.mxu0 %v4529
        %4593 = vmatpush1.msra.mxu0 %v4528
        %4594 = vmatprep.subr.mxu0 %v4525
        %4595 = vmatpush1.msra.mxu0 %v4524
        %4596 = vmatprep.subr.mxu0 %v4521
        %4597 = vmatpush1.msra.mxu0 %v4520
        %4598 = vmatprep.subr.mxu0 %v4517
        %4599 = vmatpush1.msra.mxu0 %v4516
        %4600 = vmatprep.subr.mxu0 %v4513
        %4601 = vmatpush1.msra.mxu0 %v4512
        %4602 = vmatprep.subr.mxu0 %v4509
        %4603 = vmatpush1.msra.mxu0 %v4508
        %4604 = vmatprep.subr.mxu0 0.0
        %4605 = vmatpush2.msra.mxu0 0.0
        %4606 = vmatprep.subr.mxu0 0.0
        %4607 = vmatpush2.msra.mxu0 0.0
        %4608 = vmatprep.subr.mxu0 0.0
        %4609 = vmatpush2.msra.mxu0 0.0
        %4610 = vmatprep.subr.mxu0 0.0
        %4611 = vmatpush2.msra.mxu0 0.0
        %4612 = vmatprep.subr.mxu0 0.0
        %4613 = vmatpush2.msra.mxu0 0.0
        %4614 = vmatprep.subr.mxu0 0.0
        %4615 = vmatpush2.msra.mxu0 0.0
        %4616 = vmatprep.subr.mxu0 0.0
        %4617 = vmatpush2.msra.mxu0 0.0
        %4618 = vmatprep.subr.mxu0 0.0
        %4619 = vmatpush2.msra.mxu0 0.0
        %4620 = vmatprep.subr.mxu0 0.0
        %4621 = vmatpush2.msra.mxu0 0.0
        %4622 = vmatprep.subr.mxu0 0.0
        %4623 = vmatpush2.msra.mxu0 0.0
        %4624 = vmatprep.subr.mxu0 0.0
        %4625 = vmatpush2.msra.mxu0 0.0
        %4626 = vmatprep.subr.mxu0 0.0
        %4627 = vmatpush2.msra.mxu0 0.0
        %4628 = vmatprep.subr.mxu0 0.0
        %4629 = vmatpush2.msra.mxu0 0.0
        %4630 = vmatprep.subr.mxu0 0.0
        %4631 = vmatpush2.msra.mxu0 0.0
        %4632 = vmatprep.subr.mxu0 0.0
        %4633 = vmatpush2.msra.mxu0 0.0
        %4634 = vmatprep.subr.mxu0 0.0
        %4635 = vmatpush2.msra.mxu0 0.0
        %4636 = vmatprep.mubr.f32.mxu0 0.0
        %4637 = vmatmul.mubr.f32.gmra.mxu0 %v216
        %v4638 = vpop.f32.mrf.mxu0
        %v4639 = vpop.f32.mrf.mxu0
        %4640 = vmatprep.mubr.f32.mxu0 0.0
        %4641 = vmatmul.mubr.f32.gmra.mxu0 %v217
        %v4642 = vpop.f32.mrf.mxu0
        %v4643 = vpop.f32.mrf.mxu0
        %4644 = vmatprep.mubr.f32.mxu0 0.0
        %4645 = vmatmul.mubr.f32.gmra.mxu0 %v218
        %v4646 = vpop.f32.mrf.mxu0
        %v4647 = vadd.f32 0.0, %v4646
        %v4648 = vpop.f32.mrf.mxu0
        %v4649 = vadd.f32 0.0, %v4648
        %4650 = vdwg.mxu0
        %4651 = vmatprep.subr.mxu0 %v4571
        %4652 = vmatpush1.msra.mxu0 %v4570
        %4653 = vmatprep.subr.mxu0 %v4567
        %4654 = vmatpush1.msra.mxu0 %v4566
        %4655 = vmatprep.subr.mxu0 %v4563
        %4656 = vmatpush1.msra.mxu0 %v4562
        %4657 = vmatprep.subr.mxu0 %v4559
        %4658 = vmatpush1.msra.mxu0 %v4558
        %4659 = vmatprep.subr.mxu0 %v4555
        %4660 = vmatpush1.msra.mxu0 %v4554
        %4661 = vmatprep.subr.mxu0 %v4551
        %4662 = vmatpush1.msra.mxu0 %v4550
        %4663 = vmatprep.subr.mxu0 %v4547
        %4664 = vmatpush1.msra.mxu0 %v4546
        %4665 = vmatprep.subr.mxu0 %v4543
        %4666 = vmatpush1.msra.mxu0 %v4542
        %4667 = vmatprep.subr.mxu0 %v4539
        %4668 = vmatpush1.msra.mxu0 %v4538
        %4669 = vmatprep.subr.mxu0 %v4535
        %4670 = vmatpush1.msra.mxu0 %v4534
        %4671 = vmatprep.subr.mxu0 %v4531
        %4672 = vmatpush1.msra.mxu0 %v4530
        %4673 = vmatprep.subr.mxu0 %v4527
        %4674 = vmatpush1.msra.mxu0 %v4526
        %4675 = vmatprep.subr.mxu0 %v4523
        %4676 = vmatpush1.msra.mxu0 %v4522
        %4677 = vmatprep.subr.mxu0 %v4519
        %4678 = vmatpush1.msra.mxu0 %v4518
        %4679 = vmatprep.subr.mxu0 %v4515
        %4680 = vmatpush1.msra.mxu0 %v4514
        %4681 = vmatprep.subr.mxu0 %v4511
        %4682 = vmatpush1.msra.mxu0 %v4510
        %4683 = vmatprep.subr.mxu0 0.0
        %4684 = vmatpush2.msra.mxu0 0.0
        %4685 = vmatprep.subr.mxu0 0.0
        %4686 = vmatpush2.msra.mxu0 0.0
        %4687 = vmatprep.subr.mxu0 0.0
        %4688 = vmatpush2.msra.mxu0 0.0
        %4689 = vmatprep.subr.mxu0 0.0
        %4690 = vmatpush2.msra.mxu0 0.0
        %4691 = vmatprep.subr.mxu0 0.0
        %4692 = vmatpush2.msra.mxu0 0.0
        %4693 = vmatprep.subr.mxu0 0.0
        %4694 = vmatpush2.msra.mxu0 0.0
        %4695 = vmatprep.subr.mxu0 0.0
        %4696 = vmatpush2.msra.mxu0 0.0
        %4697 = vmatprep.subr.mxu0 0.0
        %4698 = vmatpush2.msra.mxu0 0.0
        %4699 = vmatprep.subr.mxu0 0.0
        %4700 = vmatpush2.msra.mxu0 0.0
        %4701 = vmatprep.subr.mxu0 0.0
        %4702 = vmatpush2.msra.mxu0 0.0
        %4703 = vmatprep.subr.mxu0 0.0
        %4704 = vmatpush2.msra.mxu0 0.0
        %4705 = vmatprep.subr.mxu0 0.0
        %4706 = vmatpush2.msra.mxu0 0.0
        %4707 = vmatprep.subr.mxu0 0.0
        %4708 = vmatpush2.msra.mxu0 0.0
        %4709 = vmatprep.subr.mxu0 0.0
        %4710 = vmatpush2.msra.mxu0 0.0
        %4711 = vmatprep.subr.mxu0 0.0
        %4712 = vmatpush2.msra.mxu0 0.0
        %4713 = vmatprep.subr.mxu0 0.0
        %4714 = vmatpush2.msra.mxu0 0.0
        %4715 = vmatprep.mubr.f32.mxu0 0.0
        %4716 = vmatmul.mubr.f32.gmra.mxu0 %v216
        %v4717 = vpop.f32.mrf.mxu0
        %v4718 = vpop.f32.mrf.mxu0
        %4719 = vmatprep.mubr.f32.mxu0 0.0
        %4720 = vmatmul.mubr.f32.gmra.mxu0 %v217
        %v4721 = vpop.f32.mrf.mxu0
        %v4722 = vpop.f32.mrf.mxu0
        %4723 = vmatprep.mubr.f32.mxu0 0.0
        %4724 = vmatmul.mubr.f32.gmra.mxu0 %v218
        %v4725 = vpop.f32.mrf.mxu0
        %v4726 = vadd.f32 0.0, %v4725
        %v4727 = vpop.f32.mrf.mxu0
        %v4728 = vadd.f32 0.0, %v4727
        %4729 = vdwg.mxu0
        %v4730 = vld [vmem:[%s2917] sm:$0xff]
        %v4731 = vld [vmem:[%s2917 + $0x8] sm:$0xff]
        %v4732 = vld [vmem:[%s2917 + $0x10] sm:$0xff]
        %v4733 = vld [vmem:[%s2917 + $0x18] sm:$0xff]
        %v4734 = vadd.f32 %v4730, %v4647
        %v4735 = vadd.f32 %v4731, %v4649
        %v4736 = vadd.f32 %v4732, %v4726
        %v4737 = vadd.f32 %v4733, %v4728
        %4738 = vst [vmem:[%s2917] sm:$0xff] %v4734
        %4739 = vst [vmem:[%s2917 + $0x8] sm:$0xff] %v4735
        %4740 = vst [vmem:[%s2917 + $0x10] sm:$0xff] %v4736
        %4741 = vst [vmem:[%s2917 + $0x18] sm:$0xff] %v4737
        %s4742 = sand.u32 %s97, 1
        %s4743 = scalar_lea.sflag [#allocation5], %s4742
        %s4744 = sand.u32 %s97, 1
        %s4745 = smul.addr %s4744, 96
        %s4746 = scalar_lea.vmem [#allocation8], %s4745
        // Predicated region
        $region41: #{tpu_custom_call.1} parent=31 // pred_check
          %p4747 = pneg %p107
        $region42: #{tpu_custom_call.1} parent=31 // pred_check_branch
          %4749 = sbr.rel (%p4747) target = $region44
        $region43: #{tpu_custom_call.1} parent=31 // pred_region
          %s4751 = ssub.s32 1536, 1536
          %4752 = vsyncadd %s4743, %s4751
          %s4753 = smul.addr %s21, 12
          %s4754 = smul.addr %s4753, 128
          %s4755 = scalar_lea.hbm %s3, %s4754
          %s4756 = sshll.u32 %s4746, 4
          %s4757 = int_to_ptr.vmem [resolvable:$true] %s4756
          %4762 = dma.vmem_to_hbm [thread:$0]  %s4757, 1536, %s4755, %s4743, 512, 512, 32
        $region44: #{tpu_custom_call.1} parent=31 // pred_fallthru
          _
      $region32: #{tpu_custom_call.1} parent=5 // pred_fallthru
        _
      %p4763 = scmp.le.s32.totalorder 2, %s16
      // Predicated region
      $region45: #{tpu_custom_call.1} parent=5 // pred_check
        %p4764 = pneg %p4763
      $region46: #{tpu_custom_call.1} parent=5 // pred_check_branch
        %4766 = sbr.rel (%p4764) target = $region48
      $region47: #{tpu_custom_call.1} parent=5 // pred_region
        %s4767 = ssub.s32 %s16, 2
        // Predicated region
        $region49: #{tpu_custom_call.1} parent=47 // pred_check
          %p4768 = pneg %p113
        $region50: #{tpu_custom_call.1} parent=47 // pred_check_branch
          %4770 = sbr.rel (%p4768) target = $region52
        $region51: #{tpu_custom_call.1} parent=47 // pred_region
          %s4771 = sand.u32 %s98, 1
          %s4772 = scalar_lea.sflag [#allocation5], %s4771
          %s4773 = sand.u32 %s98, 1
          %s4774 = smul.addr %s4773, 96
          %s4775 = scalar_lea.vmem [#allocation8], %s4774
          %4776 = dma.done %s4772, 1536
        $region52: #{tpu_custom_call.1} parent=47 // pred_fallthru
          _
      $region48: #{tpu_custom_call.1} parent=5 // pred_fallthru
        _
    $region6: #{tpu_custom_call.1} parent=1 // loop_footer
      %s20 = sadd.s32 1, %s16
    $region7: #{tpu_custom_call.1} parent=1 // loop_footer_branch
      %15 = sbr.rel target = $region3
    $region8: #{tpu_custom_call.1} parent=1 // loop_exit
      _
    %4777 = vsyncpa [#allocation4], 1
    %s4778 = scalar_lea.sflag [#allocation4], 1
    %4779 = vsyncpa %s4778, 1
    %4780 = vsyncpa [#allocation7], 1
    %4781 = vsyncpa [#allocation5], 1
    %s4782 = scalar_lea.sflag [#allocation5], 1
    %4783 = vsyncpa %s4782, 1

</llo_original>
